<compile_context>
chip_gen: v6e
topology: v6e:2x2x1
jax: 0.10.0
libtpu: 0.0.40
codegen_flags: <defaults>
</compile_context>

<pallas_src>
import functools
import math

import numpy as np
import jax
import jax.numpy as jnp
from jax.experimental import pallas as pl
from jax.experimental.pallas import tpu as pltpu


# ----------------------------- Pallas kernel --------------------------------


def npa_fused_kernel(x_ref, q_ref, wcat_ref, b_ref, emb_ref, repr_ref,
                     *, items, seq_len, hidden):
    """Fused Conv1d(k=3, pad=1) + ReLU + personalized scaled-dot attention for T items.

    x_ref    : (T*L, E)   token embeddings of T news items (flattened item-major)
    q_ref    : (T, H)     personalized word query per item (precomputed in wrapper)
    wcat_ref : (E, 3H)    conv taps [W_{l-1} | W_l | W_{l+1}] concatenated along lanes
    b_ref    : (1, H)     conv bias
    emb_ref  : (T*L, H)   out: token-level hidden vectors
    repr_ref : (T, H)     out: per-item news representation
    """
    f32 = jnp.float32
    tl = items * seq_len
    x = x_ref[...]                                                    # (TL, E)

    # One MXU pass for all three conv taps (N = 3H), then lane-slice.
    y_all = jnp.dot(x, wcat_ref[...], preferred_element_type=f32)     # (TL, 3H)
    y0 = y_all[:, :hidden]              # x[l] @ W_{l-1}
    y1 = y_all[:, hidden:2 * hidden]    # x[l] @ W_l
    y2 = y_all[:, 2 * hidden:]          # x[l] @ W_{l+1}

    # +/-1 token shifts on the XLU (sublane roll) + boundary masking on the VPU.
    row = jax.lax.broadcasted_iota(jnp.int32, (tl, hidden), 0)
    # row l picks up x[l-1] @ W_{l-1}; zero at the first token of every item.
    y_prev = jnp.where(row % seq_len != 0,
                       pltpu.roll(y0, shift=1, axis=0), 0.0)
    # row l picks up x[l+1] @ W_{l+1}; zero at the last token of every item.
    y_next = jnp.where(row % seq_len != seq_len - 1,
                       pltpu.roll(y2, shift=tl - 1, axis=0), 0.0)

    y = jnp.maximum(y_prev + y1 + y_next + b_ref[...], 0.0)           # ReLU, (TL, H)
    emb_ref[...] = y.astype(emb_ref.dtype)

    # Personalized scaled dot-product attention over tokens of each item.
    q = q_ref[...]                                                    # (T, H)
    y3 = y.reshape(items, seq_len, hidden)                            # (T, L, H)
    scale = 1.0 / math.sqrt(hidden)                                   # compile-time const
    scores = jnp.sum(y3 * q[:, None, :], axis=-1) * scale             # (T, L)
    m = jnp.max(scores, axis=-1, keepdims=True)
    e = jnp.exp(scores - m)
    attn = e * pl.reciprocal(jnp.sum(e, axis=-1, keepdims=True))      # exact 1/x (parity)
    repr_ref[...] = jnp.sum(attn[:, :, None] * y3, axis=1).astype(repr_ref.dtype)


# ------------------------------- wrapper -------------------------------------


@functools.partial(jax.jit, static_argnames=("items_per_block",))
def npa_encoder_forward(news_batch, user_index, params, items_per_block=32):
    """news_batch: int32 [B, N, L]; user_index: int32 [B].

    Returns:
      news_embedding: [B, N, L, 1, H]
      news_repr:      [B, N, H]
    """
    B, N, L = news_batch.shape
    E = params["vocab_vectors"].shape[1]
    H = params["conv_b"].shape[1]

    num_items = B * N
    T = min(items_per_block, num_items)
    if num_items >= 16:
        T = min(T, num_items // 2)          # keep >= 2 grid steps (v7x has 2 TensorCores)
    if T < num_items:
        T = max(8, (T // 8) * 8)            # sublane-aligned item blocks when tiling
    P = -(-num_items // T) * T              # padded item count
    G = P // T
    TL = T * L

    # --- glue (XLA): embedding gather, personalized word query, padding ---
    # TODO(synk): move the vocab gather into the kernel (scalar prefetch + DMA) to skip
    #             materializing the [num_items*L, E] f32 activation in HBM.
    x = params["vocab_vectors"][news_batch].astype(jnp.float32).reshape(num_items * L, E)

    # word query: tanh(relu(e_u @ Wp + bp) @ Wq + bq), computed once per user (B rows),
    # then replicated per news item.  (Dropout = identity at inference.)
    e_u = params["user_emb"][user_index].astype(jnp.float32)                     # (B, U)
    wq_user = jnp.tanh(
        jnp.maximum(e_u @ params["Wp"] + params["bp"], 0.0) @ params["Wq"] + params["bq"])
    q_items = jnp.repeat(wq_user, N, axis=0)                                     # (B*N, H)

    if P > num_items:
        x = jnp.pad(x, ((0, (P - num_items) * L), (0, 0)))
        q_items = jnp.pad(q_items, ((0, P - num_items), (0, 0)))

    # One (E, 3H) conv weight: taps for tokens l-1 | l | l+1.
    wcat = jnp.concatenate(
        [params["conv_w0"], params["conv_w1"], params["conv_w2"]], axis=1)        # (E, 3H)

    kernel = functools.partial(npa_fused_kernel, items=T, seq_len=L, hidden=H)
    emb, rep = pl.pallas_call(
        kernel,
        out_shape=(
            jax.ShapeDtypeStruct((P * L, H), jnp.float32),
            jax.ShapeDtypeStruct((P, H), jnp.float32),
        ),
        grid=(G,),
        in_specs=[
            pl.BlockSpec((TL, E), lambda i: (i, 0)),        # token embeddings (T items)
            pl.BlockSpec((T, H), lambda i: (i, 0)),         # per-item word query
            pl.BlockSpec((E, 3 * H), lambda i: (0, 0)),     # fused conv weight (resident)
            pl.BlockSpec((1, H), lambda i: (0, 0)),         # conv bias (resident)
        ],
        out_specs=(
            pl.BlockSpec((TL, H), lambda i: (i, 0)),        # token hidden vectors
            pl.BlockSpec((T, H), lambda i: (i, 0)),         # news repr (lane-dense slab)
        ),
        compiler_params=pltpu.CompilerParams(
            dimension_semantics=("parallel",),              # independent blocks -> 2 TCs
            vmem_limit_bytes=32 * 1024 * 1024,              # working set << 32 MiB here
        ),
    )(x, q_items, wcat, params["conv_b"])

    news_embedding = emb[:num_items * L].reshape(B, N, L, 1, H)
    news_repr = rep[:num_items].reshape(B, N, H)
    return news_embedding, news_repr


# --------------------------- pure-JAX reference ------------------------------


def reference_forward(news_batch, user_index, params):
    B, N, L = news_batch.shape
    H = params["conv_b"].shape[1]
    x = params["vocab_vectors"][news_batch].astype(jnp.float32)
    e_u = params["user_emb"][user_index].astype(jnp.float32)
    wq = jnp.tanh(jnp.maximum(e_u @ params["Wp"] + params["bp"], 0.0)
                  @ params["Wq"] + params["bq"])                      # [B, H]
    xp = jnp.pad(x, ((0, 0), (0, 0), (1, 1), (0, 0)))
    y = (xp[:, :, :-2] @ params["conv_w0"]
         + xp[:, :, 1:-1] @ params["conv_w1"]
         + xp[:, :, 2:] @ params["conv_w2"]
         + params["conv_b"])
    y = jnp.maximum(y, 0.0)                                           # [B, N, L, H]
    scores = jnp.einsum("bnlh,bh->bnl", y, wq) / math.sqrt(H)
    attn = jax.nn.softmax(scores, axis=-1)
    repr_ = jnp.einsum("bnl,bnlh->bnh", attn, y)
    return y[..., None, :], repr_


# --------------------------------- main --------------------------------------


if __name__ == "__main__":
    # hparams (small, TPU-friendly)
    B, N, L = 2, 32, 16         # batch, news-per-user ("*"), signal_length
    E, H = 128, 128             # embedding_dim, filter_num (hidden_dim)
    U, Q = 32, 32               # user_dim, query_dim
    V, user_num = 64, 10        # vocab size, number of users

    key = jax.random.PRNGKey(0)
    keys = jax.random.split(key, 10)

    # deterministic synthetic parameters (shapes follow the module's __init__)
    vocab_vectors = jax.random.normal(keys[0], (V, E), jnp.float32) * 0.1
    user_emb = jax.random.normal(keys[1], (user_num + 1, U), jnp.float32) * 0.1
    Wp = jax.random.normal(keys[2], (U, Q), jnp.float32) * 0.1   # wordPrefProject (in,out)
    bp = jax.random.normal(keys[3], (1, Q), jnp.float32) * 0.1
    Wq = jax.random.normal(keys[4], (Q, H), jnp.float32) * 0.1   # wordQueryProject (in,out)
    bq = jax.random.normal(keys[5], (1, H), jnp.float32) * 0.1
    # Conv1d weight [H, E, 3] -> three [E, H] taps (k=0: token l-1, k=1: l, k=2: l+1)
    conv_w = jax.random.normal(keys[6], (H, E, 3), jnp.float32) * 0.05
    conv_b = jax.random.normal(keys[7], (1, H), jnp.float32) * 0.1
    params = {
        "vocab_vectors": vocab_vectors,
        "user_emb": user_emb,
        "Wp": Wp, "bp": bp, "Wq": Wq, "bq": bq,
        "conv_w0": jnp.transpose(conv_w[:, :, 0]),   # [E, H]
        "conv_w1": jnp.transpose(conv_w[:, :, 1]),
        "conv_w2": jnp.transpose(conv_w[:, :, 2]),
        "conv_b": conv_b,
    }

    news_batch = jax.random.randint(keys[8], (B, N, L), 0, V, dtype=jnp.int32)
    user_index = jax.random.randint(keys[9], (B,), 0, user_num + 1, dtype=jnp.int32)

    news_embedding, news_repr = npa_encoder_forward(
        news_batch, user_index, params, items_per_block=32)   # T=32 -> [512, E] matmul LHS
    jax.block_until_ready((news_embedding, news_repr))

    ref_emb, ref_repr = reference_forward(news_batch, user_index, params)
    assert news_embedding.shape == (B, N, L, 1, H)
    assert news_repr.shape == (B, N, H)
    np.testing.assert_allclose(np.asarray(news_embedding), np.asarray(ref_emb),
                               rtol=5e-4, atol=5e-4)
    np.testing.assert_allclose(np.asarray(news_repr), np.asarray(ref_repr),
                               rtol=1e-3, atol=1e-3)
    print("KERNEL_OK")
</pallas_src>

<mosaic_0001>
module attributes {stable_mosaic.version = 11 : i64} {
  func.func @npa_fused_kernel(%arg0: i32, %arg1: memref<512x128xf32, #tpu.memory_space<vmem>>, %arg2: memref<32x128xf32, #tpu.memory_space<vmem>>, %arg3: memref<128x384xf32, #tpu.memory_space<vmem>>, %arg4: memref<1x128xf32, #tpu.memory_space<vmem>>, %arg5: memref<512x128xf32, #tpu.memory_space<vmem>>, %arg6: memref<32x128xf32, #tpu.memory_space<vmem>>) attributes {dimension_semantics = [#tpu.dimension_semantics<parallel>], iteration_bounds = array<i64: 2>, scalar_prefetch = 0 : i64, scratch_operands = 0 : i64, tpu.core_type = #tpu.core_type<tc>, window_params = [{transform_indices = @transform_0, window_bounds = array<i64: 512, 128>}, {transform_indices = @transform_1, window_bounds = array<i64: 32, 128>}, {pipeline_mode = #tpu.pipeline_mode<synchronous>, transform_indices = @transform_2, window_bounds = array<i64: 128, 384>}, {pipeline_mode = #tpu.pipeline_mode<synchronous>, transform_indices = @transform_3, window_bounds = array<i64: 1, 128>}, {transform_indices = @transform_4, window_bounds = array<i64: 512, 128>}, {transform_indices = @transform_5, window_bounds = array<i64: 32, 128>}]} {
    %c0 = arith.constant 0 : index
    %c0_0 = arith.constant 0 : index
    %0 = vector.load %arg1[%c0, %c0_0] : memref<512x128xf32, #tpu.memory_space<vmem>>, vector<512x128xf32>
    %c0_1 = arith.constant 0 : index
    %c0_2 = arith.constant 0 : index
    %1 = vector.load %arg3[%c0_1, %c0_2] : memref<128x384xf32, #tpu.memory_space<vmem>>, vector<128x384xf32>
    %cst = arith.constant dense<0.000000e+00> : vector<512x384xf32>
    %2 = tpu.matmul %0, %1, %cst {dimension_numbers = #tpu.dot_dimension_numbers<[1], [0], [0], [1], [0, 0, 1, 1], [], []>} : vector<512x128xf32>, vector<128x384xf32>, vector<512x384xf32> -> vector<512x384xf32>
    %3 = vector.extract_strided_slice %2 {offsets = [0, 0], sizes = [512, 128], strides = [1, 1]} : vector<512x384xf32> to vector<512x128xf32>
    %4 = vector.extract_strided_slice %2 {offsets = [0, 128], sizes = [512, 128], strides = [1, 1]} : vector<512x384xf32> to vector<512x128xf32>
    %5 = vector.extract_strided_slice %2 {offsets = [0, 256], sizes = [512, 128], strides = [1, 1]} : vector<512x384xf32> to vector<512x128xf32>
    %6 = tpu.iota {dimensions = array<i32: 0>} : vector<512x128xi32>
    %c16_i32 = arith.constant 16 : i32
    %c0_i32 = arith.constant 0 : i32
    %7 = arith.cmpi eq, %c16_i32, %c0_i32 : i32
    %c1_i32 = arith.constant 1 : i32
    %8 = arith.select %7, %c1_i32, %c16_i32 : i32
    %9 = vector.broadcast %8 : i32 to vector<512x128xi32>
    %10 = arith.remsi %6, %9 : vector<512x128xi32>
    %c0_i32_3 = arith.constant 0 : i32
    %11 = vector.broadcast %c0_i32_3 : i32 to vector<512x128xi32>
    %12 = arith.cmpi ne, %10, %11 : vector<512x128xi32>
    %c0_i32_4 = arith.constant 0 : i32
    %13 = vector.broadcast %c0_i32_4 : i32 to vector<512x128xi32>
    %14 = arith.cmpi slt, %10, %13 : vector<512x128xi32>
    %c0_i32_5 = arith.constant 0 : i32
    %15 = arith.cmpi slt, %8, %c0_i32_5 : i32
    %16 = vector.broadcast %15 : i1 to vector<512x128xi1>
    %17 = vector.broadcast %16 : vector<512x128xi1> to vector<512x128xi1>
    %18 = arith.xori %14, %17 : vector<512x128xi1>
    %19 = arith.andi %18, %12 : vector<512x128xi1>
    %20 = vector.broadcast %8 : i32 to vector<512x128xi32>
    %21 = arith.addi %10, %20 : vector<512x128xi32>
    %22 = arith.select %19, %21, %10 : vector<512x128xi1>, vector<512x128xi32>
    %c0_i32_6 = arith.constant 0 : i32
    %23 = vector.broadcast %c0_i32_6 : i32 to vector<512x128xi32>
    %24 = arith.cmpi ne, %22, %23 : vector<512x128xi32>
    %c1_i32_7 = arith.constant 1 : i32
    %25 = tpu.dynamic_rotate %3 by %c1_i32_7 dim 0 : vector<512x128xf32>, i32 -> vector<512x128xf32>
    %cst_8 = arith.constant 0.000000e+00 : f32
    %26 = vector.broadcast %cst_8 : f32 to vector<512x128xf32>
    %27 = arith.select %24, %25, %26 : vector<512x128xi1>, vector<512x128xf32>
    %c16_i32_9 = arith.constant 16 : i32
    %c0_i32_10 = arith.constant 0 : i32
    %28 = arith.cmpi eq, %c16_i32_9, %c0_i32_10 : i32
    %c1_i32_11 = arith.constant 1 : i32
    %29 = arith.select %28, %c1_i32_11, %c16_i32_9 : i32
    %30 = vector.broadcast %29 : i32 to vector<512x128xi32>
    %31 = arith.remsi %6, %30 : vector<512x128xi32>
    %c0_i32_12 = arith.constant 0 : i32
    %32 = vector.broadcast %c0_i32_12 : i32 to vector<512x128xi32>
    %33 = arith.cmpi ne, %31, %32 : vector<512x128xi32>
    %c0_i32_13 = arith.constant 0 : i32
    %34 = vector.broadcast %c0_i32_13 : i32 to vector<512x128xi32>
    %35 = arith.cmpi slt, %31, %34 : vector<512x128xi32>
    %c0_i32_14 = arith.constant 0 : i32
    %36 = arith.cmpi slt, %29, %c0_i32_14 : i32
    %37 = vector.broadcast %36 : i1 to vector<512x128xi1>
    %38 = vector.broadcast %37 : vector<512x128xi1> to vector<512x128xi1>
    %39 = arith.xori %35, %38 : vector<512x128xi1>
    %40 = arith.andi %39, %33 : vector<512x128xi1>
    %41 = vector.broadcast %29 : i32 to vector<512x128xi32>
    %42 = arith.addi %31, %41 : vector<512x128xi32>
    %43 = arith.select %40, %42, %31 : vector<512x128xi1>, vector<512x128xi32>
    %c15_i32 = arith.constant 15 : i32
    %44 = vector.broadcast %c15_i32 : i32 to vector<512x128xi32>
    %45 = arith.cmpi ne, %43, %44 : vector<512x128xi32>
    %c511_i32 = arith.constant 511 : i32
    %46 = tpu.dynamic_rotate %5 by %c511_i32 dim 0 : vector<512x128xf32>, i32 -> vector<512x128xf32>
    %cst_15 = arith.constant 0.000000e+00 : f32
    %47 = vector.broadcast %cst_15 : f32 to vector<512x128xf32>
    %48 = arith.select %45, %46, %47 : vector<512x128xi1>, vector<512x128xf32>
    %49 = arith.addf %27, %4 : vector<512x128xf32>
    %50 = arith.addf %49, %48 : vector<512x128xf32>
    %c0_16 = arith.constant 0 : index
    %c0_17 = arith.constant 0 : index
    %51 = vector.load %arg4[%c0_16, %c0_17] : memref<1x128xf32, #tpu.memory_space<vmem>>, vector<1x128xf32>
    %52 = vector.broadcast %51 : vector<1x128xf32> to vector<512x128xf32>
    %53 = arith.addf %50, %52 : vector<512x128xf32>
    %cst_18 = arith.constant 0.000000e+00 : f32
    %54 = vector.broadcast %cst_18 : f32 to vector<512x128xf32>
    %55 = arith.maximumf %53, %54 : vector<512x128xf32>
    %c0_19 = arith.constant 0 : index
    %c0_20 = arith.constant 0 : index
    %56 = vector.load %arg5[%c0_19, %c0_20] : memref<512x128xf32, #tpu.memory_space<vmem>>, vector<512x128xf32>
    tpu.vector_store %arg5[%c0_19, %c0_20], %55 {strides = array<i32>} : memref<512x128xf32, #tpu.memory_space<vmem>>, vector<512x128xf32>,
    %c0_21 = arith.constant 0 : index
    %c0_22 = arith.constant 0 : index
    %57 = vector.load %arg2[%c0_21, %c0_22] : memref<32x128xf32, #tpu.memory_space<vmem>>, vector<32x128xf32>
    %58 = vector.shape_cast %55 : vector<512x128xf32> to vector<32x16x128xf32>
    %59 = vector.shape_cast %57 : vector<32x128xf32> to vector<32x1x128xf32>
    %60 = vector.broadcast %59 : vector<32x1x128xf32> to vector<32x16x128xf32>
    %61 = arith.mulf %58, %60 : vector<32x16x128xf32>
    %cst_23 = arith.constant dense<0.000000e+00> : vector<32x16xf32>
    %62 = vector.multi_reduction <add>, %61, %cst_23 [2] : vector<32x16x128xf32> to vector<32x16xf32>
    %cst_24 = arith.constant 0.0883883461 : f32
    %63 = vector.broadcast %cst_24 : f32 to vector<32x16xf32>
    %64 = arith.mulf %62, %63 : vector<32x16xf32>
    %cst_25 = arith.constant dense<0xFF800000> : vector<32xf32>
    %65 = vector.multi_reduction <maximumf>, %64, %cst_25 [1] : vector<32x16xf32> to vector<32xf32>
    %66 = vector.shape_cast %65 : vector<32xf32> to vector<32x1xf32>
    %67 = vector.broadcast %66 : vector<32x1xf32> to vector<32x16xf32>
    %68 = arith.subf %64, %67 : vector<32x16xf32>
    %69 = math.exp %68 : vector<32x16xf32>
    %cst_26 = arith.constant dense<0.000000e+00> : vector<32xf32>
    %70 = vector.multi_reduction <add>, %69, %cst_26 [1] : vector<32x16xf32> to vector<32xf32>
    %71 = vector.shape_cast %70 : vector<32xf32> to vector<32x1xf32>
    %72 = tpu.reciprocal %71 : vector<32x1xf32> -> vector<32x1xf32>
    %73 = vector.broadcast %72 : vector<32x1xf32> to vector<32x16xf32>
    %74 = arith.mulf %69, %73 : vector<32x16xf32>
    %75 = vector.shape_cast %74 : vector<32x16xf32> to vector<32x16x1xf32>
    %76 = vector.broadcast %75 : vector<32x16x1xf32> to vector<32x16x128xf32>
    %77 = arith.mulf %76, %58 : vector<32x16x128xf32>
    %cst_27 = arith.constant dense<0.000000e+00> : vector<32x128xf32>
    %78 = vector.multi_reduction <add>, %77, %cst_27 [1] : vector<32x16x128xf32> to vector<32x128xf32>
    %c0_28 = arith.constant 0 : index
    %c0_29 = arith.constant 0 : index
    %79 = vector.load %arg6[%c0_28, %c0_29] : memref<32x128xf32, #tpu.memory_space<vmem>>, vector<32x128xf32>
    tpu.vector_store %arg6[%c0_28, %c0_29], %78 {strides = array<i32>} : memref<32x128xf32, #tpu.memory_space<vmem>>, vector<32x128xf32>,
    return
  }
  func.func @transform_0(%arg0: i32) -> (i32, i32) {
    %c0_i32 = arith.constant 0 : i32
    %c0_i32_0 = arith.constant 0 : i32
    return %arg0, %c0_i32 : i32, i32
  }
  func.func @transform_1(%arg0: i32) -> (i32, i32) {
    %c0_i32 = arith.constant 0 : i32
    %c0_i32_0 = arith.constant 0 : i32
    return %arg0, %c0_i32 : i32, i32
  }
  func.func @transform_2(%arg0: i32) -> (i32, i32) {
    %c0_i32 = arith.constant 0 : i32
    %c0_i32_0 = arith.constant 0 : i32
    %c0_i32_1 = arith.constant 0 : i32
    return %c0_i32, %c0_i32_0 : i32, i32
  }
  func.func @transform_3(%arg0: i32) -> (i32, i32) {
    %c0_i32 = arith.constant 0 : i32
    %c0_i32_0 = arith.constant 0 : i32
    %c0_i32_1 = arith.constant 0 : i32
    return %c0_i32, %c0_i32_0 : i32, i32
  }
  func.func @transform_4(%arg0: i32) -> (i32, i32) {
    %c0_i32 = arith.constant 0 : i32
    %c0_i32_0 = arith.constant 0 : i32
    return %arg0, %c0_i32 : i32, i32
  }
  func.func @transform_5(%arg0: i32) -> (i32, i32) {
    %c0_i32 = arith.constant 0 : i32
    %c0_i32_0 = arith.constant 0 : i32
    return %arg0, %c0_i32 : i32, i32
  }
}

</mosaic_0001>

<llo_original>
// kernel: npa_encoder_forward.1
$region0: #{npa_encoder_forward.1}
  #allocation0 [shape = 'u32[]', space=smem, size = 0x4, offset = 0x4, fixed_abs, tag = 'smem constant byte address 0x4 - core index']
  #allocation1 [shape = 'u32[144,128]{1,0:T(1,128)}', space=vmem, size = 0x12000, scoped, tag = 'internal scratch']
  %s0 = inlined_call_operand.vmem [shape: f32[1024,128], index: 0, kind: input, shape index: {}]
  %s1 = inlined_call_operand.vmem [shape: f32[64,128], index: 1, kind: input, shape index: {}]
  %s2 = inlined_call_operand.vmem [shape: f32[128,384], index: 2, kind: input, shape index: {}]
  %s3 = inlined_call_operand.vmem [shape: f32[1,128], index: 3, kind: input, shape index: {}]
  %s4 = inlined_call_operand.hbm [shape: f32[1024,128], index: 4, kind: output, shape index: {0}]
  %s5 = inlined_call_operand.hbm [shape: f32[64,128], index: 5, kind: output, shape index: {1}]
  %6 = xla_tuple %s4, %s5
  %s7 = sld [smem:[#allocation0]]
  $region57: #{npa_encoder_forward.1} parent=0
    _
  %s9 = ssub.s32 1, %s7
  %s10 = scalar_select 0, %s9, %s7
  $region1: #{npa_encoder_forward.1} parent=0
    #allocation2 [shape = 'u8[524288]{0}', space=vmem, size = 0x80000, scoped, tag = 'output window, operand 0']
    #allocation3 [shape = 's32[2]{0}', space=sflag, size = 0x8, scoped, tag = 'scoped memory for npa_encoder_forward.1']
    #allocation4 [shape = 'u8[32768]{0}', space=vmem, size = 0x8000, scoped, tag = 'output window, operand 1']
    #allocation5 [shape = 's32[2]{0}', space=sflag, size = 0x8, scoped, tag = 'scoped memory for npa_encoder_forward.1']
    %11 = vsyncpa [#allocation3], 0
    %s12 = scalar_lea.sflag [#allocation3], 1
    %13 = vsyncpa %s12, 0
    %14 = vsyncpa [#allocation5], 0
    %s15 = scalar_lea.sflag [#allocation5], 1
    %16 = vsyncpa %s15, 0
    loop: start=0, step=1, limit=4
    $region2: #{npa_encoder_forward.1} parent=1 // loop_pre_header
      _
    $region3: #{npa_encoder_forward.1} parent=1 // loop_header
      %s18 = sphi 0, %s22
      %p19 = scmp.ge.s32.totalorder %s18, 4
      %s28 = sphi 0, %s30
      %s31 = sphi 0, %s28
      %s32 = sphi 0, %s31
      %s48 = sphi 0, %s32
      %s54 = sphi 0, %s56
      %s57 = sphi 0, %s54
      %s58 = sphi 0, %s57
      %s74 = sphi 0, %s58
      %s78 = sphi 0, %s78
      %s80 = sphi 0, %s78
      %s81 = sphi 0, %s80
      %s95 = sphi 0, %s81
      %s99 = sphi 0, %s99
      %s101 = sphi 0, %s99
      %s102 = sphi 0, %s101
      %s116 = sphi 0, %s102
      %s122 = sphi 0, %s124
      %s125 = sphi 0, %s122
      %s126 = sphi 0, %s125
      %s142 = sphi 0, %s126
      %s148 = sphi 0, %s150
      %s151 = sphi 0, %s148
      %s152 = sphi 0, %s151
      %s168 = sphi 0, %s152
    $region4: #{npa_encoder_forward.1} parent=1 // loop_header_branch
      %21 = sbr.rel (%p19) target = $region8
    $region5: #{npa_encoder_forward.1} parent=1 // loop_body
      %s23 = ssub.s32 %s18, 1
      %s24 = ssub.s32 %s18, 2
      %s25 = sadd.s32 %s18, 1
      %s26 = ssub.s32 %s18, %s25
      %p27 = scmp.eq.s32.totalorder %s26, 0
      %s29 = sadd.s32 %s28, 1
      %s30 = scalar_select %p27, %s28, %s29
      %p33 = pneg %p27
      %p34 = scmp.eq.s32.totalorder %s18, 1
      %p35 = por %p33, %p34
      %p36 = scmp.ne.s32.totalorder %s28, %s31
      %p37 = scmp.eq.s32.totalorder %s18, 0
      %p38 = por %p36, %p37
      %p39 = scmp.ne.s32.totalorder %s28, %s31
      %p40 = scmp.eq.s32.totalorder %s23, 1
      %p41 = por %p39, %p40
      %p42 = scmp.ne.s32.totalorder %s31, %s32
      %p43 = scmp.eq.s32.totalorder %s23, 0
      %p44 = por %p42, %p43
      %p45 = scmp.ne.s32.totalorder %s31, %s32
      %p46 = scmp.eq.s32.totalorder %s24, 1
      %p47 = por %p45, %p46
      %p49 = scmp.ne.s32.totalorder %s32, %s48
      %p50 = scmp.eq.s32.totalorder %s24, 0
      %p51 = por %p49, %p50
      %s52 = ssub.s32 %s18, %s25
      %p53 = scmp.eq.s32.totalorder %s52, 0
      %s55 = sadd.s32 %s54, 1
      %s56 = scalar_select %p53, %s54, %s55
      %p59 = pneg %p53
      %p60 = scmp.eq.s32.totalorder %s18, 1
      %p61 = por %p59, %p60
      %p62 = scmp.ne.s32.totalorder %s54, %s57
      %p63 = scmp.eq.s32.totalorder %s18, 0
      %p64 = por %p62, %p63
      %p65 = scmp.ne.s32.totalorder %s54, %s57
      %p66 = scmp.eq.s32.totalorder %s23, 1
      %p67 = por %p65, %p66
      %p68 = scmp.ne.s32.totalorder %s57, %s58
      %p69 = scmp.eq.s32.totalorder %s23, 0
      %p70 = por %p68, %p69
      %p71 = scmp.ne.s32.totalorder %s57, %s58
      %p72 = scmp.eq.s32.totalorder %s24, 1
      %p73 = por %p71, %p72
      %p75 = scmp.ne.s32.totalorder %s58, %s74
      %p76 = scmp.eq.s32.totalorder %s24, 0
      %p77 = por %p75, %p76
      %s79 = sadd.s32 %s78, 1
      %p82 = scmp.eq.s32.totalorder %s18, 1
      %p83 = scmp.ne.s32.totalorder %s78, %s80
      %p84 = scmp.eq.s32.totalorder %s18, 0
      %p85 = por %p83, %p84
      %p86 = scmp.ne.s32.totalorder %s78, %s80
      %p87 = scmp.eq.s32.totalorder %s23, 1
      %p88 = por %p86, %p87
      %p89 = scmp.ne.s32.totalorder %s80, %s81
      %p90 = scmp.eq.s32.totalorder %s23, 0
      %p91 = por %p89, %p90
      %p92 = scmp.ne.s32.totalorder %s80, %s81
      %p93 = scmp.eq.s32.totalorder %s24, 1
      %p94 = por %p92, %p93
      %p96 = scmp.ne.s32.totalorder %s81, %s95
      %p97 = scmp.eq.s32.totalorder %s24, 0
      %p98 = por %p96, %p97
      %s100 = sadd.s32 %s99, 1
      %p103 = scmp.eq.s32.totalorder %s18, 1
      %p104 = scmp.ne.s32.totalorder %s99, %s101
      %p105 = scmp.eq.s32.totalorder %s18, 0
      %p106 = por %p104, %p105
      %p107 = scmp.ne.s32.totalorder %s99, %s101
      %p108 = scmp.eq.s32.totalorder %s23, 1
      %p109 = por %p107, %p108
      %p110 = scmp.ne.s32.totalorder %s101, %s102
      %p111 = scmp.eq.s32.totalorder %s23, 0
      %p112 = por %p110, %p111
      %p113 = scmp.ne.s32.totalorder %s101, %s102
      %p114 = scmp.eq.s32.totalorder %s24, 1
      %p115 = por %p113, %p114
      %p117 = scmp.ne.s32.totalorder %s102, %s116
      %p118 = scmp.eq.s32.totalorder %s24, 0
      %p119 = por %p117, %p118
      %s120 = ssub.s32 %s18, %s25
      %p121 = scmp.eq.s32.totalorder %s120, 0
      %s123 = sadd.s32 %s122, 1
      %s124 = scalar_select %p121, %s122, %s123
      %p127 = pneg %p121
      %p128 = scmp.eq.s32.totalorder %s18, 1
      %p129 = por %p127, %p128
      %p130 = scmp.ne.s32.totalorder %s122, %s125
      %p131 = scmp.eq.s32.totalorder %s18, 0
      %p132 = por %p130, %p131
      %p133 = scmp.ne.s32.totalorder %s122, %s125
      %p134 = scmp.eq.s32.totalorder %s23, 1
      %p135 = por %p133, %p134
      %p136 = scmp.ne.s32.totalorder %s125, %s126
      %p137 = scmp.eq.s32.totalorder %s23, 0
      %p138 = por %p136, %p137
      %p139 = scmp.ne.s32.totalorder %s125, %s126
      %p140 = scmp.eq.s32.totalorder %s24, 1
      %p141 = por %p139, %p140
      %p143 = scmp.ne.s32.totalorder %s126, %s142
      %p144 = scmp.eq.s32.totalorder %s24, 0
      %p145 = por %p143, %p144
      %s146 = ssub.s32 %s18, %s25
      %p147 = scmp.eq.s32.totalorder %s146, 0
      %s149 = sadd.s32 %s148, 1
      %s150 = scalar_select %p147, %s148, %s149
      %p153 = pneg %p147
      %p154 = scmp.eq.s32.totalorder %s18, 1
      %p155 = por %p153, %p154
      %p156 = scmp.ne.s32.totalorder %s148, %s151
      %p157 = scmp.eq.s32.totalorder %s18, 0
      %p158 = por %p156, %p157
      %p159 = scmp.ne.s32.totalorder %s148, %s151
      %p160 = scmp.eq.s32.totalorder %s23, 1
      %p161 = por %p159, %p160
      %p162 = scmp.ne.s32.totalorder %s151, %s152
      %p163 = scmp.eq.s32.totalorder %s23, 0
      %p164 = por %p162, %p163
      %p165 = scmp.ne.s32.totalorder %s151, %s152
      %p166 = scmp.eq.s32.totalorder %s24, 1
      %p167 = por %p165, %p166
      %p169 = scmp.ne.s32.totalorder %s152, %s168
      %p170 = scmp.eq.s32.totalorder %s24, 0
      %p171 = por %p169, %p170
      %p172 = scmp.le.s32.totalorder 1, %s18
      %p173 = scmp.lt.s32.totalorder %s18, 3
      %p174 = pnand %p172, %p173
      %p175 = pneg %p174
      // Predicated region
      $region9: #{npa_encoder_forward.1} parent=5 // pred_check
        _
      $region10: #{npa_encoder_forward.1} parent=5 // pred_check_branch
        %177 = sbr.rel (%p174) target = $region12
      $region11: #{npa_encoder_forward.1} parent=5 // pred_region
        %s178 = ssub.s32 %s18, 1
        // Predicated region
        $region13: #{npa_encoder_forward.1} parent=11 // pred_check
          %p179 = pneg %p91
        $region14: #{npa_encoder_forward.1} parent=11 // pred_check_branch
          %181 = sbr.rel (%p179) target = $region16
        $region15: #{npa_encoder_forward.1} parent=11 // pred_region
          _
        $region16: #{npa_encoder_forward.1} parent=11 // pred_fallthru
          _
        // Predicated region
        $region17: #{npa_encoder_forward.1} parent=11 // pred_check
          %p182 = pneg %p112
        $region18: #{npa_encoder_forward.1} parent=11 // pred_check_branch
          %184 = sbr.rel (%p182) target = $region20
        $region19: #{npa_encoder_forward.1} parent=11 // pred_region
          _
        $region20: #{npa_encoder_forward.1} parent=11 // pred_fallthru
          _
      $region12: #{npa_encoder_forward.1} parent=5 // pred_fallthru
        _
      %p185 = scmp.lt.s32.totalorder %s18, 2
      // Predicated region
      $region21: #{npa_encoder_forward.1} parent=5 // pred_check
        %p186 = pneg %p185
      $region22: #{npa_encoder_forward.1} parent=5 // pred_check_branch
        %188 = sbr.rel (%p186) target = $region24
      $region23: #{npa_encoder_forward.1} parent=5 // pred_region
        // Predicated region
        $region25: #{npa_encoder_forward.1} parent=23 // pred_check
          %p189 = pneg %p38
        $region26: #{npa_encoder_forward.1} parent=23 // pred_check_branch
          %191 = sbr.rel (%p189) target = $region28
        $region27: #{npa_encoder_forward.1} parent=23 // pred_region
          %s192 = smul.u32 64, %s18
          %p193 = scmp.lt.s32.totalorder %s192, 127
          %s194 = scalar_select %p193, %s192, 127
          %s195 = smul.addr %s194, 8
          %s196 = scalar_lea.vmem %s0, %s195
          %s197 = smul.u32 64, %s18
        $region28: #{npa_encoder_forward.1} parent=23 // pred_fallthru
          _
        // Predicated region
        $region29: #{npa_encoder_forward.1} parent=23 // pred_check
          %p198 = pneg %p64
        $region30: #{npa_encoder_forward.1} parent=23 // pred_check_branch
          %200 = sbr.rel (%p198) target = $region32
        $region31: #{npa_encoder_forward.1} parent=23 // pred_region
          %s201 = smul.u32 4, %s18
          %p202 = scmp.lt.s32.totalorder %s201, 7
          %s203 = scalar_select %p202, %s201, 7
          %s204 = smul.addr %s203, 8
          %s205 = scalar_lea.vmem %s1, %s204
          %s206 = smul.u32 4, %s18
        $region32: #{npa_encoder_forward.1} parent=23 // pred_fallthru
          _
      $region24: #{npa_encoder_forward.1} parent=5 // pred_fallthru
        _
      %p207 = scmp.le.s32.totalorder 1, %s18
      %p208 = scmp.lt.s32.totalorder %s18, 3
      %p209 = pnand %p207, %p208
      %p210 = pneg %p209
      // Predicated region
      $region33: #{npa_encoder_forward.1} parent=5 // pred_check
        _
      $region34: #{npa_encoder_forward.1} parent=5 // pred_check_branch
        %212 = sbr.rel (%p209) target = $region36
      $region35: #{npa_encoder_forward.1} parent=5 // pred_region
        %s213 = ssub.s32 %s18, 1
        %s214 = smul.u32 64, %s23
        %p215 = scmp.lt.s32.totalorder %s214, 127
        %s216 = scalar_select %p215, %s214, 127
        %s217 = smul.addr %s216, 8
        %s218 = scalar_lea.vmem %s0, %s217
        %p219 = pneg %p44
        %p220 = pneg %p41
        %s221 = smul.u32 4, %s23
        %p222 = scmp.lt.s32.totalorder %s221, 7
        %s223 = scalar_select %p222, %s221, 7
        %s224 = smul.addr %s223, 8
        %s225 = scalar_lea.vmem %s1, %s224
        %p226 = pneg %p70
        %p227 = pneg %p67
        %p228 = pneg %p91
        %p229 = pneg %p88
        %p230 = pneg %p112
        %p231 = pneg %p109
        %p232 = pneg %p138
        %p233 = pneg %p135
        %s234 = sand.u32 %s125, 1
        %s235 = scalar_lea.sflag [#allocation3], %s234
        %s236 = sand.u32 %s125, 1
        %s237 = smul.addr %s236, 512
        %s238 = scalar_lea.vmem [#allocation2], %s237
        %p239 = pneg %p164
        %p240 = pneg %p161
        %s241 = sand.u32 %s151, 1
        %s242 = scalar_lea.sflag [#allocation5], %s241
        %s243 = sand.u32 %s151, 1
        %s244 = smul.addr %s243, 32
        %s245 = scalar_lea.vmem [#allocation4], %s244
        %s246 = smul.u32 64, %s23
        %p247 = scmp.lt.s32.totalorder %s246, 127
        %s248 = scalar_select %p247, %s246, 127
        %s249 = smul.addr %s248, 8
        %s250 = scalar_lea.vmem %s0, %s249
        %s251 = smul.u32 64, %s23
        %s252 = smul.u32 4, %s23
        %p253 = scmp.lt.s32.totalorder %s252, 7
        %s254 = scalar_select %p253, %s252, 7
        %s255 = smul.addr %s254, 8
        %s256 = scalar_lea.vmem %s1, %s255
        %s257 = smul.u32 4, %s23
        %s258 = smul.u32 64, %s23
        %s259 = smul.u32 4, %s23
        %v260 = vld [vmem:[%s250] sm:$0xff]
        %v261 = vld [vmem:[%s250 + $0x8] sm:$0xff]
        %v262 = vld [vmem:[%s250 + $0x10] sm:$0xff]
        %v263 = vld [vmem:[%s250 + $0x18] sm:$0xff]
        %v264 = vld [vmem:[%s250 + $0x20] sm:$0xff]
        %v265 = vld [vmem:[%s250 + $0x28] sm:$0xff]
        %v266 = vld [vmem:[%s250 + $0x30] sm:$0xff]
        %v267 = vld [vmem:[%s250 + $0x38] sm:$0xff]
        %v268 = vld [vmem:[%s250 + $0x40] sm:$0xff]
        %v269 = vld [vmem:[%s250 + $0x48] sm:$0xff]
        %v270 = vld [vmem:[%s250 + $0x50] sm:$0xff]
        %v271 = vld [vmem:[%s250 + $0x58] sm:$0xff]
        %v272 = vld [vmem:[%s250 + $0x60] sm:$0xff]
        %v273 = vld [vmem:[%s250 + $0x68] sm:$0xff]
        %v274 = vld [vmem:[%s250 + $0x70] sm:$0xff]
        %v275 = vld [vmem:[%s250 + $0x78] sm:$0xff]
        %v276 = vld [vmem:[%s250 + $0x80] sm:$0xff]
        %v277 = vld [vmem:[%s250 + $0x88] sm:$0xff]
        %v278 = vld [vmem:[%s250 + $0x90] sm:$0xff]
        %v279 = vld [vmem:[%s250 + $0x98] sm:$0xff]
        %v280 = vld [vmem:[%s250 + $0xa0] sm:$0xff]
        %v281 = vld [vmem:[%s250 + $0xa8] sm:$0xff]
        %v282 = vld [vmem:[%s250 + $0xb0] sm:$0xff]
        %v283 = vld [vmem:[%s250 + $0xb8] sm:$0xff]
        %v284 = vld [vmem:[%s250 + $0xc0] sm:$0xff]
        %v285 = vld [vmem:[%s250 + $0xc8] sm:$0xff]
        %v286 = vld [vmem:[%s250 + $0xd0] sm:$0xff]
        %v287 = vld [vmem:[%s250 + $0xd8] sm:$0xff]
        %v288 = vld [vmem:[%s250 + $0xe0] sm:$0xff]
        %v289 = vld [vmem:[%s250 + $0xe8] sm:$0xff]
        %v290 = vld [vmem:[%s250 + $0xf0] sm:$0xff]
        %v291 = vld [vmem:[%s250 + $0xf8] sm:$0xff]
        %v292 = vld [vmem:[%s250 + $0x100] sm:$0xff]
        %v293 = vld [vmem:[%s250 + $0x108] sm:$0xff]
        %v294 = vld [vmem:[%s250 + $0x110] sm:$0xff]
        %v295 = vld [vmem:[%s250 + $0x118] sm:$0xff]
        %v296 = vld [vmem:[%s250 + $0x120] sm:$0xff]
        %v297 = vld [vmem:[%s250 + $0x128] sm:$0xff]
        %v298 = vld [vmem:[%s250 + $0x130] sm:$0xff]
        %v299 = vld [vmem:[%s250 + $0x138] sm:$0xff]
        %v300 = vld [vmem:[%s250 + $0x140] sm:$0xff]
        %v301 = vld [vmem:[%s250 + $0x148] sm:$0xff]
        %v302 = vld [vmem:[%s250 + $0x150] sm:$0xff]
        %v303 = vld [vmem:[%s250 + $0x158] sm:$0xff]
        %v304 = vld [vmem:[%s250 + $0x160] sm:$0xff]
        %v305 = vld [vmem:[%s250 + $0x168] sm:$0xff]
        %v306 = vld [vmem:[%s250 + $0x170] sm:$0xff]
        %v307 = vld [vmem:[%s250 + $0x178] sm:$0xff]
        %v308 = vld [vmem:[%s250 + $0x180] sm:$0xff]
        %v309 = vld [vmem:[%s250 + $0x188] sm:$0xff]
        %v310 = vld [vmem:[%s250 + $0x190] sm:$0xff]
        %v311 = vld [vmem:[%s250 + $0x198] sm:$0xff]
        %v312 = vld [vmem:[%s250 + $0x1a0] sm:$0xff]
        %v313 = vld [vmem:[%s250 + $0x1a8] sm:$0xff]
        %v314 = vld [vmem:[%s250 + $0x1b0] sm:$0xff]
        %v315 = vld [vmem:[%s250 + $0x1b8] sm:$0xff]
        %v316 = vld [vmem:[%s250 + $0x1c0] sm:$0xff]
        %v317 = vld [vmem:[%s250 + $0x1c8] sm:$0xff]
        %v318 = vld [vmem:[%s250 + $0x1d0] sm:$0xff]
        %v319 = vld [vmem:[%s250 + $0x1d8] sm:$0xff]
        %v320 = vld [vmem:[%s250 + $0x1e0] sm:$0xff]
        %v321 = vld [vmem:[%s250 + $0x1e8] sm:$0xff]
        %v322 = vld [vmem:[%s250 + $0x1f0] sm:$0xff]
        %v323 = vld [vmem:[%s250 + $0x1f8] sm:$0xff]
        %v324 = vld [vmem:[%s2] sm:$0xff]
        %v325 = vld [vmem:[%s2 + $0x8] sm:$0xff]
        %v326 = vld [vmem:[%s2 + $0x10] sm:$0xff]
        %v327 = vld [vmem:[%s2 + $0x18] sm:$0xff]
        %v328 = vld [vmem:[%s2 + $0x20] sm:$0xff]
        %v329 = vld [vmem:[%s2 + $0x28] sm:$0xff]
        %v330 = vld [vmem:[%s2 + $0x30] sm:$0xff]
        %v331 = vld [vmem:[%s2 + $0x38] sm:$0xff]
        %v332 = vld [vmem:[%s2 + $0x40] sm:$0xff]
        %v333 = vld [vmem:[%s2 + $0x48] sm:$0xff]
        %v334 = vld [vmem:[%s2 + $0x50] sm:$0xff]
        %v335 = vld [vmem:[%s2 + $0x58] sm:$0xff]
        %v336 = vld [vmem:[%s2 + $0x60] sm:$0xff]
        %v337 = vld [vmem:[%s2 + $0x68] sm:$0xff]
        %v338 = vld [vmem:[%s2 + $0x70] sm:$0xff]
        %v339 = vld [vmem:[%s2 + $0x78] sm:$0xff]
        %v340 = vld [vmem:[%s2 + $0x80] sm:$0xff]
        %v341 = vld [vmem:[%s2 + $0x88] sm:$0xff]
        %v342 = vld [vmem:[%s2 + $0x90] sm:$0xff]
        %v343 = vld [vmem:[%s2 + $0x98] sm:$0xff]
        %v344 = vld [vmem:[%s2 + $0xa0] sm:$0xff]
        %v345 = vld [vmem:[%s2 + $0xa8] sm:$0xff]
        %v346 = vld [vmem:[%s2 + $0xb0] sm:$0xff]
        %v347 = vld [vmem:[%s2 + $0xb8] sm:$0xff]
        %v348 = vld [vmem:[%s2 + $0xc0] sm:$0xff]
        %v349 = vld [vmem:[%s2 + $0xc8] sm:$0xff]
        %v350 = vld [vmem:[%s2 + $0xd0] sm:$0xff]
        %v351 = vld [vmem:[%s2 + $0xd8] sm:$0xff]
        %v352 = vld [vmem:[%s2 + $0xe0] sm:$0xff]
        %v353 = vld [vmem:[%s2 + $0xe8] sm:$0xff]
        %v354 = vld [vmem:[%s2 + $0xf0] sm:$0xff]
        %v355 = vld [vmem:[%s2 + $0xf8] sm:$0xff]
        %v356 = vld [vmem:[%s2 + $0x100] sm:$0xff]
        %v357 = vld [vmem:[%s2 + $0x108] sm:$0xff]
        %v358 = vld [vmem:[%s2 + $0x110] sm:$0xff]
        %v359 = vld [vmem:[%s2 + $0x118] sm:$0xff]
        %v360 = vld [vmem:[%s2 + $0x120] sm:$0xff]
        %v361 = vld [vmem:[%s2 + $0x128] sm:$0xff]
        %v362 = vld [vmem:[%s2 + $0x130] sm:$0xff]
        %v363 = vld [vmem:[%s2 + $0x138] sm:$0xff]
        %v364 = vld [vmem:[%s2 + $0x140] sm:$0xff]
        %v365 = vld [vmem:[%s2 + $0x148] sm:$0xff]
        %v366 = vld [vmem:[%s2 + $0x150] sm:$0xff]
        %v367 = vld [vmem:[%s2 + $0x158] sm:$0xff]
        %v368 = vld [vmem:[%s2 + $0x160] sm:$0xff]
        %v369 = vld [vmem:[%s2 + $0x168] sm:$0xff]
        %v370 = vld [vmem:[%s2 + $0x170] sm:$0xff]
        %v371 = vld [vmem:[%s2 + $0x178] sm:$0xff]
        %372 = vmatprep.subr.mxu0 %v370
        %373 = vmatpush1.msra.mxu0 %v369
        %374 = vmatprep.subr.mxu0 %v367
        %375 = vmatpush1.msra.mxu0 %v366
        %376 = vmatprep.subr.mxu0 %v364
        %377 = vmatpush1.msra.mxu0 %v363
        %378 = vmatprep.subr.mxu0 %v361
        %379 = vmatpush1.msra.mxu0 %v360
        %380 = vmatprep.subr.mxu0 %v358
        %381 = vmatpush1.msra.mxu0 %v357
        %382 = vmatprep.subr.mxu0 %v355
        %383 = vmatpush1.msra.mxu0 %v354
        %384 = vmatprep.subr.mxu0 %v352
        %385 = vmatpush1.msra.mxu0 %v351
        %386 = vmatprep.subr.mxu0 %v349
        %387 = vmatpush1.msra.mxu0 %v348
        %388 = vmatprep.subr.mxu0 %v346
        %389 = vmatpush1.msra.mxu0 %v345
        %390 = vmatprep.subr.mxu0 %v343
        %391 = vmatpush1.msra.mxu0 %v342
        %392 = vmatprep.subr.mxu0 %v340
        %393 = vmatpush1.msra.mxu0 %v339
        %394 = vmatprep.subr.mxu0 %v337
        %395 = vmatpush1.msra.mxu0 %v336
        %396 = vmatprep.subr.mxu0 %v334
        %397 = vmatpush1.msra.mxu0 %v333
        %398 = vmatprep.subr.mxu0 %v331
        %399 = vmatpush1.msra.mxu0 %v330
        %400 = vmatprep.subr.mxu0 %v328
        %401 = vmatpush1.msra.mxu0 %v327
        %402 = vmatprep.subr.mxu0 %v325
        %403 = vmatpush1.msra.mxu0 %v324
        %404 = vmatprep.subr.mxu0 0.0
        %405 = vmatpush2.msra.mxu0 0.0
        %406 = vmatprep.subr.mxu0 0.0
        %407 = vmatpush2.msra.mxu0 0.0
        %408 = vmatprep.subr.mxu0 0.0
        %409 = vmatpush2.msra.mxu0 0.0
        %410 = vmatprep.subr.mxu0 0.0
        %411 = vmatpush2.msra.mxu0 0.0
        %412 = vmatprep.subr.mxu0 0.0
        %413 = vmatpush2.msra.mxu0 0.0
        %414 = vmatprep.subr.mxu0 0.0
        %415 = vmatpush2.msra.mxu0 0.0
        %416 = vmatprep.subr.mxu0 0.0
        %417 = vmatpush2.msra.mxu0 0.0
        %418 = vmatprep.subr.mxu0 0.0
        %419 = vmatpush2.msra.mxu0 0.0
        %420 = vmatprep.subr.mxu0 0.0
        %421 = vmatpush2.msra.mxu0 0.0
        %422 = vmatprep.subr.mxu0 0.0
        %423 = vmatpush2.msra.mxu0 0.0
        %424 = vmatprep.subr.mxu0 0.0
        %425 = vmatpush2.msra.mxu0 0.0
        %426 = vmatprep.subr.mxu0 0.0
        %427 = vmatpush2.msra.mxu0 0.0
        %428 = vmatprep.subr.mxu0 0.0
        %429 = vmatpush2.msra.mxu0 0.0
        %430 = vmatprep.subr.mxu0 0.0
        %431 = vmatpush2.msra.mxu0 0.0
        %432 = vmatprep.subr.mxu0 0.0
        %433 = vmatpush2.msra.mxu0 0.0
        %434 = vmatprep.subr.mxu0 0.0
        %435 = vmatpush2.msra.mxu0 0.0
        %436 = vmatprep.mubr.f32.mxu0 0.0
        %437 = vmatmul.mubr.f32.gmra.mxu0 %v260
        %v438 = vpop.f32.mrf.mxu0
        %v439 = vadd.f32 0.0, %v438
        %v440 = vpop.f32.mrf.mxu0
        %v441 = vadd.f32 0.0, %v440
        %442 = vmatprep.mubr.f32.mxu0 0.0
        %443 = vmatmul.mubr.f32.gmra.mxu0 %v261
        %v444 = vpop.f32.mrf.mxu0
        %v445 = vadd.f32 0.0, %v444
        %v446 = vpop.f32.mrf.mxu0
        %v447 = vadd.f32 0.0, %v446
        %448 = vmatprep.mubr.f32.mxu0 0.0
        %449 = vmatmul.mubr.f32.gmra.mxu0 %v262
        %v450 = vpop.f32.mrf.mxu0
        %v451 = vadd.f32 0.0, %v450
        %v452 = vpop.f32.mrf.mxu0
        %v453 = vadd.f32 0.0, %v452
        %454 = vmatprep.mubr.f32.mxu0 0.0
        %455 = vmatmul.mubr.f32.gmra.mxu0 %v263
        %v456 = vpop.f32.mrf.mxu0
        %v457 = vadd.f32 0.0, %v456
        %v458 = vpop.f32.mrf.mxu0
        %v459 = vadd.f32 0.0, %v458
        %460 = vmatprep.mubr.f32.mxu0 0.0
        %461 = vmatmul.mubr.f32.gmra.mxu0 %v264
        %v462 = vpop.f32.mrf.mxu0
        %v463 = vadd.f32 0.0, %v462
        %v464 = vpop.f32.mrf.mxu0
        %v465 = vadd.f32 0.0, %v464
        %466 = vmatprep.mubr.f32.mxu0 0.0
        %467 = vmatmul.mubr.f32.gmra.mxu0 %v265
        %v468 = vpop.f32.mrf.mxu0
        %v469 = vadd.f32 0.0, %v468
        %v470 = vpop.f32.mrf.mxu0
        %v471 = vadd.f32 0.0, %v470
        %472 = vmatprep.mubr.f32.mxu0 0.0
        %473 = vmatmul.mubr.f32.gmra.mxu0 %v266
        %v474 = vpop.f32.mrf.mxu0
        %v475 = vadd.f32 0.0, %v474
        %v476 = vpop.f32.mrf.mxu0
        %v477 = vadd.f32 0.0, %v476
        %478 = vmatprep.mubr.f32.mxu0 0.0
        %479 = vmatmul.mubr.f32.gmra.mxu0 %v267
        %v480 = vpop.f32.mrf.mxu0
        %v481 = vadd.f32 0.0, %v480
        %v482 = vpop.f32.mrf.mxu0
        %v483 = vadd.f32 0.0, %v482
        %484 = vmatprep.mubr.f32.mxu0 0.0
        %485 = vmatmul.mubr.f32.gmra.mxu0 %v268
        %v486 = vpop.f32.mrf.mxu0
        %v487 = vadd.f32 0.0, %v486
        %v488 = vpop.f32.mrf.mxu0
        %v489 = vadd.f32 0.0, %v488
        %490 = vmatprep.mubr.f32.mxu0 0.0
        %491 = vmatmul.mubr.f32.gmra.mxu0 %v269
        %v492 = vpop.f32.mrf.mxu0
        %v493 = vadd.f32 0.0, %v492
        %v494 = vpop.f32.mrf.mxu0
        %v495 = vadd.f32 0.0, %v494
        %496 = vmatprep.mubr.f32.mxu0 0.0
        %497 = vmatmul.mubr.f32.gmra.mxu0 %v270
        %v498 = vpop.f32.mrf.mxu0
        %v499 = vadd.f32 0.0, %v498
        %v500 = vpop.f32.mrf.mxu0
        %v501 = vadd.f32 0.0, %v500
        %502 = vmatprep.mubr.f32.mxu0 0.0
        %503 = vmatmul.mubr.f32.gmra.mxu0 %v271
        %v504 = vpop.f32.mrf.mxu0
        %v505 = vadd.f32 0.0, %v504
        %v506 = vpop.f32.mrf.mxu0
        %v507 = vadd.f32 0.0, %v506
        %508 = vmatprep.mubr.f32.mxu0 0.0
        %509 = vmatmul.mubr.f32.gmra.mxu0 %v272
        %v510 = vpop.f32.mrf.mxu0
        %v511 = vadd.f32 0.0, %v510
        %v512 = vpop.f32.mrf.mxu0
        %v513 = vadd.f32 0.0, %v512
        %514 = vmatprep.mubr.f32.mxu0 0.0
        %515 = vmatmul.mubr.f32.gmra.mxu0 %v273
        %v516 = vpop.f32.mrf.mxu0
        %v517 = vadd.f32 0.0, %v516
        %v518 = vpop.f32.mrf.mxu0
        %v519 = vadd.f32 0.0, %v518
        %520 = vmatprep.mubr.f32.mxu0 0.0
        %521 = vmatmul.mubr.f32.gmra.mxu0 %v274
        %v522 = vpop.f32.mrf.mxu0
        %v523 = vadd.f32 0.0, %v522
        %v524 = vpop.f32.mrf.mxu0
        %v525 = vadd.f32 0.0, %v524
        %526 = vmatprep.mubr.f32.mxu0 0.0
        %527 = vmatmul.mubr.f32.gmra.mxu0 %v275
        %v528 = vpop.f32.mrf.mxu0
        %v529 = vadd.f32 0.0, %v528
        %v530 = vpop.f32.mrf.mxu0
        %v531 = vadd.f32 0.0, %v530
        %532 = vmatprep.mubr.f32.mxu0 0.0
        %533 = vmatmul.mubr.f32.gmra.mxu0 %v276
        %v534 = vpop.f32.mrf.mxu0
        %v535 = vadd.f32 0.0, %v534
        %v536 = vpop.f32.mrf.mxu0
        %v537 = vadd.f32 0.0, %v536
        %538 = vmatprep.mubr.f32.mxu0 0.0
        %539 = vmatmul.mubr.f32.gmra.mxu0 %v277
        %v540 = vpop.f32.mrf.mxu0
        %v541 = vadd.f32 0.0, %v540
        %v542 = vpop.f32.mrf.mxu0
        %v543 = vadd.f32 0.0, %v542
        %544 = vmatprep.mubr.f32.mxu0 0.0
        %545 = vmatmul.mubr.f32.gmra.mxu0 %v278
        %v546 = vpop.f32.mrf.mxu0
        %v547 = vadd.f32 0.0, %v546
        %v548 = vpop.f32.mrf.mxu0
        %v549 = vadd.f32 0.0, %v548
        %550 = vmatprep.mubr.f32.mxu0 0.0
        %551 = vmatmul.mubr.f32.gmra.mxu0 %v279
        %v552 = vpop.f32.mrf.mxu0
        %v553 = vadd.f32 0.0, %v552
        %v554 = vpop.f32.mrf.mxu0
        %v555 = vadd.f32 0.0, %v554
        %556 = vmatprep.mubr.f32.mxu0 0.0
        %557 = vmatmul.mubr.f32.gmra.mxu0 %v280
        %v558 = vpop.f32.mrf.mxu0
        %v559 = vadd.f32 0.0, %v558
        %v560 = vpop.f32.mrf.mxu0
        %v561 = vadd.f32 0.0, %v560
        %562 = vmatprep.mubr.f32.mxu0 0.0
        %563 = vmatmul.mubr.f32.gmra.mxu0 %v281
        %v564 = vpop.f32.mrf.mxu0
        %v565 = vadd.f32 0.0, %v564
        %v566 = vpop.f32.mrf.mxu0
        %v567 = vadd.f32 0.0, %v566
        %568 = vmatprep.mubr.f32.mxu0 0.0
        %569 = vmatmul.mubr.f32.gmra.mxu0 %v282
        %v570 = vpop.f32.mrf.mxu0
        %v571 = vadd.f32 0.0, %v570
        %v572 = vpop.f32.mrf.mxu0
        %v573 = vadd.f32 0.0, %v572
        %574 = vmatprep.mubr.f32.mxu0 0.0
        %575 = vmatmul.mubr.f32.gmra.mxu0 %v283
        %v576 = vpop.f32.mrf.mxu0
        %v577 = vadd.f32 0.0, %v576
        %v578 = vpop.f32.mrf.mxu0
        %v579 = vadd.f32 0.0, %v578
        %580 = vmatprep.mubr.f32.mxu0 0.0
        %581 = vmatmul.mubr.f32.gmra.mxu0 %v284
        %v582 = vpop.f32.mrf.mxu0
        %v583 = vadd.f32 0.0, %v582
        %v584 = vpop.f32.mrf.mxu0
        %v585 = vadd.f32 0.0, %v584
        %586 = vmatprep.mubr.f32.mxu0 0.0
        %587 = vmatmul.mubr.f32.gmra.mxu0 %v285
        %v588 = vpop.f32.mrf.mxu0
        %v589 = vadd.f32 0.0, %v588
        %v590 = vpop.f32.mrf.mxu0
        %v591 = vadd.f32 0.0, %v590
        %592 = vmatprep.mubr.f32.mxu0 0.0
        %593 = vmatmul.mubr.f32.gmra.mxu0 %v286
        %v594 = vpop.f32.mrf.mxu0
        %v595 = vadd.f32 0.0, %v594
        %v596 = vpop.f32.mrf.mxu0
        %v597 = vadd.f32 0.0, %v596
        %598 = vmatprep.mubr.f32.mxu0 0.0
        %599 = vmatmul.mubr.f32.gmra.mxu0 %v287
        %v600 = vpop.f32.mrf.mxu0
        %v601 = vadd.f32 0.0, %v600
        %v602 = vpop.f32.mrf.mxu0
        %v603 = vadd.f32 0.0, %v602
        %604 = vmatprep.mubr.f32.mxu0 0.0
        %605 = vmatmul.mubr.f32.gmra.mxu0 %v288
        %v606 = vpop.f32.mrf.mxu0
        %v607 = vadd.f32 0.0, %v606
        %v608 = vpop.f32.mrf.mxu0
        %v609 = vadd.f32 0.0, %v608
        %610 = vmatprep.mubr.f32.mxu0 0.0
        %611 = vmatmul.mubr.f32.gmra.mxu0 %v289
        %v612 = vpop.f32.mrf.mxu0
        %v613 = vadd.f32 0.0, %v612
        %v614 = vpop.f32.mrf.mxu0
        %v615 = vadd.f32 0.0, %v614
        %616 = vmatprep.mubr.f32.mxu0 0.0
        %617 = vmatmul.mubr.f32.gmra.mxu0 %v290
        %v618 = vpop.f32.mrf.mxu0
        %v619 = vadd.f32 0.0, %v618
        %v620 = vpop.f32.mrf.mxu0
        %v621 = vadd.f32 0.0, %v620
        %622 = vmatprep.mubr.f32.mxu0 0.0
        %623 = vmatmul.mubr.f32.gmra.mxu0 %v291
        %v624 = vpop.f32.mrf.mxu0
        %v625 = vadd.f32 0.0, %v624
        %v626 = vpop.f32.mrf.mxu0
        %v627 = vadd.f32 0.0, %v626
        %628 = vmatprep.mubr.f32.mxu0 0.0
        %629 = vmatmul.mubr.f32.gmra.mxu0 %v292
        %v630 = vpop.f32.mrf.mxu0
        %v631 = vadd.f32 0.0, %v630
        %v632 = vpop.f32.mrf.mxu0
        %v633 = vadd.f32 0.0, %v632
        %634 = vmatprep.mubr.f32.mxu0 0.0
        %635 = vmatmul.mubr.f32.gmra.mxu0 %v293
        %v636 = vpop.f32.mrf.mxu0
        %v637 = vadd.f32 0.0, %v636
        %v638 = vpop.f32.mrf.mxu0
        %v639 = vadd.f32 0.0, %v638
        %640 = vmatprep.mubr.f32.mxu0 0.0
        %641 = vmatmul.mubr.f32.gmra.mxu0 %v294
        %v642 = vpop.f32.mrf.mxu0
        %v643 = vadd.f32 0.0, %v642
        %v644 = vpop.f32.mrf.mxu0
        %v645 = vadd.f32 0.0, %v644
        %646 = vmatprep.mubr.f32.mxu0 0.0
        %647 = vmatmul.mubr.f32.gmra.mxu0 %v295
        %v648 = vpop.f32.mrf.mxu0
        %v649 = vadd.f32 0.0, %v648
        %v650 = vpop.f32.mrf.mxu0
        %v651 = vadd.f32 0.0, %v650
        %652 = vmatprep.mubr.f32.mxu0 0.0
        %653 = vmatmul.mubr.f32.gmra.mxu0 %v296
        %v654 = vpop.f32.mrf.mxu0
        %v655 = vadd.f32 0.0, %v654
        %v656 = vpop.f32.mrf.mxu0
        %v657 = vadd.f32 0.0, %v656
        %658 = vmatprep.mubr.f32.mxu0 0.0
        %659 = vmatmul.mubr.f32.gmra.mxu0 %v297
        %v660 = vpop.f32.mrf.mxu0
        %v661 = vadd.f32 0.0, %v660
        %v662 = vpop.f32.mrf.mxu0
        %v663 = vadd.f32 0.0, %v662
        %664 = vmatprep.mubr.f32.mxu0 0.0
        %665 = vmatmul.mubr.f32.gmra.mxu0 %v298
        %v666 = vpop.f32.mrf.mxu0
        %v667 = vadd.f32 0.0, %v666
        %v668 = vpop.f32.mrf.mxu0
        %v669 = vadd.f32 0.0, %v668
        %670 = vmatprep.mubr.f32.mxu0 0.0
        %671 = vmatmul.mubr.f32.gmra.mxu0 %v299
        %v672 = vpop.f32.mrf.mxu0
        %v673 = vadd.f32 0.0, %v672
        %v674 = vpop.f32.mrf.mxu0
        %v675 = vadd.f32 0.0, %v674
        %676 = vmatprep.mubr.f32.mxu0 0.0
        %677 = vmatmul.mubr.f32.gmra.mxu0 %v300
        %v678 = vpop.f32.mrf.mxu0
        %v679 = vadd.f32 0.0, %v678
        %v680 = vpop.f32.mrf.mxu0
        %v681 = vadd.f32 0.0, %v680
        %682 = vmatprep.mubr.f32.mxu0 0.0
        %683 = vmatmul.mubr.f32.gmra.mxu0 %v301
        %v684 = vpop.f32.mrf.mxu0
        %v685 = vadd.f32 0.0, %v684
        %v686 = vpop.f32.mrf.mxu0
        %v687 = vadd.f32 0.0, %v686
        %688 = vmatprep.mubr.f32.mxu0 0.0
        %689 = vmatmul.mubr.f32.gmra.mxu0 %v302
        %v690 = vpop.f32.mrf.mxu0
        %v691 = vadd.f32 0.0, %v690
        %v692 = vpop.f32.mrf.mxu0
        %v693 = vadd.f32 0.0, %v692
        %694 = vmatprep.mubr.f32.mxu0 0.0
        %695 = vmatmul.mubr.f32.gmra.mxu0 %v303
        %v696 = vpop.f32.mrf.mxu0
        %v697 = vadd.f32 0.0, %v696
        %v698 = vpop.f32.mrf.mxu0
        %v699 = vadd.f32 0.0, %v698
        %700 = vmatprep.mubr.f32.mxu0 0.0
        %701 = vmatmul.mubr.f32.gmra.mxu0 %v304
        %v702 = vpop.f32.mrf.mxu0
        %v703 = vadd.f32 0.0, %v702
        %v704 = vpop.f32.mrf.mxu0
        %v705 = vadd.f32 0.0, %v704
        %706 = vmatprep.mubr.f32.mxu0 0.0
        %707 = vmatmul.mubr.f32.gmra.mxu0 %v305
        %v708 = vpop.f32.mrf.mxu0
        %v709 = vadd.f32 0.0, %v708
        %v710 = vpop.f32.mrf.mxu0
        %v711 = vadd.f32 0.0, %v710
        %712 = vmatprep.mubr.f32.mxu0 0.0
        %713 = vmatmul.mubr.f32.gmra.mxu0 %v306
        %v714 = vpop.f32.mrf.mxu0
        %v715 = vadd.f32 0.0, %v714
        %v716 = vpop.f32.mrf.mxu0
        %v717 = vadd.f32 0.0, %v716
        %718 = vmatprep.mubr.f32.mxu0 0.0
        %719 = vmatmul.mubr.f32.gmra.mxu0 %v307
        %v720 = vpop.f32.mrf.mxu0
        %v721 = vadd.f32 0.0, %v720
        %v722 = vpop.f32.mrf.mxu0
        %v723 = vadd.f32 0.0, %v722
        %724 = vmatprep.mubr.f32.mxu0 0.0
        %725 = vmatmul.mubr.f32.gmra.mxu0 %v308
        %v726 = vpop.f32.mrf.mxu0
        %v727 = vadd.f32 0.0, %v726
        %v728 = vpop.f32.mrf.mxu0
        %v729 = vadd.f32 0.0, %v728
        %730 = vmatprep.mubr.f32.mxu0 0.0
        %731 = vmatmul.mubr.f32.gmra.mxu0 %v309
        %v732 = vpop.f32.mrf.mxu0
        %v733 = vadd.f32 0.0, %v732
        %v734 = vpop.f32.mrf.mxu0
        %v735 = vadd.f32 0.0, %v734
        %736 = vmatprep.mubr.f32.mxu0 0.0
        %737 = vmatmul.mubr.f32.gmra.mxu0 %v310
        %v738 = vpop.f32.mrf.mxu0
        %v739 = vadd.f32 0.0, %v738
        %v740 = vpop.f32.mrf.mxu0
        %v741 = vadd.f32 0.0, %v740
        %742 = vmatprep.mubr.f32.mxu0 0.0
        %743 = vmatmul.mubr.f32.gmra.mxu0 %v311
        %v744 = vpop.f32.mrf.mxu0
        %v745 = vadd.f32 0.0, %v744
        %v746 = vpop.f32.mrf.mxu0
        %v747 = vadd.f32 0.0, %v746
        %748 = vmatprep.mubr.f32.mxu0 0.0
        %749 = vmatmul.mubr.f32.gmra.mxu0 %v312
        %v750 = vpop.f32.mrf.mxu0
        %v751 = vadd.f32 0.0, %v750
        %v752 = vpop.f32.mrf.mxu0
        %v753 = vadd.f32 0.0, %v752
        %754 = vmatprep.mubr.f32.mxu0 0.0
        %755 = vmatmul.mubr.f32.gmra.mxu0 %v313
        %v756 = vpop.f32.mrf.mxu0
        %v757 = vadd.f32 0.0, %v756
        %v758 = vpop.f32.mrf.mxu0
        %v759 = vadd.f32 0.0, %v758
        %760 = vmatprep.mubr.f32.mxu0 0.0
        %761 = vmatmul.mubr.f32.gmra.mxu0 %v314
        %v762 = vpop.f32.mrf.mxu0
        %v763 = vadd.f32 0.0, %v762
        %v764 = vpop.f32.mrf.mxu0
        %v765 = vadd.f32 0.0, %v764
        %766 = vmatprep.mubr.f32.mxu0 0.0
        %767 = vmatmul.mubr.f32.gmra.mxu0 %v315
        %v768 = vpop.f32.mrf.mxu0
        %v769 = vadd.f32 0.0, %v768
        %v770 = vpop.f32.mrf.mxu0
        %v771 = vadd.f32 0.0, %v770
        %772 = vmatprep.mubr.f32.mxu0 0.0
        %773 = vmatmul.mubr.f32.gmra.mxu0 %v316
        %v774 = vpop.f32.mrf.mxu0
        %v775 = vadd.f32 0.0, %v774
        %v776 = vpop.f32.mrf.mxu0
        %v777 = vadd.f32 0.0, %v776
        %778 = vmatprep.mubr.f32.mxu0 0.0
        %779 = vmatmul.mubr.f32.gmra.mxu0 %v317
        %v780 = vpop.f32.mrf.mxu0
        %v781 = vadd.f32 0.0, %v780
        %v782 = vpop.f32.mrf.mxu0
        %v783 = vadd.f32 0.0, %v782
        %784 = vmatprep.mubr.f32.mxu0 0.0
        %785 = vmatmul.mubr.f32.gmra.mxu0 %v318
        %v786 = vpop.f32.mrf.mxu0
        %v787 = vadd.f32 0.0, %v786
        %v788 = vpop.f32.mrf.mxu0
        %v789 = vadd.f32 0.0, %v788
        %790 = vmatprep.mubr.f32.mxu0 0.0
        %791 = vmatmul.mubr.f32.gmra.mxu0 %v319
        %v792 = vpop.f32.mrf.mxu0
        %v793 = vadd.f32 0.0, %v792
        %v794 = vpop.f32.mrf.mxu0
        %v795 = vadd.f32 0.0, %v794
        %796 = vmatprep.mubr.f32.mxu0 0.0
        %797 = vmatmul.mubr.f32.gmra.mxu0 %v320
        %v798 = vpop.f32.mrf.mxu0
        %v799 = vadd.f32 0.0, %v798
        %v800 = vpop.f32.mrf.mxu0
        %v801 = vadd.f32 0.0, %v800
        %802 = vmatprep.mubr.f32.mxu0 0.0
        %803 = vmatmul.mubr.f32.gmra.mxu0 %v321
        %v804 = vpop.f32.mrf.mxu0
        %v805 = vadd.f32 0.0, %v804
        %v806 = vpop.f32.mrf.mxu0
        %v807 = vadd.f32 0.0, %v806
        %808 = vmatprep.mubr.f32.mxu0 0.0
        %809 = vmatmul.mubr.f32.gmra.mxu0 %v322
        %v810 = vpop.f32.mrf.mxu0
        %v811 = vadd.f32 0.0, %v810
        %v812 = vpop.f32.mrf.mxu0
        %v813 = vadd.f32 0.0, %v812
        %814 = vmatprep.mubr.f32.mxu0 0.0
        %815 = vmatmul.mubr.f32.gmra.mxu0 %v323
        %v816 = vpop.f32.mrf.mxu0
        %v817 = vadd.f32 0.0, %v816
        %v818 = vpop.f32.mrf.mxu0
        %v819 = vadd.f32 0.0, %v818
        %820 = vdwg.mxu0
        %821 = vmatprep.subr.mxu0 0.0
        %822 = vmatpush1.msra.mxu0 %v371
        %823 = vmatprep.subr.mxu0 0.0
        %824 = vmatpush1.msra.mxu0 %v368
        %825 = vmatprep.subr.mxu0 0.0
        %826 = vmatpush1.msra.mxu0 %v365
        %827 = vmatprep.subr.mxu0 0.0
        %828 = vmatpush1.msra.mxu0 %v362
        %829 = vmatprep.subr.mxu0 0.0
        %830 = vmatpush1.msra.mxu0 %v359
        %831 = vmatprep.subr.mxu0 0.0
        %832 = vmatpush1.msra.mxu0 %v356
        %833 = vmatprep.subr.mxu0 0.0
        %834 = vmatpush1.msra.mxu0 %v353
        %835 = vmatprep.subr.mxu0 0.0
        %836 = vmatpush1.msra.mxu0 %v350
        %837 = vmatprep.subr.mxu0 0.0
        %838 = vmatpush1.msra.mxu0 %v347
        %839 = vmatprep.subr.mxu0 0.0
        %840 = vmatpush1.msra.mxu0 %v344
        %841 = vmatprep.subr.mxu0 0.0
        %842 = vmatpush1.msra.mxu0 %v341
        %843 = vmatprep.subr.mxu0 0.0
        %844 = vmatpush1.msra.mxu0 %v338
        %845 = vmatprep.subr.mxu0 0.0
        %846 = vmatpush1.msra.mxu0 %v335
        %847 = vmatprep.subr.mxu0 0.0
        %848 = vmatpush1.msra.mxu0 %v332
        %849 = vmatprep.subr.mxu0 0.0
        %850 = vmatpush1.msra.mxu0 %v329
        %851 = vmatprep.subr.mxu0 0.0
        %852 = vmatpush1.msra.mxu0 %v326
        %853 = vmatprep.subr.mxu0 0.0
        %854 = vmatpush2.msra.mxu0 0.0
        %855 = vmatprep.subr.mxu0 0.0
        %856 = vmatpush2.msra.mxu0 0.0
        %857 = vmatprep.subr.mxu0 0.0
        %858 = vmatpush2.msra.mxu0 0.0
        %859 = vmatprep.subr.mxu0 0.0
        %860 = vmatpush2.msra.mxu0 0.0
        %861 = vmatprep.subr.mxu0 0.0
        %862 = vmatpush2.msra.mxu0 0.0
        %863 = vmatprep.subr.mxu0 0.0
        %864 = vmatpush2.msra.mxu0 0.0
        %865 = vmatprep.subr.mxu0 0.0
        %866 = vmatpush2.msra.mxu0 0.0
        %867 = vmatprep.subr.mxu0 0.0
        %868 = vmatpush2.msra.mxu0 0.0
        %869 = vmatprep.subr.mxu0 0.0
        %870 = vmatpush2.msra.mxu0 0.0
        %871 = vmatprep.subr.mxu0 0.0
        %872 = vmatpush2.msra.mxu0 0.0
        %873 = vmatprep.subr.mxu0 0.0
        %874 = vmatpush2.msra.mxu0 0.0
        %875 = vmatprep.subr.mxu0 0.0
        %876 = vmatpush2.msra.mxu0 0.0
        %877 = vmatprep.subr.mxu0 0.0
        %878 = vmatpush2.msra.mxu0 0.0
        %879 = vmatprep.subr.mxu0 0.0
        %880 = vmatpush2.msra.mxu0 0.0
        %881 = vmatprep.subr.mxu0 0.0
        %882 = vmatpush2.msra.mxu0 0.0
        %883 = vmatprep.subr.mxu0 0.0
        %884 = vmatpush2.msra.mxu0 0.0
        %885 = vmatprep.mubr.f32.mxu0 0.0
        %886 = vmatmul.mubr.f32.gmra.mxu0 %v260
        %v887 = vpop.f32.mrf.mxu0
        %v888 = vadd.f32 0.0, %v887
        %v889 = vpop.f32.mrf.mxu0
        %890 = vmatprep.mubr.f32.mxu0 0.0
        %891 = vmatmul.mubr.f32.gmra.mxu0 %v261
        %v892 = vpop.f32.mrf.mxu0
        %v893 = vadd.f32 0.0, %v892
        %v894 = vpop.f32.mrf.mxu0
        %895 = vmatprep.mubr.f32.mxu0 0.0
        %896 = vmatmul.mubr.f32.gmra.mxu0 %v262
        %v897 = vpop.f32.mrf.mxu0
        %v898 = vadd.f32 0.0, %v897
        %v899 = vpop.f32.mrf.mxu0
        %900 = vmatprep.mubr.f32.mxu0 0.0
        %901 = vmatmul.mubr.f32.gmra.mxu0 %v263
        %v902 = vpop.f32.mrf.mxu0
        %v903 = vadd.f32 0.0, %v902
        %v904 = vpop.f32.mrf.mxu0
        %905 = vmatprep.mubr.f32.mxu0 0.0
        %906 = vmatmul.mubr.f32.gmra.mxu0 %v264
        %v907 = vpop.f32.mrf.mxu0
        %v908 = vadd.f32 0.0, %v907
        %v909 = vpop.f32.mrf.mxu0
        %910 = vmatprep.mubr.f32.mxu0 0.0
        %911 = vmatmul.mubr.f32.gmra.mxu0 %v265
        %v912 = vpop.f32.mrf.mxu0
        %v913 = vadd.f32 0.0, %v912
        %v914 = vpop.f32.mrf.mxu0
        %915 = vmatprep.mubr.f32.mxu0 0.0
        %916 = vmatmul.mubr.f32.gmra.mxu0 %v266
        %v917 = vpop.f32.mrf.mxu0
        %v918 = vadd.f32 0.0, %v917
        %v919 = vpop.f32.mrf.mxu0
        %920 = vmatprep.mubr.f32.mxu0 0.0
        %921 = vmatmul.mubr.f32.gmra.mxu0 %v267
        %v922 = vpop.f32.mrf.mxu0
        %v923 = vadd.f32 0.0, %v922
        %v924 = vpop.f32.mrf.mxu0
        %925 = vmatprep.mubr.f32.mxu0 0.0
        %926 = vmatmul.mubr.f32.gmra.mxu0 %v268
        %v927 = vpop.f32.mrf.mxu0
        %v928 = vadd.f32 0.0, %v927
        %v929 = vpop.f32.mrf.mxu0
        %930 = vmatprep.mubr.f32.mxu0 0.0
        %931 = vmatmul.mubr.f32.gmra.mxu0 %v269
        %v932 = vpop.f32.mrf.mxu0
        %v933 = vadd.f32 0.0, %v932
        %v934 = vpop.f32.mrf.mxu0
        %935 = vmatprep.mubr.f32.mxu0 0.0
        %936 = vmatmul.mubr.f32.gmra.mxu0 %v270
        %v937 = vpop.f32.mrf.mxu0
        %v938 = vadd.f32 0.0, %v937
        %v939 = vpop.f32.mrf.mxu0
        %940 = vmatprep.mubr.f32.mxu0 0.0
        %941 = vmatmul.mubr.f32.gmra.mxu0 %v271
        %v942 = vpop.f32.mrf.mxu0
        %v943 = vadd.f32 0.0, %v942
        %v944 = vpop.f32.mrf.mxu0
        %945 = vmatprep.mubr.f32.mxu0 0.0
        %946 = vmatmul.mubr.f32.gmra.mxu0 %v272
        %v947 = vpop.f32.mrf.mxu0
        %v948 = vadd.f32 0.0, %v947
        %v949 = vpop.f32.mrf.mxu0
        %950 = vmatprep.mubr.f32.mxu0 0.0
        %951 = vmatmul.mubr.f32.gmra.mxu0 %v273
        %v952 = vpop.f32.mrf.mxu0
        %v953 = vadd.f32 0.0, %v952
        %v954 = vpop.f32.mrf.mxu0
        %955 = vmatprep.mubr.f32.mxu0 0.0
        %956 = vmatmul.mubr.f32.gmra.mxu0 %v274
        %v957 = vpop.f32.mrf.mxu0
        %v958 = vadd.f32 0.0, %v957
        %v959 = vpop.f32.mrf.mxu0
        %960 = vmatprep.mubr.f32.mxu0 0.0
        %961 = vmatmul.mubr.f32.gmra.mxu0 %v275
        %v962 = vpop.f32.mrf.mxu0
        %v963 = vadd.f32 0.0, %v962
        %v964 = vpop.f32.mrf.mxu0
        %965 = vmatprep.mubr.f32.mxu0 0.0
        %966 = vmatmul.mubr.f32.gmra.mxu0 %v276
        %v967 = vpop.f32.mrf.mxu0
        %v968 = vadd.f32 0.0, %v967
        %v969 = vpop.f32.mrf.mxu0
        %970 = vmatprep.mubr.f32.mxu0 0.0
        %971 = vmatmul.mubr.f32.gmra.mxu0 %v277
        %v972 = vpop.f32.mrf.mxu0
        %v973 = vadd.f32 0.0, %v972
        %v974 = vpop.f32.mrf.mxu0
        %975 = vmatprep.mubr.f32.mxu0 0.0
        %976 = vmatmul.mubr.f32.gmra.mxu0 %v278
        %v977 = vpop.f32.mrf.mxu0
        %v978 = vadd.f32 0.0, %v977
        %v979 = vpop.f32.mrf.mxu0
        %980 = vmatprep.mubr.f32.mxu0 0.0
        %981 = vmatmul.mubr.f32.gmra.mxu0 %v279
        %v982 = vpop.f32.mrf.mxu0
        %v983 = vadd.f32 0.0, %v982
        %v984 = vpop.f32.mrf.mxu0
        %985 = vmatprep.mubr.f32.mxu0 0.0
        %986 = vmatmul.mubr.f32.gmra.mxu0 %v280
        %v987 = vpop.f32.mrf.mxu0
        %v988 = vadd.f32 0.0, %v987
        %v989 = vpop.f32.mrf.mxu0
        %990 = vmatprep.mubr.f32.mxu0 0.0
        %991 = vmatmul.mubr.f32.gmra.mxu0 %v281
        %v992 = vpop.f32.mrf.mxu0
        %v993 = vadd.f32 0.0, %v992
        %v994 = vpop.f32.mrf.mxu0
        %995 = vmatprep.mubr.f32.mxu0 0.0
        %996 = vmatmul.mubr.f32.gmra.mxu0 %v282
        %v997 = vpop.f32.mrf.mxu0
        %v998 = vadd.f32 0.0, %v997
        %v999 = vpop.f32.mrf.mxu0
        %1000 = vmatprep.mubr.f32.mxu0 0.0
        %1001 = vmatmul.mubr.f32.gmra.mxu0 %v283
        %v1002 = vpop.f32.mrf.mxu0
        %v1003 = vadd.f32 0.0, %v1002
        %v1004 = vpop.f32.mrf.mxu0
        %1005 = vmatprep.mubr.f32.mxu0 0.0
        %1006 = vmatmul.mubr.f32.gmra.mxu0 %v284
        %v1007 = vpop.f32.mrf.mxu0
        %v1008 = vadd.f32 0.0, %v1007
        %v1009 = vpop.f32.mrf.mxu0
        %1010 = vmatprep.mubr.f32.mxu0 0.0
        %1011 = vmatmul.mubr.f32.gmra.mxu0 %v285
        %v1012 = vpop.f32.mrf.mxu0
        %v1013 = vadd.f32 0.0, %v1012
        %v1014 = vpop.f32.mrf.mxu0
        %1015 = vmatprep.mubr.f32.mxu0 0.0
        %1016 = vmatmul.mubr.f32.gmra.mxu0 %v286
        %v1017 = vpop.f32.mrf.mxu0
        %v1018 = vadd.f32 0.0, %v1017
        %v1019 = vpop.f32.mrf.mxu0
        %1020 = vmatprep.mubr.f32.mxu0 0.0
        %1021 = vmatmul.mubr.f32.gmra.mxu0 %v287
        %v1022 = vpop.f32.mrf.mxu0
        %v1023 = vadd.f32 0.0, %v1022
        %v1024 = vpop.f32.mrf.mxu0
        %1025 = vmatprep.mubr.f32.mxu0 0.0
        %1026 = vmatmul.mubr.f32.gmra.mxu0 %v288
        %v1027 = vpop.f32.mrf.mxu0
        %v1028 = vadd.f32 0.0, %v1027
        %v1029 = vpop.f32.mrf.mxu0
        %1030 = vmatprep.mubr.f32.mxu0 0.0
        %1031 = vmatmul.mubr.f32.gmra.mxu0 %v289
        %v1032 = vpop.f32.mrf.mxu0
        %v1033 = vadd.f32 0.0, %v1032
        %v1034 = vpop.f32.mrf.mxu0
        %1035 = vmatprep.mubr.f32.mxu0 0.0
        %1036 = vmatmul.mubr.f32.gmra.mxu0 %v290
        %v1037 = vpop.f32.mrf.mxu0
        %v1038 = vadd.f32 0.0, %v1037
        %v1039 = vpop.f32.mrf.mxu0
        %1040 = vmatprep.mubr.f32.mxu0 0.0
        %1041 = vmatmul.mubr.f32.gmra.mxu0 %v291
        %v1042 = vpop.f32.mrf.mxu0
        %v1043 = vadd.f32 0.0, %v1042
        %v1044 = vpop.f32.mrf.mxu0
        %1045 = vmatprep.mubr.f32.mxu0 0.0
        %1046 = vmatmul.mubr.f32.gmra.mxu0 %v292
        %v1047 = vpop.f32.mrf.mxu0
        %v1048 = vadd.f32 0.0, %v1047
        %v1049 = vpop.f32.mrf.mxu0
        %1050 = vmatprep.mubr.f32.mxu0 0.0
        %1051 = vmatmul.mubr.f32.gmra.mxu0 %v293
        %v1052 = vpop.f32.mrf.mxu0
        %v1053 = vadd.f32 0.0, %v1052
        %v1054 = vpop.f32.mrf.mxu0
        %1055 = vmatprep.mubr.f32.mxu0 0.0
        %1056 = vmatmul.mubr.f32.gmra.mxu0 %v294
        %v1057 = vpop.f32.mrf.mxu0
        %v1058 = vadd.f32 0.0, %v1057
        %v1059 = vpop.f32.mrf.mxu0
        %1060 = vmatprep.mubr.f32.mxu0 0.0
        %1061 = vmatmul.mubr.f32.gmra.mxu0 %v295
        %v1062 = vpop.f32.mrf.mxu0
        %v1063 = vadd.f32 0.0, %v1062
        %v1064 = vpop.f32.mrf.mxu0
        %1065 = vmatprep.mubr.f32.mxu0 0.0
        %1066 = vmatmul.mubr.f32.gmra.mxu0 %v296
        %v1067 = vpop.f32.mrf.mxu0
        %v1068 = vadd.f32 0.0, %v1067
        %v1069 = vpop.f32.mrf.mxu0
        %1070 = vmatprep.mubr.f32.mxu0 0.0
        %1071 = vmatmul.mubr.f32.gmra.mxu0 %v297
        %v1072 = vpop.f32.mrf.mxu0
        %v1073 = vadd.f32 0.0, %v1072
        %v1074 = vpop.f32.mrf.mxu0
        %1075 = vmatprep.mubr.f32.mxu0 0.0
        %1076 = vmatmul.mubr.f32.gmra.mxu0 %v298
        %v1077 = vpop.f32.mrf.mxu0
        %v1078 = vadd.f32 0.0, %v1077
        %v1079 = vpop.f32.mrf.mxu0
        %1080 = vmatprep.mubr.f32.mxu0 0.0
        %1081 = vmatmul.mubr.f32.gmra.mxu0 %v299
        %v1082 = vpop.f32.mrf.mxu0
        %v1083 = vadd.f32 0.0, %v1082
        %v1084 = vpop.f32.mrf.mxu0
        %1085 = vmatprep.mubr.f32.mxu0 0.0
        %1086 = vmatmul.mubr.f32.gmra.mxu0 %v300
        %v1087 = vpop.f32.mrf.mxu0
        %v1088 = vadd.f32 0.0, %v1087
        %v1089 = vpop.f32.mrf.mxu0
        %1090 = vmatprep.mubr.f32.mxu0 0.0
        %1091 = vmatmul.mubr.f32.gmra.mxu0 %v301
        %v1092 = vpop.f32.mrf.mxu0
        %v1093 = vadd.f32 0.0, %v1092
        %v1094 = vpop.f32.mrf.mxu0
        %1095 = vmatprep.mubr.f32.mxu0 0.0
        %1096 = vmatmul.mubr.f32.gmra.mxu0 %v302
        %v1097 = vpop.f32.mrf.mxu0
        %v1098 = vadd.f32 0.0, %v1097
        %v1099 = vpop.f32.mrf.mxu0
        %1100 = vmatprep.mubr.f32.mxu0 0.0
        %1101 = vmatmul.mubr.f32.gmra.mxu0 %v303
        %v1102 = vpop.f32.mrf.mxu0
        %v1103 = vadd.f32 0.0, %v1102
        %v1104 = vpop.f32.mrf.mxu0
        %1105 = vmatprep.mubr.f32.mxu0 0.0
        %1106 = vmatmul.mubr.f32.gmra.mxu0 %v304
        %v1107 = vpop.f32.mrf.mxu0
        %v1108 = vadd.f32 0.0, %v1107
        %v1109 = vpop.f32.mrf.mxu0
        %1110 = vmatprep.mubr.f32.mxu0 0.0
        %1111 = vmatmul.mubr.f32.gmra.mxu0 %v305
        %v1112 = vpop.f32.mrf.mxu0
        %v1113 = vadd.f32 0.0, %v1112
        %v1114 = vpop.f32.mrf.mxu0
        %1115 = vmatprep.mubr.f32.mxu0 0.0
        %1116 = vmatmul.mubr.f32.gmra.mxu0 %v306
        %v1117 = vpop.f32.mrf.mxu0
        %v1118 = vadd.f32 0.0, %v1117
        %v1119 = vpop.f32.mrf.mxu0
        %1120 = vmatprep.mubr.f32.mxu0 0.0
        %1121 = vmatmul.mubr.f32.gmra.mxu0 %v307
        %v1122 = vpop.f32.mrf.mxu0
        %v1123 = vadd.f32 0.0, %v1122
        %v1124 = vpop.f32.mrf.mxu0
        %1125 = vmatprep.mubr.f32.mxu0 0.0
        %1126 = vmatmul.mubr.f32.gmra.mxu0 %v308
        %v1127 = vpop.f32.mrf.mxu0
        %v1128 = vadd.f32 0.0, %v1127
        %v1129 = vpop.f32.mrf.mxu0
        %1130 = vmatprep.mubr.f32.mxu0 0.0
        %1131 = vmatmul.mubr.f32.gmra.mxu0 %v309
        %v1132 = vpop.f32.mrf.mxu0
        %v1133 = vadd.f32 0.0, %v1132
        %v1134 = vpop.f32.mrf.mxu0
        %1135 = vmatprep.mubr.f32.mxu0 0.0
        %1136 = vmatmul.mubr.f32.gmra.mxu0 %v310
        %v1137 = vpop.f32.mrf.mxu0
        %v1138 = vadd.f32 0.0, %v1137
        %v1139 = vpop.f32.mrf.mxu0
        %1140 = vmatprep.mubr.f32.mxu0 0.0
        %1141 = vmatmul.mubr.f32.gmra.mxu0 %v311
        %v1142 = vpop.f32.mrf.mxu0
        %v1143 = vadd.f32 0.0, %v1142
        %v1144 = vpop.f32.mrf.mxu0
        %1145 = vmatprep.mubr.f32.mxu0 0.0
        %1146 = vmatmul.mubr.f32.gmra.mxu0 %v312
        %v1147 = vpop.f32.mrf.mxu0
        %v1148 = vadd.f32 0.0, %v1147
        %v1149 = vpop.f32.mrf.mxu0
        %1150 = vmatprep.mubr.f32.mxu0 0.0
        %1151 = vmatmul.mubr.f32.gmra.mxu0 %v313
        %v1152 = vpop.f32.mrf.mxu0
        %v1153 = vadd.f32 0.0, %v1152
        %v1154 = vpop.f32.mrf.mxu0
        %1155 = vmatprep.mubr.f32.mxu0 0.0
        %1156 = vmatmul.mubr.f32.gmra.mxu0 %v314
        %v1157 = vpop.f32.mrf.mxu0
        %v1158 = vadd.f32 0.0, %v1157
        %v1159 = vpop.f32.mrf.mxu0
        %1160 = vmatprep.mubr.f32.mxu0 0.0
        %1161 = vmatmul.mubr.f32.gmra.mxu0 %v315
        %v1162 = vpop.f32.mrf.mxu0
        %v1163 = vadd.f32 0.0, %v1162
        %v1164 = vpop.f32.mrf.mxu0
        %1165 = vmatprep.mubr.f32.mxu0 0.0
        %1166 = vmatmul.mubr.f32.gmra.mxu0 %v316
        %v1167 = vpop.f32.mrf.mxu0
        %v1168 = vadd.f32 0.0, %v1167
        %v1169 = vpop.f32.mrf.mxu0
        %1170 = vmatprep.mubr.f32.mxu0 0.0
        %1171 = vmatmul.mubr.f32.gmra.mxu0 %v317
        %v1172 = vpop.f32.mrf.mxu0
        %v1173 = vadd.f32 0.0, %v1172
        %v1174 = vpop.f32.mrf.mxu0
        %1175 = vmatprep.mubr.f32.mxu0 0.0
        %1176 = vmatmul.mubr.f32.gmra.mxu0 %v318
        %v1177 = vpop.f32.mrf.mxu0
        %v1178 = vadd.f32 0.0, %v1177
        %v1179 = vpop.f32.mrf.mxu0
        %1180 = vmatprep.mubr.f32.mxu0 0.0
        %1181 = vmatmul.mubr.f32.gmra.mxu0 %v319
        %v1182 = vpop.f32.mrf.mxu0
        %v1183 = vadd.f32 0.0, %v1182
        %v1184 = vpop.f32.mrf.mxu0
        %1185 = vmatprep.mubr.f32.mxu0 0.0
        %1186 = vmatmul.mubr.f32.gmra.mxu0 %v320
        %v1187 = vpop.f32.mrf.mxu0
        %v1188 = vadd.f32 0.0, %v1187
        %v1189 = vpop.f32.mrf.mxu0
        %1190 = vmatprep.mubr.f32.mxu0 0.0
        %1191 = vmatmul.mubr.f32.gmra.mxu0 %v321
        %v1192 = vpop.f32.mrf.mxu0
        %v1193 = vadd.f32 0.0, %v1192
        %v1194 = vpop.f32.mrf.mxu0
        %1195 = vmatprep.mubr.f32.mxu0 0.0
        %1196 = vmatmul.mubr.f32.gmra.mxu0 %v322
        %v1197 = vpop.f32.mrf.mxu0
        %v1198 = vadd.f32 0.0, %v1197
        %v1199 = vpop.f32.mrf.mxu0
        %1200 = vmatprep.mubr.f32.mxu0 0.0
        %1201 = vmatmul.mubr.f32.gmra.mxu0 %v323
        %v1202 = vpop.f32.mrf.mxu0
        %v1203 = vadd.f32 0.0, %v1202
        %v1204 = vpop.f32.mrf.mxu0
        %1205 = vdwg.mxu0
        %v1206 = vlaneseq
        %v1207 = vshrl.u32 %v1206, 7
        %v1208 = vadd.s32 %v1207, 8
        %v1209 = vadd.s32 %v1207, 16
        %v1210 = vadd.s32 %v1207, 24
        %v1211 = vadd.s32 %v1207, 32
        %v1212 = vadd.s32 %v1207, 40
        %v1213 = vadd.s32 %v1207, 48
        %v1214 = vadd.s32 %v1207, 56
        %v1215 = vadd.s32 %v1207, 64
        %v1216 = vadd.s32 %v1207, 72
        %v1217 = vadd.s32 %v1207, 80
        %v1218 = vadd.s32 %v1207, 88
        %v1219 = vadd.s32 %v1207, 96
        %v1220 = vadd.s32 %v1207, 104
        %v1221 = vadd.s32 %v1207, 112
        %v1222 = vadd.s32 %v1207, 120
        %v1223 = vadd.s32 %v1207, 128
        %v1224 = vadd.s32 %v1207, 136
        %v1225 = vadd.s32 %v1207, 144
        %v1226 = vadd.s32 %v1207, 152
        %v1227 = vadd.s32 %v1207, 160
        %v1228 = vadd.s32 %v1207, 168
        %v1229 = vadd.s32 %v1207, 176
        %v1230 = vadd.s32 %v1207, 184
        %v1231 = vadd.s32 %v1207, 192
        %v1232 = vadd.s32 %v1207, 200
        %v1233 = vadd.s32 %v1207, 208
        %v1234 = vadd.s32 %v1207, 216
        %v1235 = vadd.s32 %v1207, 224
        %v1236 = vadd.s32 %v1207, 232
        %v1237 = vadd.s32 %v1207, 240
        %v1238 = vadd.s32 %v1207, 248
        %v1239 = vadd.s32 %v1207, 256
        %v1240 = vadd.s32 %v1207, 264
        %v1241 = vadd.s32 %v1207, 272
        %v1242 = vadd.s32 %v1207, 280
        %v1243 = vadd.s32 %v1207, 288
        %v1244 = vadd.s32 %v1207, 296
        %v1245 = vadd.s32 %v1207, 304
        %v1246 = vadd.s32 %v1207, 312
        %v1247 = vadd.s32 %v1207, 320
        %v1248 = vadd.s32 %v1207, 328
        %v1249 = vadd.s32 %v1207, 336
        %v1250 = vadd.s32 %v1207, 344
        %v1251 = vadd.s32 %v1207, 352
        %v1252 = vadd.s32 %v1207, 360
        %v1253 = vadd.s32 %v1207, 368
        %v1254 = vadd.s32 %v1207, 376
        %v1255 = vadd.s32 %v1207, 384
        %v1256 = vadd.s32 %v1207, 392
        %v1257 = vadd.s32 %v1207, 400
        %v1258 = vadd.s32 %v1207, 408
        %v1259 = vadd.s32 %v1207, 416
        %v1260 = vadd.s32 %v1207, 424
        %v1261 = vadd.s32 %v1207, 432
        %v1262 = vadd.s32 %v1207, 440
        %v1263 = vadd.s32 %v1207, 448
        %v1264 = vadd.s32 %v1207, 456
        %v1265 = vadd.s32 %v1207, 464
        %v1266 = vadd.s32 %v1207, 472
        %v1267 = vadd.s32 %v1207, 480
        %v1268 = vadd.s32 %v1207, 488
        %v1269 = vadd.s32 %v1207, 496
        %v1270 = vadd.s32 %v1207, 504
        %vm1271 = vcmp.lt.s32.totalorder %v1207, 0
        %v1272 = vsub.s32 0, %v1207
        %v1273 = vsel %vm1271, %v1272, %v1207
        %v1274 = vshrl.u32 %v1273, 4
        %v1275 = vand.u32 %v1273, 15
        %v1276 = vsub.s32 0, %v1275
        %v1277 = vsel %vm1271, %v1276, %v1275
        %vm1278 = vcmp.lt.s32.totalorder %v1208, 0
        %v1279 = vsub.s32 0, %v1208
        %v1280 = vsel %vm1278, %v1279, %v1208
        %v1281 = vshrl.u32 %v1280, 4
        %v1282 = vand.u32 %v1280, 15
        %v1283 = vsub.s32 0, %v1282
        %v1284 = vsel %vm1278, %v1283, %v1282
        %vm1285 = vcmp.lt.s32.totalorder %v1209, 0
        %v1286 = vsub.s32 0, %v1209
        %v1287 = vsel %vm1285, %v1286, %v1209
        %v1288 = vshrl.u32 %v1287, 4
        %v1289 = vand.u32 %v1287, 15
        %v1290 = vsub.s32 0, %v1289
        %v1291 = vsel %vm1285, %v1290, %v1289
        %vm1292 = vcmp.lt.s32.totalorder %v1210, 0
        %v1293 = vsub.s32 0, %v1210
        %v1294 = vsel %vm1292, %v1293, %v1210
        %v1295 = vshrl.u32 %v1294, 4
        %v1296 = vand.u32 %v1294, 15
        %v1297 = vsub.s32 0, %v1296
        %v1298 = vsel %vm1292, %v1297, %v1296
        %vm1299 = vcmp.lt.s32.totalorder %v1211, 0
        %v1300 = vsub.s32 0, %v1211
        %v1301 = vsel %vm1299, %v1300, %v1211
        %v1302 = vshrl.u32 %v1301, 4
        %v1303 = vand.u32 %v1301, 15
        %v1304 = vsub.s32 0, %v1303
        %v1305 = vsel %vm1299, %v1304, %v1303
        %vm1306 = vcmp.lt.s32.totalorder %v1212, 0
        %v1307 = vsub.s32 0, %v1212
        %v1308 = vsel %vm1306, %v1307, %v1212
        %v1309 = vshrl.u32 %v1308, 4
        %v1310 = vand.u32 %v1308, 15
        %v1311 = vsub.s32 0, %v1310
        %v1312 = vsel %vm1306, %v1311, %v1310
        %vm1313 = vcmp.lt.s32.totalorder %v1213, 0
        %v1314 = vsub.s32 0, %v1213
        %v1315 = vsel %vm1313, %v1314, %v1213
        %v1316 = vshrl.u32 %v1315, 4
        %v1317 = vand.u32 %v1315, 15
        %v1318 = vsub.s32 0, %v1317
        %v1319 = vsel %vm1313, %v1318, %v1317
        %vm1320 = vcmp.lt.s32.totalorder %v1214, 0
        %v1321 = vsub.s32 0, %v1214
        %v1322 = vsel %vm1320, %v1321, %v1214
        %v1323 = vshrl.u32 %v1322, 4
        %v1324 = vand.u32 %v1322, 15
        %v1325 = vsub.s32 0, %v1324
        %v1326 = vsel %vm1320, %v1325, %v1324
        %vm1327 = vcmp.lt.s32.totalorder %v1215, 0
        %v1328 = vsub.s32 0, %v1215
        %v1329 = vsel %vm1327, %v1328, %v1215
        %v1330 = vshrl.u32 %v1329, 4
        %v1331 = vand.u32 %v1329, 15
        %v1332 = vsub.s32 0, %v1331
        %v1333 = vsel %vm1327, %v1332, %v1331
        %vm1334 = vcmp.lt.s32.totalorder %v1216, 0
        %v1335 = vsub.s32 0, %v1216
        %v1336 = vsel %vm1334, %v1335, %v1216
        %v1337 = vshrl.u32 %v1336, 4
        %v1338 = vand.u32 %v1336, 15
        %v1339 = vsub.s32 0, %v1338
        %v1340 = vsel %vm1334, %v1339, %v1338
        %vm1341 = vcmp.lt.s32.totalorder %v1217, 0
        %v1342 = vsub.s32 0, %v1217
        %v1343 = vsel %vm1341, %v1342, %v1217
        %v1344 = vshrl.u32 %v1343, 4
        %v1345 = vand.u32 %v1343, 15
        %v1346 = vsub.s32 0, %v1345
        %v1347 = vsel %vm1341, %v1346, %v1345
        %vm1348 = vcmp.lt.s32.totalorder %v1218, 0
        %v1349 = vsub.s32 0, %v1218
        %v1350 = vsel %vm1348, %v1349, %v1218
        %v1351 = vshrl.u32 %v1350, 4
        %v1352 = vand.u32 %v1350, 15
        %v1353 = vsub.s32 0, %v1352
        %v1354 = vsel %vm1348, %v1353, %v1352
        %vm1355 = vcmp.lt.s32.totalorder %v1219, 0
        %v1356 = vsub.s32 0, %v1219
        %v1357 = vsel %vm1355, %v1356, %v1219
        %v1358 = vshrl.u32 %v1357, 4
        %v1359 = vand.u32 %v1357, 15
        %v1360 = vsub.s32 0, %v1359
        %v1361 = vsel %vm1355, %v1360, %v1359
        %vm1362 = vcmp.lt.s32.totalorder %v1220, 0
        %v1363 = vsub.s32 0, %v1220
        %v1364 = vsel %vm1362, %v1363, %v1220
        %v1365 = vshrl.u32 %v1364, 4
        %v1366 = vand.u32 %v1364, 15
        %v1367 = vsub.s32 0, %v1366
        %v1368 = vsel %vm1362, %v1367, %v1366
        %vm1369 = vcmp.lt.s32.totalorder %v1221, 0
        %v1370 = vsub.s32 0, %v1221
        %v1371 = vsel %vm1369, %v1370, %v1221
        %v1372 = vshrl.u32 %v1371, 4
        %v1373 = vand.u32 %v1371, 15
        %v1374 = vsub.s32 0, %v1373
        %v1375 = vsel %vm1369, %v1374, %v1373
        %vm1376 = vcmp.lt.s32.totalorder %v1222, 0
        %v1377 = vsub.s32 0, %v1222
        %v1378 = vsel %vm1376, %v1377, %v1222
        %v1379 = vshrl.u32 %v1378, 4
        %v1380 = vand.u32 %v1378, 15
        %v1381 = vsub.s32 0, %v1380
        %v1382 = vsel %vm1376, %v1381, %v1380
        %vm1383 = vcmp.lt.s32.totalorder %v1223, 0
        %v1384 = vsub.s32 0, %v1223
        %v1385 = vsel %vm1383, %v1384, %v1223
        %v1386 = vshrl.u32 %v1385, 4
        %v1387 = vand.u32 %v1385, 15
        %v1388 = vsub.s32 0, %v1387
        %v1389 = vsel %vm1383, %v1388, %v1387
        %vm1390 = vcmp.lt.s32.totalorder %v1224, 0
        %v1391 = vsub.s32 0, %v1224
        %v1392 = vsel %vm1390, %v1391, %v1224
        %v1393 = vshrl.u32 %v1392, 4
        %v1394 = vand.u32 %v1392, 15
        %v1395 = vsub.s32 0, %v1394
        %v1396 = vsel %vm1390, %v1395, %v1394
        %vm1397 = vcmp.lt.s32.totalorder %v1225, 0
        %v1398 = vsub.s32 0, %v1225
        %v1399 = vsel %vm1397, %v1398, %v1225
        %v1400 = vshrl.u32 %v1399, 4
        %v1401 = vand.u32 %v1399, 15
        %v1402 = vsub.s32 0, %v1401
        %v1403 = vsel %vm1397, %v1402, %v1401
        %vm1404 = vcmp.lt.s32.totalorder %v1226, 0
        %v1405 = vsub.s32 0, %v1226
        %v1406 = vsel %vm1404, %v1405, %v1226
        %v1407 = vshrl.u32 %v1406, 4
        %v1408 = vand.u32 %v1406, 15
        %v1409 = vsub.s32 0, %v1408
        %v1410 = vsel %vm1404, %v1409, %v1408
        %vm1411 = vcmp.lt.s32.totalorder %v1227, 0
        %v1412 = vsub.s32 0, %v1227
        %v1413 = vsel %vm1411, %v1412, %v1227
        %v1414 = vshrl.u32 %v1413, 4
        %v1415 = vand.u32 %v1413, 15
        %v1416 = vsub.s32 0, %v1415
        %v1417 = vsel %vm1411, %v1416, %v1415
        %vm1418 = vcmp.lt.s32.totalorder %v1228, 0
        %v1419 = vsub.s32 0, %v1228
        %v1420 = vsel %vm1418, %v1419, %v1228
        %v1421 = vshrl.u32 %v1420, 4
        %v1422 = vand.u32 %v1420, 15
        %v1423 = vsub.s32 0, %v1422
        %v1424 = vsel %vm1418, %v1423, %v1422
        %vm1425 = vcmp.lt.s32.totalorder %v1229, 0
        %v1426 = vsub.s32 0, %v1229
        %v1427 = vsel %vm1425, %v1426, %v1229
        %v1428 = vshrl.u32 %v1427, 4
        %v1429 = vand.u32 %v1427, 15
        %v1430 = vsub.s32 0, %v1429
        %v1431 = vsel %vm1425, %v1430, %v1429
        %vm1432 = vcmp.lt.s32.totalorder %v1230, 0
        %v1433 = vsub.s32 0, %v1230
        %v1434 = vsel %vm1432, %v1433, %v1230
        %v1435 = vshrl.u32 %v1434, 4
        %v1436 = vand.u32 %v1434, 15
        %v1437 = vsub.s32 0, %v1436
        %v1438 = vsel %vm1432, %v1437, %v1436
        %vm1439 = vcmp.lt.s32.totalorder %v1231, 0
        %v1440 = vsub.s32 0, %v1231
        %v1441 = vsel %vm1439, %v1440, %v1231
        %v1442 = vshrl.u32 %v1441, 4
        %v1443 = vand.u32 %v1441, 15
        %v1444 = vsub.s32 0, %v1443
        %v1445 = vsel %vm1439, %v1444, %v1443
        %vm1446 = vcmp.lt.s32.totalorder %v1232, 0
        %v1447 = vsub.s32 0, %v1232
        %v1448 = vsel %vm1446, %v1447, %v1232
        %v1449 = vshrl.u32 %v1448, 4
        %v1450 = vand.u32 %v1448, 15
        %v1451 = vsub.s32 0, %v1450
        %v1452 = vsel %vm1446, %v1451, %v1450
        %vm1453 = vcmp.lt.s32.totalorder %v1233, 0
        %v1454 = vsub.s32 0, %v1233
        %v1455 = vsel %vm1453, %v1454, %v1233
        %v1456 = vshrl.u32 %v1455, 4
        %v1457 = vand.u32 %v1455, 15
        %v1458 = vsub.s32 0, %v1457
        %v1459 = vsel %vm1453, %v1458, %v1457
        %vm1460 = vcmp.lt.s32.totalorder %v1234, 0
        %v1461 = vsub.s32 0, %v1234
        %v1462 = vsel %vm1460, %v1461, %v1234
        %v1463 = vshrl.u32 %v1462, 4
        %v1464 = vand.u32 %v1462, 15
        %v1465 = vsub.s32 0, %v1464
        %v1466 = vsel %vm1460, %v1465, %v1464
        %vm1467 = vcmp.lt.s32.totalorder %v1235, 0
        %v1468 = vsub.s32 0, %v1235
        %v1469 = vsel %vm1467, %v1468, %v1235
        %v1470 = vshrl.u32 %v1469, 4
        %v1471 = vand.u32 %v1469, 15
        %v1472 = vsub.s32 0, %v1471
        %v1473 = vsel %vm1467, %v1472, %v1471
        %vm1474 = vcmp.lt.s32.totalorder %v1236, 0
        %v1475 = vsub.s32 0, %v1236
        %v1476 = vsel %vm1474, %v1475, %v1236
        %v1477 = vshrl.u32 %v1476, 4
        %v1478 = vand.u32 %v1476, 15
        %v1479 = vsub.s32 0, %v1478
        %v1480 = vsel %vm1474, %v1479, %v1478
        %vm1481 = vcmp.lt.s32.totalorder %v1237, 0
        %v1482 = vsub.s32 0, %v1237
        %v1483 = vsel %vm1481, %v1482, %v1237
        %v1484 = vshrl.u32 %v1483, 4
        %v1485 = vand.u32 %v1483, 15
        %v1486 = vsub.s32 0, %v1485
        %v1487 = vsel %vm1481, %v1486, %v1485
        %vm1488 = vcmp.lt.s32.totalorder %v1238, 0
        %v1489 = vsub.s32 0, %v1238
        %v1490 = vsel %vm1488, %v1489, %v1238
        %v1491 = vshrl.u32 %v1490, 4
        %v1492 = vand.u32 %v1490, 15
        %v1493 = vsub.s32 0, %v1492
        %v1494 = vsel %vm1488, %v1493, %v1492
        %vm1495 = vcmp.lt.s32.totalorder %v1239, 0
        %v1496 = vsub.s32 0, %v1239
        %v1497 = vsel %vm1495, %v1496, %v1239
        %v1498 = vshrl.u32 %v1497, 4
        %v1499 = vand.u32 %v1497, 15
        %v1500 = vsub.s32 0, %v1499
        %v1501 = vsel %vm1495, %v1500, %v1499
        %vm1502 = vcmp.lt.s32.totalorder %v1240, 0
        %v1503 = vsub.s32 0, %v1240
        %v1504 = vsel %vm1502, %v1503, %v1240
        %v1505 = vshrl.u32 %v1504, 4
        %v1506 = vand.u32 %v1504, 15
        %v1507 = vsub.s32 0, %v1506
        %v1508 = vsel %vm1502, %v1507, %v1506
        %vm1509 = vcmp.lt.s32.totalorder %v1241, 0
        %v1510 = vsub.s32 0, %v1241
        %v1511 = vsel %vm1509, %v1510, %v1241
        %v1512 = vshrl.u32 %v1511, 4
        %v1513 = vand.u32 %v1511, 15
        %v1514 = vsub.s32 0, %v1513
        %v1515 = vsel %vm1509, %v1514, %v1513
        %vm1516 = vcmp.lt.s32.totalorder %v1242, 0
        %v1517 = vsub.s32 0, %v1242
        %v1518 = vsel %vm1516, %v1517, %v1242
        %v1519 = vshrl.u32 %v1518, 4
        %v1520 = vand.u32 %v1518, 15
        %v1521 = vsub.s32 0, %v1520
        %v1522 = vsel %vm1516, %v1521, %v1520
        %vm1523 = vcmp.lt.s32.totalorder %v1243, 0
        %v1524 = vsub.s32 0, %v1243
        %v1525 = vsel %vm1523, %v1524, %v1243
        %v1526 = vshrl.u32 %v1525, 4
        %v1527 = vand.u32 %v1525, 15
        %v1528 = vsub.s32 0, %v1527
        %v1529 = vsel %vm1523, %v1528, %v1527
        %vm1530 = vcmp.lt.s32.totalorder %v1244, 0
        %v1531 = vsub.s32 0, %v1244
        %v1532 = vsel %vm1530, %v1531, %v1244
        %v1533 = vshrl.u32 %v1532, 4
        %v1534 = vand.u32 %v1532, 15
        %v1535 = vsub.s32 0, %v1534
        %v1536 = vsel %vm1530, %v1535, %v1534
        %vm1537 = vcmp.lt.s32.totalorder %v1245, 0
        %v1538 = vsub.s32 0, %v1245
        %v1539 = vsel %vm1537, %v1538, %v1245
        %v1540 = vshrl.u32 %v1539, 4
        %v1541 = vand.u32 %v1539, 15
        %v1542 = vsub.s32 0, %v1541
        %v1543 = vsel %vm1537, %v1542, %v1541
        %vm1544 = vcmp.lt.s32.totalorder %v1246, 0
        %v1545 = vsub.s32 0, %v1246
        %v1546 = vsel %vm1544, %v1545, %v1246
        %v1547 = vshrl.u32 %v1546, 4
        %v1548 = vand.u32 %v1546, 15
        %v1549 = vsub.s32 0, %v1548
        %v1550 = vsel %vm1544, %v1549, %v1548
        %vm1551 = vcmp.lt.s32.totalorder %v1247, 0
        %v1552 = vsub.s32 0, %v1247
        %v1553 = vsel %vm1551, %v1552, %v1247
        %v1554 = vshrl.u32 %v1553, 4
        %v1555 = vand.u32 %v1553, 15
        %v1556 = vsub.s32 0, %v1555
        %v1557 = vsel %vm1551, %v1556, %v1555
        %vm1558 = vcmp.lt.s32.totalorder %v1248, 0
        %v1559 = vsub.s32 0, %v1248
        %v1560 = vsel %vm1558, %v1559, %v1248
        %v1561 = vshrl.u32 %v1560, 4
        %v1562 = vand.u32 %v1560, 15
        %v1563 = vsub.s32 0, %v1562
        %v1564 = vsel %vm1558, %v1563, %v1562
        %vm1565 = vcmp.lt.s32.totalorder %v1249, 0
        %v1566 = vsub.s32 0, %v1249
        %v1567 = vsel %vm1565, %v1566, %v1249
        %v1568 = vshrl.u32 %v1567, 4
        %v1569 = vand.u32 %v1567, 15
        %v1570 = vsub.s32 0, %v1569
        %v1571 = vsel %vm1565, %v1570, %v1569
        %vm1572 = vcmp.lt.s32.totalorder %v1250, 0
        %v1573 = vsub.s32 0, %v1250
        %v1574 = vsel %vm1572, %v1573, %v1250
        %v1575 = vshrl.u32 %v1574, 4
        %v1576 = vand.u32 %v1574, 15
        %v1577 = vsub.s32 0, %v1576
        %v1578 = vsel %vm1572, %v1577, %v1576
        %vm1579 = vcmp.lt.s32.totalorder %v1251, 0
        %v1580 = vsub.s32 0, %v1251
        %v1581 = vsel %vm1579, %v1580, %v1251
        %v1582 = vshrl.u32 %v1581, 4
        %v1583 = vand.u32 %v1581, 15
        %v1584 = vsub.s32 0, %v1583
        %v1585 = vsel %vm1579, %v1584, %v1583
        %vm1586 = vcmp.lt.s32.totalorder %v1252, 0
        %v1587 = vsub.s32 0, %v1252
        %v1588 = vsel %vm1586, %v1587, %v1252
        %v1589 = vshrl.u32 %v1588, 4
        %v1590 = vand.u32 %v1588, 15
        %v1591 = vsub.s32 0, %v1590
        %v1592 = vsel %vm1586, %v1591, %v1590
        %vm1593 = vcmp.lt.s32.totalorder %v1253, 0
        %v1594 = vsub.s32 0, %v1253
        %v1595 = vsel %vm1593, %v1594, %v1253
        %v1596 = vshrl.u32 %v1595, 4
        %v1597 = vand.u32 %v1595, 15
        %v1598 = vsub.s32 0, %v1597
        %v1599 = vsel %vm1593, %v1598, %v1597
        %vm1600 = vcmp.lt.s32.totalorder %v1254, 0
        %v1601 = vsub.s32 0, %v1254
        %v1602 = vsel %vm1600, %v1601, %v1254
        %v1603 = vshrl.u32 %v1602, 4
        %v1604 = vand.u32 %v1602, 15
        %v1605 = vsub.s32 0, %v1604
        %v1606 = vsel %vm1600, %v1605, %v1604
        %vm1607 = vcmp.lt.s32.totalorder %v1255, 0
        %v1608 = vsub.s32 0, %v1255
        %v1609 = vsel %vm1607, %v1608, %v1255
        %v1610 = vshrl.u32 %v1609, 4
        %v1611 = vand.u32 %v1609, 15
        %v1612 = vsub.s32 0, %v1611
        %v1613 = vsel %vm1607, %v1612, %v1611
        %vm1614 = vcmp.lt.s32.totalorder %v1256, 0
        %v1615 = vsub.s32 0, %v1256
        %v1616 = vsel %vm1614, %v1615, %v1256
        %v1617 = vshrl.u32 %v1616, 4
        %v1618 = vand.u32 %v1616, 15
        %v1619 = vsub.s32 0, %v1618
        %v1620 = vsel %vm1614, %v1619, %v1618
        %vm1621 = vcmp.lt.s32.totalorder %v1257, 0
        %v1622 = vsub.s32 0, %v1257
        %v1623 = vsel %vm1621, %v1622, %v1257
        %v1624 = vshrl.u32 %v1623, 4
        %v1625 = vand.u32 %v1623, 15
        %v1626 = vsub.s32 0, %v1625
        %v1627 = vsel %vm1621, %v1626, %v1625
        %vm1628 = vcmp.lt.s32.totalorder %v1258, 0
        %v1629 = vsub.s32 0, %v1258
        %v1630 = vsel %vm1628, %v1629, %v1258
        %v1631 = vshrl.u32 %v1630, 4
        %v1632 = vand.u32 %v1630, 15
        %v1633 = vsub.s32 0, %v1632
        %v1634 = vsel %vm1628, %v1633, %v1632
        %vm1635 = vcmp.lt.s32.totalorder %v1259, 0
        %v1636 = vsub.s32 0, %v1259
        %v1637 = vsel %vm1635, %v1636, %v1259
        %v1638 = vshrl.u32 %v1637, 4
        %v1639 = vand.u32 %v1637, 15
        %v1640 = vsub.s32 0, %v1639
        %v1641 = vsel %vm1635, %v1640, %v1639
        %vm1642 = vcmp.lt.s32.totalorder %v1260, 0
        %v1643 = vsub.s32 0, %v1260
        %v1644 = vsel %vm1642, %v1643, %v1260
        %v1645 = vshrl.u32 %v1644, 4
        %v1646 = vand.u32 %v1644, 15
        %v1647 = vsub.s32 0, %v1646
        %v1648 = vsel %vm1642, %v1647, %v1646
        %vm1649 = vcmp.lt.s32.totalorder %v1261, 0
        %v1650 = vsub.s32 0, %v1261
        %v1651 = vsel %vm1649, %v1650, %v1261
        %v1652 = vshrl.u32 %v1651, 4
        %v1653 = vand.u32 %v1651, 15
        %v1654 = vsub.s32 0, %v1653
        %v1655 = vsel %vm1649, %v1654, %v1653
        %vm1656 = vcmp.lt.s32.totalorder %v1262, 0
        %v1657 = vsub.s32 0, %v1262
        %v1658 = vsel %vm1656, %v1657, %v1262
        %v1659 = vshrl.u32 %v1658, 4
        %v1660 = vand.u32 %v1658, 15
        %v1661 = vsub.s32 0, %v1660
        %v1662 = vsel %vm1656, %v1661, %v1660
        %vm1663 = vcmp.lt.s32.totalorder %v1263, 0
        %v1664 = vsub.s32 0, %v1263
        %v1665 = vsel %vm1663, %v1664, %v1263
        %v1666 = vshrl.u32 %v1665, 4
        %v1667 = vand.u32 %v1665, 15
        %v1668 = vsub.s32 0, %v1667
        %v1669 = vsel %vm1663, %v1668, %v1667
        %vm1670 = vcmp.lt.s32.totalorder %v1264, 0
        %v1671 = vsub.s32 0, %v1264
        %v1672 = vsel %vm1670, %v1671, %v1264
        %v1673 = vshrl.u32 %v1672, 4
        %v1674 = vand.u32 %v1672, 15
        %v1675 = vsub.s32 0, %v1674
        %v1676 = vsel %vm1670, %v1675, %v1674
        %vm1677 = vcmp.lt.s32.totalorder %v1265, 0
        %v1678 = vsub.s32 0, %v1265
        %v1679 = vsel %vm1677, %v1678, %v1265
        %v1680 = vshrl.u32 %v1679, 4
        %v1681 = vand.u32 %v1679, 15
        %v1682 = vsub.s32 0, %v1681
        %v1683 = vsel %vm1677, %v1682, %v1681
        %vm1684 = vcmp.lt.s32.totalorder %v1266, 0
        %v1685 = vsub.s32 0, %v1266
        %v1686 = vsel %vm1684, %v1685, %v1266
        %v1687 = vshrl.u32 %v1686, 4
        %v1688 = vand.u32 %v1686, 15
        %v1689 = vsub.s32 0, %v1688
        %v1690 = vsel %vm1684, %v1689, %v1688
        %vm1691 = vcmp.lt.s32.totalorder %v1267, 0
        %v1692 = vsub.s32 0, %v1267
        %v1693 = vsel %vm1691, %v1692, %v1267
        %v1694 = vshrl.u32 %v1693, 4
        %v1695 = vand.u32 %v1693, 15
        %v1696 = vsub.s32 0, %v1695
        %v1697 = vsel %vm1691, %v1696, %v1695
        %vm1698 = vcmp.lt.s32.totalorder %v1268, 0
        %v1699 = vsub.s32 0, %v1268
        %v1700 = vsel %vm1698, %v1699, %v1268
        %v1701 = vshrl.u32 %v1700, 4
        %v1702 = vand.u32 %v1700, 15
        %v1703 = vsub.s32 0, %v1702
        %v1704 = vsel %vm1698, %v1703, %v1702
        %vm1705 = vcmp.lt.s32.totalorder %v1269, 0
        %v1706 = vsub.s32 0, %v1269
        %v1707 = vsel %vm1705, %v1706, %v1269
        %v1708 = vshrl.u32 %v1707, 4
        %v1709 = vand.u32 %v1707, 15
        %v1710 = vsub.s32 0, %v1709
        %v1711 = vsel %vm1705, %v1710, %v1709
        %vm1712 = vcmp.lt.s32.totalorder %v1270, 0
        %v1713 = vsub.s32 0, %v1270
        %v1714 = vsel %vm1712, %v1713, %v1270
        %v1715 = vshrl.u32 %v1714, 4
        %v1716 = vand.u32 %v1714, 15
        %v1717 = vsub.s32 0, %v1716
        %v1718 = vsel %vm1712, %v1717, %v1716
        %vm1719 = vcmp.ne.s32.totalorder %v1277, 0
        %vm1720 = vcmp.ne.s32.totalorder %v1284, 0
        %vm1721 = vcmp.ne.s32.totalorder %v1291, 0
        %vm1722 = vcmp.ne.s32.totalorder %v1298, 0
        %vm1723 = vcmp.ne.s32.totalorder %v1305, 0
        %vm1724 = vcmp.ne.s32.totalorder %v1312, 0
        %vm1725 = vcmp.ne.s32.totalorder %v1319, 0
        %vm1726 = vcmp.ne.s32.totalorder %v1326, 0
        %vm1727 = vcmp.ne.s32.totalorder %v1333, 0
        %vm1728 = vcmp.ne.s32.totalorder %v1340, 0
        %vm1729 = vcmp.ne.s32.totalorder %v1347, 0
        %vm1730 = vcmp.ne.s32.totalorder %v1354, 0
        %vm1731 = vcmp.ne.s32.totalorder %v1361, 0
        %vm1732 = vcmp.ne.s32.totalorder %v1368, 0
        %vm1733 = vcmp.ne.s32.totalorder %v1375, 0
        %vm1734 = vcmp.ne.s32.totalorder %v1382, 0
        %vm1735 = vcmp.ne.s32.totalorder %v1389, 0
        %vm1736 = vcmp.ne.s32.totalorder %v1396, 0
        %vm1737 = vcmp.ne.s32.totalorder %v1403, 0
        %vm1738 = vcmp.ne.s32.totalorder %v1410, 0
        %vm1739 = vcmp.ne.s32.totalorder %v1417, 0
        %vm1740 = vcmp.ne.s32.totalorder %v1424, 0
        %vm1741 = vcmp.ne.s32.totalorder %v1431, 0
        %vm1742 = vcmp.ne.s32.totalorder %v1438, 0
        %vm1743 = vcmp.ne.s32.totalorder %v1445, 0
        %vm1744 = vcmp.ne.s32.totalorder %v1452, 0
        %vm1745 = vcmp.ne.s32.totalorder %v1459, 0
        %vm1746 = vcmp.ne.s32.totalorder %v1466, 0
        %vm1747 = vcmp.ne.s32.totalorder %v1473, 0
        %vm1748 = vcmp.ne.s32.totalorder %v1480, 0
        %vm1749 = vcmp.ne.s32.totalorder %v1487, 0
        %vm1750 = vcmp.ne.s32.totalorder %v1494, 0
        %vm1751 = vcmp.ne.s32.totalorder %v1501, 0
        %vm1752 = vcmp.ne.s32.totalorder %v1508, 0
        %vm1753 = vcmp.ne.s32.totalorder %v1515, 0
        %vm1754 = vcmp.ne.s32.totalorder %v1522, 0
        %vm1755 = vcmp.ne.s32.totalorder %v1529, 0
        %vm1756 = vcmp.ne.s32.totalorder %v1536, 0
        %vm1757 = vcmp.ne.s32.totalorder %v1543, 0
        %vm1758 = vcmp.ne.s32.totalorder %v1550, 0
        %vm1759 = vcmp.ne.s32.totalorder %v1557, 0
        %vm1760 = vcmp.ne.s32.totalorder %v1564, 0
        %vm1761 = vcmp.ne.s32.totalorder %v1571, 0
        %vm1762 = vcmp.ne.s32.totalorder %v1578, 0
        %vm1763 = vcmp.ne.s32.totalorder %v1585, 0
        %vm1764 = vcmp.ne.s32.totalorder %v1592, 0
        %vm1765 = vcmp.ne.s32.totalorder %v1599, 0
        %vm1766 = vcmp.ne.s32.totalorder %v1606, 0
        %vm1767 = vcmp.ne.s32.totalorder %v1613, 0
        %vm1768 = vcmp.ne.s32.totalorder %v1620, 0
        %vm1769 = vcmp.ne.s32.totalorder %v1627, 0
        %vm1770 = vcmp.ne.s32.totalorder %v1634, 0
        %vm1771 = vcmp.ne.s32.totalorder %v1641, 0
        %vm1772 = vcmp.ne.s32.totalorder %v1648, 0
        %vm1773 = vcmp.ne.s32.totalorder %v1655, 0
        %vm1774 = vcmp.ne.s32.totalorder %v1662, 0
        %vm1775 = vcmp.ne.s32.totalorder %v1669, 0
        %vm1776 = vcmp.ne.s32.totalorder %v1676, 0
        %vm1777 = vcmp.ne.s32.totalorder %v1683, 0
        %vm1778 = vcmp.ne.s32.totalorder %v1690, 0
        %vm1779 = vcmp.ne.s32.totalorder %v1697, 0
        %vm1780 = vcmp.ne.s32.totalorder %v1704, 0
        %vm1781 = vcmp.ne.s32.totalorder %v1711, 0
        %vm1782 = vcmp.ne.s32.totalorder %v1718, 0
        %vm1783 = vcmp.lt.s32.totalorder %v1277, 0
        %vm1784 = vcmp.lt.s32.totalorder %v1284, 0
        %vm1785 = vcmp.lt.s32.totalorder %v1291, 0
        %vm1786 = vcmp.lt.s32.totalorder %v1298, 0
        %vm1787 = vcmp.lt.s32.totalorder %v1305, 0
        %vm1788 = vcmp.lt.s32.totalorder %v1312, 0
        %vm1789 = vcmp.lt.s32.totalorder %v1319, 0
        %vm1790 = vcmp.lt.s32.totalorder %v1326, 0
        %vm1791 = vcmp.lt.s32.totalorder %v1333, 0
        %vm1792 = vcmp.lt.s32.totalorder %v1340, 0
        %vm1793 = vcmp.lt.s32.totalorder %v1347, 0
        %vm1794 = vcmp.lt.s32.totalorder %v1354, 0
        %vm1795 = vcmp.lt.s32.totalorder %v1361, 0
        %vm1796 = vcmp.lt.s32.totalorder %v1368, 0
        %vm1797 = vcmp.lt.s32.totalorder %v1375, 0
        %vm1798 = vcmp.lt.s32.totalorder %v1382, 0
        %vm1799 = vcmp.lt.s32.totalorder %v1389, 0
        %vm1800 = vcmp.lt.s32.totalorder %v1396, 0
        %vm1801 = vcmp.lt.s32.totalorder %v1403, 0
        %vm1802 = vcmp.lt.s32.totalorder %v1410, 0
        %vm1803 = vcmp.lt.s32.totalorder %v1417, 0
        %vm1804 = vcmp.lt.s32.totalorder %v1424, 0
        %vm1805 = vcmp.lt.s32.totalorder %v1431, 0
        %vm1806 = vcmp.lt.s32.totalorder %v1438, 0
        %vm1807 = vcmp.lt.s32.totalorder %v1445, 0
        %vm1808 = vcmp.lt.s32.totalorder %v1452, 0
        %vm1809 = vcmp.lt.s32.totalorder %v1459, 0
        %vm1810 = vcmp.lt.s32.totalorder %v1466, 0
        %vm1811 = vcmp.lt.s32.totalorder %v1473, 0
        %vm1812 = vcmp.lt.s32.totalorder %v1480, 0
        %vm1813 = vcmp.lt.s32.totalorder %v1487, 0
        %vm1814 = vcmp.lt.s32.totalorder %v1494, 0
        %vm1815 = vcmp.lt.s32.totalorder %v1501, 0
        %vm1816 = vcmp.lt.s32.totalorder %v1508, 0
        %vm1817 = vcmp.lt.s32.totalorder %v1515, 0
        %vm1818 = vcmp.lt.s32.totalorder %v1522, 0
        %vm1819 = vcmp.lt.s32.totalorder %v1529, 0
        %vm1820 = vcmp.lt.s32.totalorder %v1536, 0
        %vm1821 = vcmp.lt.s32.totalorder %v1543, 0
        %vm1822 = vcmp.lt.s32.totalorder %v1550, 0
        %vm1823 = vcmp.lt.s32.totalorder %v1557, 0
        %vm1824 = vcmp.lt.s32.totalorder %v1564, 0
        %vm1825 = vcmp.lt.s32.totalorder %v1571, 0
        %vm1826 = vcmp.lt.s32.totalorder %v1578, 0
        %vm1827 = vcmp.lt.s32.totalorder %v1585, 0
        %vm1828 = vcmp.lt.s32.totalorder %v1592, 0
        %vm1829 = vcmp.lt.s32.totalorder %v1599, 0
        %vm1830 = vcmp.lt.s32.totalorder %v1606, 0
        %vm1831 = vcmp.lt.s32.totalorder %v1613, 0
        %vm1832 = vcmp.lt.s32.totalorder %v1620, 0
        %vm1833 = vcmp.lt.s32.totalorder %v1627, 0
        %vm1834 = vcmp.lt.s32.totalorder %v1634, 0
        %vm1835 = vcmp.lt.s32.totalorder %v1641, 0
        %vm1836 = vcmp.lt.s32.totalorder %v1648, 0
        %vm1837 = vcmp.lt.s32.totalorder %v1655, 0
        %vm1838 = vcmp.lt.s32.totalorder %v1662, 0
        %vm1839 = vcmp.lt.s32.totalorder %v1669, 0
        %vm1840 = vcmp.lt.s32.totalorder %v1676, 0
        %vm1841 = vcmp.lt.s32.totalorder %v1683, 0
        %vm1842 = vcmp.lt.s32.totalorder %v1690, 0
        %vm1843 = vcmp.lt.s32.totalorder %v1697, 0
        %vm1844 = vcmp.lt.s32.totalorder %v1704, 0
        %vm1845 = vcmp.lt.s32.totalorder %v1711, 0
        %vm1846 = vcmp.lt.s32.totalorder %v1718, 0
        %vm1847 = vmand %vm1783, %vm1719
        %vm1848 = vmand %vm1784, %vm1720
        %vm1849 = vmand %vm1785, %vm1721
        %vm1850 = vmand %vm1786, %vm1722
        %vm1851 = vmand %vm1787, %vm1723
        %vm1852 = vmand %vm1788, %vm1724
        %vm1853 = vmand %vm1789, %vm1725
        %vm1854 = vmand %vm1790, %vm1726
        %vm1855 = vmand %vm1791, %vm1727
        %vm1856 = vmand %vm1792, %vm1728
        %vm1857 = vmand %vm1793, %vm1729
        %vm1858 = vmand %vm1794, %vm1730
        %vm1859 = vmand %vm1795, %vm1731
        %vm1860 = vmand %vm1796, %vm1732
        %vm1861 = vmand %vm1797, %vm1733
        %vm1862 = vmand %vm1798, %vm1734
        %vm1863 = vmand %vm1799, %vm1735
        %vm1864 = vmand %vm1800, %vm1736
        %vm1865 = vmand %vm1801, %vm1737
        %vm1866 = vmand %vm1802, %vm1738
        %vm1867 = vmand %vm1803, %vm1739
        %vm1868 = vmand %vm1804, %vm1740
        %vm1869 = vmand %vm1805, %vm1741
        %vm1870 = vmand %vm1806, %vm1742
        %vm1871 = vmand %vm1807, %vm1743
        %vm1872 = vmand %vm1808, %vm1744
        %vm1873 = vmand %vm1809, %vm1745
        %vm1874 = vmand %vm1810, %vm1746
        %vm1875 = vmand %vm1811, %vm1747
        %vm1876 = vmand %vm1812, %vm1748
        %vm1877 = vmand %vm1813, %vm1749
        %vm1878 = vmand %vm1814, %vm1750
        %vm1879 = vmand %vm1815, %vm1751
        %vm1880 = vmand %vm1816, %vm1752
        %vm1881 = vmand %vm1817, %vm1753
        %vm1882 = vmand %vm1818, %vm1754
        %vm1883 = vmand %vm1819, %vm1755
        %vm1884 = vmand %vm1820, %vm1756
        %vm1885 = vmand %vm1821, %vm1757
        %vm1886 = vmand %vm1822, %vm1758
        %vm1887 = vmand %vm1823, %vm1759
        %vm1888 = vmand %vm1824, %vm1760
        %vm1889 = vmand %vm1825, %vm1761
        %vm1890 = vmand %vm1826, %vm1762
        %vm1891 = vmand %vm1827, %vm1763
        %vm1892 = vmand %vm1828, %vm1764
        %vm1893 = vmand %vm1829, %vm1765
        %vm1894 = vmand %vm1830, %vm1766
        %vm1895 = vmand %vm1831, %vm1767
        %vm1896 = vmand %vm1832, %vm1768
        %vm1897 = vmand %vm1833, %vm1769
        %vm1898 = vmand %vm1834, %vm1770
        %vm1899 = vmand %vm1835, %vm1771
        %vm1900 = vmand %vm1836, %vm1772
        %vm1901 = vmand %vm1837, %vm1773
        %vm1902 = vmand %vm1838, %vm1774
        %vm1903 = vmand %vm1839, %vm1775
        %vm1904 = vmand %vm1840, %vm1776
        %vm1905 = vmand %vm1841, %vm1777
        %vm1906 = vmand %vm1842, %vm1778
        %vm1907 = vmand %vm1843, %vm1779
        %vm1908 = vmand %vm1844, %vm1780
        %vm1909 = vmand %vm1845, %vm1781
        %vm1910 = vmand %vm1846, %vm1782
        %v1911 = vadd.s32 %v1277, 16
        %v1912 = vadd.s32 %v1284, 16
        %v1913 = vadd.s32 %v1291, 16
        %v1914 = vadd.s32 %v1298, 16
        %v1915 = vadd.s32 %v1305, 16
        %v1916 = vadd.s32 %v1312, 16
        %v1917 = vadd.s32 %v1319, 16
        %v1918 = vadd.s32 %v1326, 16
        %v1919 = vadd.s32 %v1333, 16
        %v1920 = vadd.s32 %v1340, 16
        %v1921 = vadd.s32 %v1347, 16
        %v1922 = vadd.s32 %v1354, 16
        %v1923 = vadd.s32 %v1361, 16
        %v1924 = vadd.s32 %v1368, 16
        %v1925 = vadd.s32 %v1375, 16
        %v1926 = vadd.s32 %v1382, 16
        %v1927 = vadd.s32 %v1389, 16
        %v1928 = vadd.s32 %v1396, 16
        %v1929 = vadd.s32 %v1403, 16
        %v1930 = vadd.s32 %v1410, 16
        %v1931 = vadd.s32 %v1417, 16
        %v1932 = vadd.s32 %v1424, 16
        %v1933 = vadd.s32 %v1431, 16
        %v1934 = vadd.s32 %v1438, 16
        %v1935 = vadd.s32 %v1445, 16
        %v1936 = vadd.s32 %v1452, 16
        %v1937 = vadd.s32 %v1459, 16
        %v1938 = vadd.s32 %v1466, 16
        %v1939 = vadd.s32 %v1473, 16
        %v1940 = vadd.s32 %v1480, 16
        %v1941 = vadd.s32 %v1487, 16
        %v1942 = vadd.s32 %v1494, 16
        %v1943 = vadd.s32 %v1501, 16
        %v1944 = vadd.s32 %v1508, 16
        %v1945 = vadd.s32 %v1515, 16
        %v1946 = vadd.s32 %v1522, 16
        %v1947 = vadd.s32 %v1529, 16
        %v1948 = vadd.s32 %v1536, 16
        %v1949 = vadd.s32 %v1543, 16
        %v1950 = vadd.s32 %v1550, 16
        %v1951 = vadd.s32 %v1557, 16
        %v1952 = vadd.s32 %v1564, 16
        %v1953 = vadd.s32 %v1571, 16
        %v1954 = vadd.s32 %v1578, 16
        %v1955 = vadd.s32 %v1585, 16
        %v1956 = vadd.s32 %v1592, 16
        %v1957 = vadd.s32 %v1599, 16
        %v1958 = vadd.s32 %v1606, 16
        %v1959 = vadd.s32 %v1613, 16
        %v1960 = vadd.s32 %v1620, 16
        %v1961 = vadd.s32 %v1627, 16
        %v1962 = vadd.s32 %v1634, 16
        %v1963 = vadd.s32 %v1641, 16
        %v1964 = vadd.s32 %v1648, 16
        %v1965 = vadd.s32 %v1655, 16
        %v1966 = vadd.s32 %v1662, 16
        %v1967 = vadd.s32 %v1669, 16
        %v1968 = vadd.s32 %v1676, 16
        %v1969 = vadd.s32 %v1683, 16
        %v1970 = vadd.s32 %v1690, 16
        %v1971 = vadd.s32 %v1697, 16
        %v1972 = vadd.s32 %v1704, 16
        %v1973 = vadd.s32 %v1711, 16
        %v1974 = vadd.s32 %v1718, 16
        %v1975 = vsel %vm1847, %v1911, %v1277
        %v1976 = vsel %vm1848, %v1912, %v1284
        %v1977 = vsel %vm1849, %v1913, %v1291
        %v1978 = vsel %vm1850, %v1914, %v1298
        %v1979 = vsel %vm1851, %v1915, %v1305
        %v1980 = vsel %vm1852, %v1916, %v1312
        %v1981 = vsel %vm1853, %v1917, %v1319
        %v1982 = vsel %vm1854, %v1918, %v1326
        %v1983 = vsel %vm1855, %v1919, %v1333
        %v1984 = vsel %vm1856, %v1920, %v1340
        %v1985 = vsel %vm1857, %v1921, %v1347
        %v1986 = vsel %vm1858, %v1922, %v1354
        %v1987 = vsel %vm1859, %v1923, %v1361
        %v1988 = vsel %vm1860, %v1924, %v1368
        %v1989 = vsel %vm1861, %v1925, %v1375
        %v1990 = vsel %vm1862, %v1926, %v1382
        %v1991 = vsel %vm1863, %v1927, %v1389
        %v1992 = vsel %vm1864, %v1928, %v1396
        %v1993 = vsel %vm1865, %v1929, %v1403
        %v1994 = vsel %vm1866, %v1930, %v1410
        %v1995 = vsel %vm1867, %v1931, %v1417
        %v1996 = vsel %vm1868, %v1932, %v1424
        %v1997 = vsel %vm1869, %v1933, %v1431
        %v1998 = vsel %vm1870, %v1934, %v1438
        %v1999 = vsel %vm1871, %v1935, %v1445
        %v2000 = vsel %vm1872, %v1936, %v1452
        %v2001 = vsel %vm1873, %v1937, %v1459
        %v2002 = vsel %vm1874, %v1938, %v1466
        %v2003 = vsel %vm1875, %v1939, %v1473
        %v2004 = vsel %vm1876, %v1940, %v1480
        %v2005 = vsel %vm1877, %v1941, %v1487
        %v2006 = vsel %vm1878, %v1942, %v1494
        %v2007 = vsel %vm1879, %v1943, %v1501
        %v2008 = vsel %vm1880, %v1944, %v1508
        %v2009 = vsel %vm1881, %v1945, %v1515
        %v2010 = vsel %vm1882, %v1946, %v1522
        %v2011 = vsel %vm1883, %v1947, %v1529
        %v2012 = vsel %vm1884, %v1948, %v1536
        %v2013 = vsel %vm1885, %v1949, %v1543
        %v2014 = vsel %vm1886, %v1950, %v1550
        %v2015 = vsel %vm1887, %v1951, %v1557
        %v2016 = vsel %vm1888, %v1952, %v1564
        %v2017 = vsel %vm1889, %v1953, %v1571
        %v2018 = vsel %vm1890, %v1954, %v1578
        %v2019 = vsel %vm1891, %v1955, %v1585
        %v2020 = vsel %vm1892, %v1956, %v1592
        %v2021 = vsel %vm1893, %v1957, %v1599
        %v2022 = vsel %vm1894, %v1958, %v1606
        %v2023 = vsel %vm1895, %v1959, %v1613
        %v2024 = vsel %vm1896, %v1960, %v1620
        %v2025 = vsel %vm1897, %v1961, %v1627
        %v2026 = vsel %vm1898, %v1962, %v1634
        %v2027 = vsel %vm1899, %v1963, %v1641
        %v2028 = vsel %vm1900, %v1964, %v1648
        %v2029 = vsel %vm1901, %v1965, %v1655
        %v2030 = vsel %vm1902, %v1966, %v1662
        %v2031 = vsel %vm1903, %v1967, %v1669
        %v2032 = vsel %vm1904, %v1968, %v1676
        %v2033 = vsel %vm1905, %v1969, %v1683
        %v2034 = vsel %vm1906, %v1970, %v1690
        %v2035 = vsel %vm1907, %v1971, %v1697
        %v2036 = vsel %vm1908, %v1972, %v1704
        %v2037 = vsel %vm1909, %v1973, %v1711
        %v2038 = vsel %vm1910, %v1974, %v1718
        %vm2039 = vcmp.ne.s32.totalorder %v1975, 0
        %vm2040 = vcmp.ne.s32.totalorder %v1976, 0
        %vm2041 = vcmp.ne.s32.totalorder %v1977, 0
        %vm2042 = vcmp.ne.s32.totalorder %v1978, 0
        %vm2043 = vcmp.ne.s32.totalorder %v1979, 0
        %vm2044 = vcmp.ne.s32.totalorder %v1980, 0
        %vm2045 = vcmp.ne.s32.totalorder %v1981, 0
        %vm2046 = vcmp.ne.s32.totalorder %v1982, 0
        %vm2047 = vcmp.ne.s32.totalorder %v1983, 0
        %vm2048 = vcmp.ne.s32.totalorder %v1984, 0
        %vm2049 = vcmp.ne.s32.totalorder %v1985, 0
        %vm2050 = vcmp.ne.s32.totalorder %v1986, 0
        %vm2051 = vcmp.ne.s32.totalorder %v1987, 0
        %vm2052 = vcmp.ne.s32.totalorder %v1988, 0
        %vm2053 = vcmp.ne.s32.totalorder %v1989, 0
        %vm2054 = vcmp.ne.s32.totalorder %v1990, 0
        %vm2055 = vcmp.ne.s32.totalorder %v1991, 0
        %vm2056 = vcmp.ne.s32.totalorder %v1992, 0
        %vm2057 = vcmp.ne.s32.totalorder %v1993, 0
        %vm2058 = vcmp.ne.s32.totalorder %v1994, 0
        %vm2059 = vcmp.ne.s32.totalorder %v1995, 0
        %vm2060 = vcmp.ne.s32.totalorder %v1996, 0
        %vm2061 = vcmp.ne.s32.totalorder %v1997, 0
        %vm2062 = vcmp.ne.s32.totalorder %v1998, 0
        %vm2063 = vcmp.ne.s32.totalorder %v1999, 0
        %vm2064 = vcmp.ne.s32.totalorder %v2000, 0
        %vm2065 = vcmp.ne.s32.totalorder %v2001, 0
        %vm2066 = vcmp.ne.s32.totalorder %v2002, 0
        %vm2067 = vcmp.ne.s32.totalorder %v2003, 0
        %vm2068 = vcmp.ne.s32.totalorder %v2004, 0
        %vm2069 = vcmp.ne.s32.totalorder %v2005, 0
        %vm2070 = vcmp.ne.s32.totalorder %v2006, 0
        %vm2071 = vcmp.ne.s32.totalorder %v2007, 0
        %vm2072 = vcmp.ne.s32.totalorder %v2008, 0
        %vm2073 = vcmp.ne.s32.totalorder %v2009, 0
        %vm2074 = vcmp.ne.s32.totalorder %v2010, 0
        %vm2075 = vcmp.ne.s32.totalorder %v2011, 0
        %vm2076 = vcmp.ne.s32.totalorder %v2012, 0
        %vm2077 = vcmp.ne.s32.totalorder %v2013, 0
        %vm2078 = vcmp.ne.s32.totalorder %v2014, 0
        %vm2079 = vcmp.ne.s32.totalorder %v2015, 0
        %vm2080 = vcmp.ne.s32.totalorder %v2016, 0
        %vm2081 = vcmp.ne.s32.totalorder %v2017, 0
        %vm2082 = vcmp.ne.s32.totalorder %v2018, 0
        %vm2083 = vcmp.ne.s32.totalorder %v2019, 0
        %vm2084 = vcmp.ne.s32.totalorder %v2020, 0
        %vm2085 = vcmp.ne.s32.totalorder %v2021, 0
        %vm2086 = vcmp.ne.s32.totalorder %v2022, 0
        %vm2087 = vcmp.ne.s32.totalorder %v2023, 0
        %vm2088 = vcmp.ne.s32.totalorder %v2024, 0
        %vm2089 = vcmp.ne.s32.totalorder %v2025, 0
        %vm2090 = vcmp.ne.s32.totalorder %v2026, 0
        %vm2091 = vcmp.ne.s32.totalorder %v2027, 0
        %vm2092 = vcmp.ne.s32.totalorder %v2028, 0
        %vm2093 = vcmp.ne.s32.totalorder %v2029, 0
        %vm2094 = vcmp.ne.s32.totalorder %v2030, 0
        %vm2095 = vcmp.ne.s32.totalorder %v2031, 0
        %vm2096 = vcmp.ne.s32.totalorder %v2032, 0
        %vm2097 = vcmp.ne.s32.totalorder %v2033, 0
        %vm2098 = vcmp.ne.s32.totalorder %v2034, 0
        %vm2099 = vcmp.ne.s32.totalorder %v2035, 0
        %vm2100 = vcmp.ne.s32.totalorder %v2036, 0
        %vm2101 = vcmp.ne.s32.totalorder %v2037, 0
        %vm2102 = vcmp.ne.s32.totalorder %v2038, 0
        %v2103 = vrot.slane %v439, 7
        %v2104 = vrot.slane %v445, 7
        %v2105 = vrot.slane %v451, 7
        %v2106 = vrot.slane %v457, 7
        %v2107 = vrot.slane %v463, 7
        %v2108 = vrot.slane %v469, 7
        %v2109 = vrot.slane %v475, 7
        %v2110 = vrot.slane %v481, 7
        %v2111 = vrot.slane %v487, 7
        %v2112 = vrot.slane %v493, 7
        %v2113 = vrot.slane %v499, 7
        %v2114 = vrot.slane %v505, 7
        %v2115 = vrot.slane %v511, 7
        %v2116 = vrot.slane %v517, 7
        %v2117 = vrot.slane %v523, 7
        %v2118 = vrot.slane %v529, 7
        %v2119 = vrot.slane %v535, 7
        %v2120 = vrot.slane %v541, 7
        %v2121 = vrot.slane %v547, 7
        %v2122 = vrot.slane %v553, 7
        %v2123 = vrot.slane %v559, 7
        %v2124 = vrot.slane %v565, 7
        %v2125 = vrot.slane %v571, 7
        %v2126 = vrot.slane %v577, 7
        %v2127 = vrot.slane %v583, 7
        %v2128 = vrot.slane %v589, 7
        %v2129 = vrot.slane %v595, 7
        %v2130 = vrot.slane %v601, 7
        %v2131 = vrot.slane %v607, 7
        %v2132 = vrot.slane %v613, 7
        %v2133 = vrot.slane %v619, 7
        %v2134 = vrot.slane %v625, 7
        %v2135 = vrot.slane %v631, 7
        %v2136 = vrot.slane %v637, 7
        %v2137 = vrot.slane %v643, 7
        %v2138 = vrot.slane %v649, 7
        %v2139 = vrot.slane %v655, 7
        %v2140 = vrot.slane %v661, 7
        %v2141 = vrot.slane %v667, 7
        %v2142 = vrot.slane %v673, 7
        %v2143 = vrot.slane %v679, 7
        %v2144 = vrot.slane %v685, 7
        %v2145 = vrot.slane %v691, 7
        %v2146 = vrot.slane %v697, 7
        %v2147 = vrot.slane %v703, 7
        %v2148 = vrot.slane %v709, 7
        %v2149 = vrot.slane %v715, 7
        %v2150 = vrot.slane %v721, 7
        %v2151 = vrot.slane %v727, 7
        %v2152 = vrot.slane %v733, 7
        %v2153 = vrot.slane %v739, 7
        %v2154 = vrot.slane %v745, 7
        %v2155 = vrot.slane %v751, 7
        %v2156 = vrot.slane %v757, 7
        %v2157 = vrot.slane %v763, 7
        %v2158 = vrot.slane %v769, 7
        %v2159 = vrot.slane %v775, 7
        %v2160 = vrot.slane %v781, 7
        %v2161 = vrot.slane %v787, 7
        %v2162 = vrot.slane %v793, 7
        %v2163 = vrot.slane %v799, 7
        %v2164 = vrot.slane %v805, 7
        %v2165 = vrot.slane %v811, 7
        %v2166 = vrot.slane %v817, 7
        %vm2167 = vcmp.lt.s32.totalorder %v1207, 1
        %v2168 = vsel %vm2167, %v2165, %v2166
        %v2169 = vsel %vm2167, %v2164, %v2165
        %v2170 = vsel %vm2167, %v2163, %v2164
        %v2171 = vsel %vm2167, %v2162, %v2163
        %v2172 = vsel %vm2167, %v2161, %v2162
        %v2173 = vsel %vm2167, %v2160, %v2161
        %v2174 = vsel %vm2167, %v2159, %v2160
        %v2175 = vsel %vm2167, %v2158, %v2159
        %v2176 = vsel %vm2167, %v2157, %v2158
        %v2177 = vsel %vm2167, %v2156, %v2157
        %v2178 = vsel %vm2167, %v2155, %v2156
        %v2179 = vsel %vm2167, %v2154, %v2155
        %v2180 = vsel %vm2167, %v2153, %v2154
        %v2181 = vsel %vm2167, %v2152, %v2153
        %v2182 = vsel %vm2167, %v2151, %v2152
        %v2183 = vsel %vm2167, %v2150, %v2151
        %v2184 = vsel %vm2167, %v2149, %v2150
        %v2185 = vsel %vm2167, %v2148, %v2149
        %v2186 = vsel %vm2167, %v2147, %v2148
        %v2187 = vsel %vm2167, %v2146, %v2147
        %v2188 = vsel %vm2167, %v2145, %v2146
        %v2189 = vsel %vm2167, %v2144, %v2145
        %v2190 = vsel %vm2167, %v2143, %v2144
        %v2191 = vsel %vm2167, %v2142, %v2143
        %v2192 = vsel %vm2167, %v2141, %v2142
        %v2193 = vsel %vm2167, %v2140, %v2141
        %v2194 = vsel %vm2167, %v2139, %v2140
        %v2195 = vsel %vm2167, %v2138, %v2139
        %v2196 = vsel %vm2167, %v2137, %v2138
        %v2197 = vsel %vm2167, %v2136, %v2137
        %v2198 = vsel %vm2167, %v2135, %v2136
        %v2199 = vsel %vm2167, %v2134, %v2135
        %v2200 = vsel %vm2167, %v2133, %v2134
        %v2201 = vsel %vm2167, %v2132, %v2133
        %v2202 = vsel %vm2167, %v2131, %v2132
        %v2203 = vsel %vm2167, %v2130, %v2131
        %v2204 = vsel %vm2167, %v2129, %v2130
        %v2205 = vsel %vm2167, %v2128, %v2129
        %v2206 = vsel %vm2167, %v2127, %v2128
        %v2207 = vsel %vm2167, %v2126, %v2127
        %v2208 = vsel %vm2167, %v2125, %v2126
        %v2209 = vsel %vm2167, %v2124, %v2125
        %v2210 = vsel %vm2167, %v2123, %v2124
        %v2211 = vsel %vm2167, %v2122, %v2123
        %v2212 = vsel %vm2167, %v2121, %v2122
        %v2213 = vsel %vm2167, %v2120, %v2121
        %v2214 = vsel %vm2167, %v2119, %v2120
        %v2215 = vsel %vm2167, %v2118, %v2119
        %v2216 = vsel %vm2167, %v2117, %v2118
        %v2217 = vsel %vm2167, %v2116, %v2117
        %v2218 = vsel %vm2167, %v2115, %v2116
        %v2219 = vsel %vm2167, %v2114, %v2115
        %v2220 = vsel %vm2167, %v2113, %v2114
        %v2221 = vsel %vm2167, %v2112, %v2113
        %v2222 = vsel %vm2167, %v2111, %v2112
        %v2223 = vsel %vm2167, %v2110, %v2111
        %v2224 = vsel %vm2167, %v2109, %v2110
        %v2225 = vsel %vm2167, %v2108, %v2109
        %v2226 = vsel %vm2167, %v2107, %v2108
        %v2227 = vsel %vm2167, %v2106, %v2107
        %v2228 = vsel %vm2167, %v2105, %v2106
        %v2229 = vsel %vm2167, %v2104, %v2105
        %v2230 = vsel %vm2167, %v2103, %v2104
        %v2231 = vsel %vm2167, %v2166, %v2103
        %v2232 = vsel %vm2039, %v2231, 0.0
        %v2233 = vsel %vm2040, %v2230, 0.0
        %v2234 = vsel %vm2041, %v2229, 0.0
        %v2235 = vsel %vm2042, %v2228, 0.0
        %v2236 = vsel %vm2043, %v2227, 0.0
        %v2237 = vsel %vm2044, %v2226, 0.0
        %v2238 = vsel %vm2045, %v2225, 0.0
        %v2239 = vsel %vm2046, %v2224, 0.0
        %v2240 = vsel %vm2047, %v2223, 0.0
        %v2241 = vsel %vm2048, %v2222, 0.0
        %v2242 = vsel %vm2049, %v2221, 0.0
        %v2243 = vsel %vm2050, %v2220, 0.0
        %v2244 = vsel %vm2051, %v2219, 0.0
        %v2245 = vsel %vm2052, %v2218, 0.0
        %v2246 = vsel %vm2053, %v2217, 0.0
        %v2247 = vsel %vm2054, %v2216, 0.0
        %v2248 = vsel %vm2055, %v2215, 0.0
        %v2249 = vsel %vm2056, %v2214, 0.0
        %v2250 = vsel %vm2057, %v2213, 0.0
        %v2251 = vsel %vm2058, %v2212, 0.0
        %v2252 = vsel %vm2059, %v2211, 0.0
        %v2253 = vsel %vm2060, %v2210, 0.0
        %v2254 = vsel %vm2061, %v2209, 0.0
        %v2255 = vsel %vm2062, %v2208, 0.0
        %v2256 = vsel %vm2063, %v2207, 0.0
        %v2257 = vsel %vm2064, %v2206, 0.0
        %v2258 = vsel %vm2065, %v2205, 0.0
        %v2259 = vsel %vm2066, %v2204, 0.0
        %v2260 = vsel %vm2067, %v2203, 0.0
        %v2261 = vsel %vm2068, %v2202, 0.0
        %v2262 = vsel %vm2069, %v2201, 0.0
        %v2263 = vsel %vm2070, %v2200, 0.0
        %v2264 = vsel %vm2071, %v2199, 0.0
        %v2265 = vsel %vm2072, %v2198, 0.0
        %v2266 = vsel %vm2073, %v2197, 0.0
        %v2267 = vsel %vm2074, %v2196, 0.0
        %v2268 = vsel %vm2075, %v2195, 0.0
        %v2269 = vsel %vm2076, %v2194, 0.0
        %v2270 = vsel %vm2077, %v2193, 0.0
        %v2271 = vsel %vm2078, %v2192, 0.0
        %v2272 = vsel %vm2079, %v2191, 0.0
        %v2273 = vsel %vm2080, %v2190, 0.0
        %v2274 = vsel %vm2081, %v2189, 0.0
        %v2275 = vsel %vm2082, %v2188, 0.0
        %v2276 = vsel %vm2083, %v2187, 0.0
        %v2277 = vsel %vm2084, %v2186, 0.0
        %v2278 = vsel %vm2085, %v2185, 0.0
        %v2279 = vsel %vm2086, %v2184, 0.0
        %v2280 = vsel %vm2087, %v2183, 0.0
        %v2281 = vsel %vm2088, %v2182, 0.0
        %v2282 = vsel %vm2089, %v2181, 0.0
        %v2283 = vsel %vm2090, %v2180, 0.0
        %v2284 = vsel %vm2091, %v2179, 0.0
        %v2285 = vsel %vm2092, %v2178, 0.0
        %v2286 = vsel %vm2093, %v2177, 0.0
        %v2287 = vsel %vm2094, %v2176, 0.0
        %v2288 = vsel %vm2095, %v2175, 0.0
        %v2289 = vsel %vm2096, %v2174, 0.0
        %v2290 = vsel %vm2097, %v2173, 0.0
        %v2291 = vsel %vm2098, %v2172, 0.0
        %v2292 = vsel %vm2099, %v2171, 0.0
        %v2293 = vsel %vm2100, %v2170, 0.0
        %v2294 = vsel %vm2101, %v2169, 0.0
        %v2295 = vsel %vm2102, %v2168, 0.0
        %vm2296 = vcmp.ne.s32.totalorder %v1975, 15
        %vm2297 = vcmp.ne.s32.totalorder %v1976, 15
        %vm2298 = vcmp.ne.s32.totalorder %v1977, 15
        %vm2299 = vcmp.ne.s32.totalorder %v1978, 15
        %vm2300 = vcmp.ne.s32.totalorder %v1979, 15
        %vm2301 = vcmp.ne.s32.totalorder %v1980, 15
        %vm2302 = vcmp.ne.s32.totalorder %v1981, 15
        %vm2303 = vcmp.ne.s32.totalorder %v1982, 15
        %vm2304 = vcmp.ne.s32.totalorder %v1983, 15
        %vm2305 = vcmp.ne.s32.totalorder %v1984, 15
        %vm2306 = vcmp.ne.s32.totalorder %v1985, 15
        %vm2307 = vcmp.ne.s32.totalorder %v1986, 15
        %vm2308 = vcmp.ne.s32.totalorder %v1987, 15
        %vm2309 = vcmp.ne.s32.totalorder %v1988, 15
        %vm2310 = vcmp.ne.s32.totalorder %v1989, 15
        %vm2311 = vcmp.ne.s32.totalorder %v1990, 15
        %vm2312 = vcmp.ne.s32.totalorder %v1991, 15
        %vm2313 = vcmp.ne.s32.totalorder %v1992, 15
        %vm2314 = vcmp.ne.s32.totalorder %v1993, 15
        %vm2315 = vcmp.ne.s32.totalorder %v1994, 15
        %vm2316 = vcmp.ne.s32.totalorder %v1995, 15
        %vm2317 = vcmp.ne.s32.totalorder %v1996, 15
        %vm2318 = vcmp.ne.s32.totalorder %v1997, 15
        %vm2319 = vcmp.ne.s32.totalorder %v1998, 15
        %vm2320 = vcmp.ne.s32.totalorder %v1999, 15
        %vm2321 = vcmp.ne.s32.totalorder %v2000, 15
        %vm2322 = vcmp.ne.s32.totalorder %v2001, 15
        %vm2323 = vcmp.ne.s32.totalorder %v2002, 15
        %vm2324 = vcmp.ne.s32.totalorder %v2003, 15
        %vm2325 = vcmp.ne.s32.totalorder %v2004, 15
        %vm2326 = vcmp.ne.s32.totalorder %v2005, 15
        %vm2327 = vcmp.ne.s32.totalorder %v2006, 15
        %vm2328 = vcmp.ne.s32.totalorder %v2007, 15
        %vm2329 = vcmp.ne.s32.totalorder %v2008, 15
        %vm2330 = vcmp.ne.s32.totalorder %v2009, 15
        %vm2331 = vcmp.ne.s32.totalorder %v2010, 15
        %vm2332 = vcmp.ne.s32.totalorder %v2011, 15
        %vm2333 = vcmp.ne.s32.totalorder %v2012, 15
        %vm2334 = vcmp.ne.s32.totalorder %v2013, 15
        %vm2335 = vcmp.ne.s32.totalorder %v2014, 15
        %vm2336 = vcmp.ne.s32.totalorder %v2015, 15
        %vm2337 = vcmp.ne.s32.totalorder %v2016, 15
        %vm2338 = vcmp.ne.s32.totalorder %v2017, 15
        %vm2339 = vcmp.ne.s32.totalorder %v2018, 15
        %vm2340 = vcmp.ne.s32.totalorder %v2019, 15
        %vm2341 = vcmp.ne.s32.totalorder %v2020, 15
        %vm2342 = vcmp.ne.s32.totalorder %v2021, 15
        %vm2343 = vcmp.ne.s32.totalorder %v2022, 15
        %vm2344 = vcmp.ne.s32.totalorder %v2023, 15
        %vm2345 = vcmp.ne.s32.totalorder %v2024, 15
        %vm2346 = vcmp.ne.s32.totalorder %v2025, 15
        %vm2347 = vcmp.ne.s32.totalorder %v2026, 15
        %vm2348 = vcmp.ne.s32.totalorder %v2027, 15
        %vm2349 = vcmp.ne.s32.totalorder %v2028, 15
        %vm2350 = vcmp.ne.s32.totalorder %v2029, 15
        %vm2351 = vcmp.ne.s32.totalorder %v2030, 15
        %vm2352 = vcmp.ne.s32.totalorder %v2031, 15
        %vm2353 = vcmp.ne.s32.totalorder %v2032, 15
        %vm2354 = vcmp.ne.s32.totalorder %v2033, 15
        %vm2355 = vcmp.ne.s32.totalorder %v2034, 15
        %vm2356 = vcmp.ne.s32.totalorder %v2035, 15
        %vm2357 = vcmp.ne.s32.totalorder %v2036, 15
        %vm2358 = vcmp.ne.s32.totalorder %v2037, 15
        %vm2359 = vcmp.ne.s32.totalorder %v2038, 15
        %v2360 = vrot.slane %v888, 1
        %v2361 = vrot.slane %v893, 1
        %v2362 = vrot.slane %v898, 1
        %v2363 = vrot.slane %v903, 1
        %v2364 = vrot.slane %v908, 1
        %v2365 = vrot.slane %v913, 1
        %v2366 = vrot.slane %v918, 1
        %v2367 = vrot.slane %v923, 1
        %v2368 = vrot.slane %v928, 1
        %v2369 = vrot.slane %v933, 1
        %v2370 = vrot.slane %v938, 1
        %v2371 = vrot.slane %v943, 1
        %v2372 = vrot.slane %v948, 1
        %v2373 = vrot.slane %v953, 1
        %v2374 = vrot.slane %v958, 1
        %v2375 = vrot.slane %v963, 1
        %v2376 = vrot.slane %v968, 1
        %v2377 = vrot.slane %v973, 1
        %v2378 = vrot.slane %v978, 1
        %v2379 = vrot.slane %v983, 1
        %v2380 = vrot.slane %v988, 1
        %v2381 = vrot.slane %v993, 1
        %v2382 = vrot.slane %v998, 1
        %v2383 = vrot.slane %v1003, 1
        %v2384 = vrot.slane %v1008, 1
        %v2385 = vrot.slane %v1013, 1
        %v2386 = vrot.slane %v1018, 1
        %v2387 = vrot.slane %v1023, 1
        %v2388 = vrot.slane %v1028, 1
        %v2389 = vrot.slane %v1033, 1
        %v2390 = vrot.slane %v1038, 1
        %v2391 = vrot.slane %v1043, 1
        %v2392 = vrot.slane %v1048, 1
        %v2393 = vrot.slane %v1053, 1
        %v2394 = vrot.slane %v1058, 1
        %v2395 = vrot.slane %v1063, 1
        %v2396 = vrot.slane %v1068, 1
        %v2397 = vrot.slane %v1073, 1
        %v2398 = vrot.slane %v1078, 1
        %v2399 = vrot.slane %v1083, 1
        %v2400 = vrot.slane %v1088, 1
        %v2401 = vrot.slane %v1093, 1
        %v2402 = vrot.slane %v1098, 1
        %v2403 = vrot.slane %v1103, 1
        %v2404 = vrot.slane %v1108, 1
        %v2405 = vrot.slane %v1113, 1
        %v2406 = vrot.slane %v1118, 1
        %v2407 = vrot.slane %v1123, 1
        %v2408 = vrot.slane %v1128, 1
        %v2409 = vrot.slane %v1133, 1
        %v2410 = vrot.slane %v1138, 1
        %v2411 = vrot.slane %v1143, 1
        %v2412 = vrot.slane %v1148, 1
        %v2413 = vrot.slane %v1153, 1
        %v2414 = vrot.slane %v1158, 1
        %v2415 = vrot.slane %v1163, 1
        %v2416 = vrot.slane %v1168, 1
        %v2417 = vrot.slane %v1173, 1
        %v2418 = vrot.slane %v1178, 1
        %v2419 = vrot.slane %v1183, 1
        %v2420 = vrot.slane %v1188, 1
        %v2421 = vrot.slane %v1193, 1
        %v2422 = vrot.slane %v1198, 1
        %v2423 = vrot.slane %v1203, 1
        %vm2424 = vcmp.lt.s32.totalorder %v1207, 7
        %v2425 = vsel %vm2424, %v2422, %v2423
        %v2426 = vsel %vm2424, %v2421, %v2422
        %v2427 = vsel %vm2424, %v2420, %v2421
        %v2428 = vsel %vm2424, %v2419, %v2420
        %v2429 = vsel %vm2424, %v2418, %v2419
        %v2430 = vsel %vm2424, %v2417, %v2418
        %v2431 = vsel %vm2424, %v2416, %v2417
        %v2432 = vsel %vm2424, %v2415, %v2416
        %v2433 = vsel %vm2424, %v2414, %v2415
        %v2434 = vsel %vm2424, %v2413, %v2414
        %v2435 = vsel %vm2424, %v2412, %v2413
        %v2436 = vsel %vm2424, %v2411, %v2412
        %v2437 = vsel %vm2424, %v2410, %v2411
        %v2438 = vsel %vm2424, %v2409, %v2410
        %v2439 = vsel %vm2424, %v2408, %v2409
        %v2440 = vsel %vm2424, %v2407, %v2408
        %v2441 = vsel %vm2424, %v2406, %v2407
        %v2442 = vsel %vm2424, %v2405, %v2406
        %v2443 = vsel %vm2424, %v2404, %v2405
        %v2444 = vsel %vm2424, %v2403, %v2404
        %v2445 = vsel %vm2424, %v2402, %v2403
        %v2446 = vsel %vm2424, %v2401, %v2402
        %v2447 = vsel %vm2424, %v2400, %v2401
        %v2448 = vsel %vm2424, %v2399, %v2400
        %v2449 = vsel %vm2424, %v2398, %v2399
        %v2450 = vsel %vm2424, %v2397, %v2398
        %v2451 = vsel %vm2424, %v2396, %v2397
        %v2452 = vsel %vm2424, %v2395, %v2396
        %v2453 = vsel %vm2424, %v2394, %v2395
        %v2454 = vsel %vm2424, %v2393, %v2394
        %v2455 = vsel %vm2424, %v2392, %v2393
        %v2456 = vsel %vm2424, %v2391, %v2392
        %v2457 = vsel %vm2424, %v2390, %v2391
        %v2458 = vsel %vm2424, %v2389, %v2390
        %v2459 = vsel %vm2424, %v2388, %v2389
        %v2460 = vsel %vm2424, %v2387, %v2388
        %v2461 = vsel %vm2424, %v2386, %v2387
        %v2462 = vsel %vm2424, %v2385, %v2386
        %v2463 = vsel %vm2424, %v2384, %v2385
        %v2464 = vsel %vm2424, %v2383, %v2384
        %v2465 = vsel %vm2424, %v2382, %v2383
        %v2466 = vsel %vm2424, %v2381, %v2382
        %v2467 = vsel %vm2424, %v2380, %v2381
        %v2468 = vsel %vm2424, %v2379, %v2380
        %v2469 = vsel %vm2424, %v2378, %v2379
        %v2470 = vsel %vm2424, %v2377, %v2378
        %v2471 = vsel %vm2424, %v2376, %v2377
        %v2472 = vsel %vm2424, %v2375, %v2376
        %v2473 = vsel %vm2424, %v2374, %v2375
        %v2474 = vsel %vm2424, %v2373, %v2374
        %v2475 = vsel %vm2424, %v2372, %v2373
        %v2476 = vsel %vm2424, %v2371, %v2372
        %v2477 = vsel %vm2424, %v2370, %v2371
        %v2478 = vsel %vm2424, %v2369, %v2370
        %v2479 = vsel %vm2424, %v2368, %v2369
        %v2480 = vsel %vm2424, %v2367, %v2368
        %v2481 = vsel %vm2424, %v2366, %v2367
        %v2482 = vsel %vm2424, %v2365, %v2366
        %v2483 = vsel %vm2424, %v2364, %v2365
        %v2484 = vsel %vm2424, %v2363, %v2364
        %v2485 = vsel %vm2424, %v2362, %v2363
        %v2486 = vsel %vm2424, %v2361, %v2362
        %v2487 = vsel %vm2424, %v2360, %v2361
        %v2488 = vsel %vm2424, %v2423, %v2360
        %v2489 = vsel %vm2296, %v2487, 0.0
        %v2490 = vsel %vm2297, %v2486, 0.0
        %v2491 = vsel %vm2298, %v2485, 0.0
        %v2492 = vsel %vm2299, %v2484, 0.0
        %v2493 = vsel %vm2300, %v2483, 0.0
        %v2494 = vsel %vm2301, %v2482, 0.0
        %v2495 = vsel %vm2302, %v2481, 0.0
        %v2496 = vsel %vm2303, %v2480, 0.0
        %v2497 = vsel %vm2304, %v2479, 0.0
        %v2498 = vsel %vm2305, %v2478, 0.0
        %v2499 = vsel %vm2306, %v2477, 0.0
        %v2500 = vsel %vm2307, %v2476, 0.0
        %v2501 = vsel %vm2308, %v2475, 0.0
        %v2502 = vsel %vm2309, %v2474, 0.0
        %v2503 = vsel %vm2310, %v2473, 0.0
        %v2504 = vsel %vm2311, %v2472, 0.0
        %v2505 = vsel %vm2312, %v2471, 0.0
        %v2506 = vsel %vm2313, %v2470, 0.0
        %v2507 = vsel %vm2314, %v2469, 0.0
        %v2508 = vsel %vm2315, %v2468, 0.0
        %v2509 = vsel %vm2316, %v2467, 0.0
        %v2510 = vsel %vm2317, %v2466, 0.0
        %v2511 = vsel %vm2318, %v2465, 0.0
        %v2512 = vsel %vm2319, %v2464, 0.0
        %v2513 = vsel %vm2320, %v2463, 0.0
        %v2514 = vsel %vm2321, %v2462, 0.0
        %v2515 = vsel %vm2322, %v2461, 0.0
        %v2516 = vsel %vm2323, %v2460, 0.0
        %v2517 = vsel %vm2324, %v2459, 0.0
        %v2518 = vsel %vm2325, %v2458, 0.0
        %v2519 = vsel %vm2326, %v2457, 0.0
        %v2520 = vsel %vm2327, %v2456, 0.0
        %v2521 = vsel %vm2328, %v2455, 0.0
        %v2522 = vsel %vm2329, %v2454, 0.0
        %v2523 = vsel %vm2330, %v2453, 0.0
        %v2524 = vsel %vm2331, %v2452, 0.0
        %v2525 = vsel %vm2332, %v2451, 0.0
        %v2526 = vsel %vm2333, %v2450, 0.0
        %v2527 = vsel %vm2334, %v2449, 0.0
        %v2528 = vsel %vm2335, %v2448, 0.0
        %v2529 = vsel %vm2336, %v2447, 0.0
        %v2530 = vsel %vm2337, %v2446, 0.0
        %v2531 = vsel %vm2338, %v2445, 0.0
        %v2532 = vsel %vm2339, %v2444, 0.0
        %v2533 = vsel %vm2340, %v2443, 0.0
        %v2534 = vsel %vm2341, %v2442, 0.0
        %v2535 = vsel %vm2342, %v2441, 0.0
        %v2536 = vsel %vm2343, %v2440, 0.0
        %v2537 = vsel %vm2344, %v2439, 0.0
        %v2538 = vsel %vm2345, %v2438, 0.0
        %v2539 = vsel %vm2346, %v2437, 0.0
        %v2540 = vsel %vm2347, %v2436, 0.0
        %v2541 = vsel %vm2348, %v2435, 0.0
        %v2542 = vsel %vm2349, %v2434, 0.0
        %v2543 = vsel %vm2350, %v2433, 0.0
        %v2544 = vsel %vm2351, %v2432, 0.0
        %v2545 = vsel %vm2352, %v2431, 0.0
        %v2546 = vsel %vm2353, %v2430, 0.0
        %v2547 = vsel %vm2354, %v2429, 0.0
        %v2548 = vsel %vm2355, %v2428, 0.0
        %v2549 = vsel %vm2356, %v2427, 0.0
        %v2550 = vsel %vm2357, %v2426, 0.0
        %v2551 = vsel %vm2358, %v2425, 0.0
        %v2552 = vsel %vm2359, %v2488, 0.0
        %v2553 = vadd.f32 %v2232, %v441
        %v2554 = vadd.f32 %v2233, %v447
        %v2555 = vadd.f32 %v2234, %v453
        %v2556 = vadd.f32 %v2235, %v459
        %v2557 = vadd.f32 %v2236, %v465
        %v2558 = vadd.f32 %v2237, %v471
        %v2559 = vadd.f32 %v2238, %v477
        %v2560 = vadd.f32 %v2239, %v483
        %v2561 = vadd.f32 %v2240, %v489
        %v2562 = vadd.f32 %v2241, %v495
        %v2563 = vadd.f32 %v2242, %v501
        %v2564 = vadd.f32 %v2243, %v507
        %v2565 = vadd.f32 %v2244, %v513
        %v2566 = vadd.f32 %v2245, %v519
        %v2567 = vadd.f32 %v2246, %v525
        %v2568 = vadd.f32 %v2247, %v531
        %v2569 = vadd.f32 %v2248, %v537
        %v2570 = vadd.f32 %v2249, %v543
        %v2571 = vadd.f32 %v2250, %v549
        %v2572 = vadd.f32 %v2251, %v555
        %v2573 = vadd.f32 %v2252, %v561
        %v2574 = vadd.f32 %v2253, %v567
        %v2575 = vadd.f32 %v2254, %v573
        %v2576 = vadd.f32 %v2255, %v579
        %v2577 = vadd.f32 %v2256, %v585
        %v2578 = vadd.f32 %v2257, %v591
        %v2579 = vadd.f32 %v2258, %v597
        %v2580 = vadd.f32 %v2259, %v603
        %v2581 = vadd.f32 %v2260, %v609
        %v2582 = vadd.f32 %v2261, %v615
        %v2583 = vadd.f32 %v2262, %v621
        %v2584 = vadd.f32 %v2263, %v627
        %v2585 = vadd.f32 %v2264, %v633
        %v2586 = vadd.f32 %v2265, %v639
        %v2587 = vadd.f32 %v2266, %v645
        %v2588 = vadd.f32 %v2267, %v651
        %v2589 = vadd.f32 %v2268, %v657
        %v2590 = vadd.f32 %v2269, %v663
        %v2591 = vadd.f32 %v2270, %v669
        %v2592 = vadd.f32 %v2271, %v675
        %v2593 = vadd.f32 %v2272, %v681
        %v2594 = vadd.f32 %v2273, %v687
        %v2595 = vadd.f32 %v2274, %v693
        %v2596 = vadd.f32 %v2275, %v699
        %v2597 = vadd.f32 %v2276, %v705
        %v2598 = vadd.f32 %v2277, %v711
        %v2599 = vadd.f32 %v2278, %v717
        %v2600 = vadd.f32 %v2279, %v723
        %v2601 = vadd.f32 %v2280, %v729
        %v2602 = vadd.f32 %v2281, %v735
        %v2603 = vadd.f32 %v2282, %v741
        %v2604 = vadd.f32 %v2283, %v747
        %v2605 = vadd.f32 %v2284, %v753
        %v2606 = vadd.f32 %v2285, %v759
        %v2607 = vadd.f32 %v2286, %v765
        %v2608 = vadd.f32 %v2287, %v771
        %v2609 = vadd.f32 %v2288, %v777
        %v2610 = vadd.f32 %v2289, %v783
        %v2611 = vadd.f32 %v2290, %v789
        %v2612 = vadd.f32 %v2291, %v795
        %v2613 = vadd.f32 %v2292, %v801
        %v2614 = vadd.f32 %v2293, %v807
        %v2615 = vadd.f32 %v2294, %v813
        %v2616 = vadd.f32 %v2295, %v819
        %v2617 = vadd.f32 %v2553, %v2489
        %v2618 = vadd.f32 %v2554, %v2490
        %v2619 = vadd.f32 %v2555, %v2491
        %v2620 = vadd.f32 %v2556, %v2492
        %v2621 = vadd.f32 %v2557, %v2493
        %v2622 = vadd.f32 %v2558, %v2494
        %v2623 = vadd.f32 %v2559, %v2495
        %v2624 = vadd.f32 %v2560, %v2496
        %v2625 = vadd.f32 %v2561, %v2497
        %v2626 = vadd.f32 %v2562, %v2498
        %v2627 = vadd.f32 %v2563, %v2499
        %v2628 = vadd.f32 %v2564, %v2500
        %v2629 = vadd.f32 %v2565, %v2501
        %v2630 = vadd.f32 %v2566, %v2502
        %v2631 = vadd.f32 %v2567, %v2503
        %v2632 = vadd.f32 %v2568, %v2504
        %v2633 = vadd.f32 %v2569, %v2505
        %v2634 = vadd.f32 %v2570, %v2506
        %v2635 = vadd.f32 %v2571, %v2507
        %v2636 = vadd.f32 %v2572, %v2508
        %v2637 = vadd.f32 %v2573, %v2509
        %v2638 = vadd.f32 %v2574, %v2510
        %v2639 = vadd.f32 %v2575, %v2511
        %v2640 = vadd.f32 %v2576, %v2512
        %v2641 = vadd.f32 %v2577, %v2513
        %v2642 = vadd.f32 %v2578, %v2514
        %v2643 = vadd.f32 %v2579, %v2515
        %v2644 = vadd.f32 %v2580, %v2516
        %v2645 = vadd.f32 %v2581, %v2517
        %v2646 = vadd.f32 %v2582, %v2518
        %v2647 = vadd.f32 %v2583, %v2519
        %v2648 = vadd.f32 %v2584, %v2520
        %v2649 = vadd.f32 %v2585, %v2521
        %v2650 = vadd.f32 %v2586, %v2522
        %v2651 = vadd.f32 %v2587, %v2523
        %v2652 = vadd.f32 %v2588, %v2524
        %v2653 = vadd.f32 %v2589, %v2525
        %v2654 = vadd.f32 %v2590, %v2526
        %v2655 = vadd.f32 %v2591, %v2527
        %v2656 = vadd.f32 %v2592, %v2528
        %v2657 = vadd.f32 %v2593, %v2529
        %v2658 = vadd.f32 %v2594, %v2530
        %v2659 = vadd.f32 %v2595, %v2531
        %v2660 = vadd.f32 %v2596, %v2532
        %v2661 = vadd.f32 %v2597, %v2533
        %v2662 = vadd.f32 %v2598, %v2534
        %v2663 = vadd.f32 %v2599, %v2535
        %v2664 = vadd.f32 %v2600, %v2536
        %v2665 = vadd.f32 %v2601, %v2537
        %v2666 = vadd.f32 %v2602, %v2538
        %v2667 = vadd.f32 %v2603, %v2539
        %v2668 = vadd.f32 %v2604, %v2540
        %v2669 = vadd.f32 %v2605, %v2541
        %v2670 = vadd.f32 %v2606, %v2542
        %v2671 = vadd.f32 %v2607, %v2543
        %v2672 = vadd.f32 %v2608, %v2544
        %v2673 = vadd.f32 %v2609, %v2545
        %v2674 = vadd.f32 %v2610, %v2546
        %v2675 = vadd.f32 %v2611, %v2547
        %v2676 = vadd.f32 %v2612, %v2548
        %v2677 = vadd.f32 %v2613, %v2549
        %v2678 = vadd.f32 %v2614, %v2550
        %v2679 = vadd.f32 %v2615, %v2551
        %v2680 = vadd.f32 %v2616, %v2552
        %v2681 = vld [vmem:[%s3] sm:$0x1]
        %v2683 = vlaneseq
        %v2684 = vshrl.u32 %v2683, 7
        %v2685 = vsub.s32 0, %v2684
        %v2686 = vrot.slane %v2681, %v2685
        %v2688 = vadd.f32 %v2617, %v2686
        %v2689 = vadd.f32 %v2618, %v2686
        %v2690 = vadd.f32 %v2619, %v2686
        %v2691 = vadd.f32 %v2620, %v2686
        %v2692 = vadd.f32 %v2621, %v2686
        %v2693 = vadd.f32 %v2622, %v2686
        %v2694 = vadd.f32 %v2623, %v2686
        %v2695 = vadd.f32 %v2624, %v2686
        %v2696 = vadd.f32 %v2625, %v2686
        %v2697 = vadd.f32 %v2626, %v2686
        %v2698 = vadd.f32 %v2627, %v2686
        %v2699 = vadd.f32 %v2628, %v2686
        %v2700 = vadd.f32 %v2629, %v2686
        %v2701 = vadd.f32 %v2630, %v2686
        %v2702 = vadd.f32 %v2631, %v2686
        %v2703 = vadd.f32 %v2632, %v2686
        %v2704 = vadd.f32 %v2633, %v2686
        %v2705 = vadd.f32 %v2634, %v2686
        %v2706 = vadd.f32 %v2635, %v2686
        %v2707 = vadd.f32 %v2636, %v2686
        %v2708 = vadd.f32 %v2637, %v2686
        %v2709 = vadd.f32 %v2638, %v2686
        %v2710 = vadd.f32 %v2639, %v2686
        %v2711 = vadd.f32 %v2640, %v2686
        %v2712 = vadd.f32 %v2641, %v2686
        %v2713 = vadd.f32 %v2642, %v2686
        %v2714 = vadd.f32 %v2643, %v2686
        %v2715 = vadd.f32 %v2644, %v2686
        %v2716 = vadd.f32 %v2645, %v2686
        %v2717 = vadd.f32 %v2646, %v2686
        %v2718 = vadd.f32 %v2647, %v2686
        %v2719 = vadd.f32 %v2648, %v2686
        %v2720 = vadd.f32 %v2649, %v2686
        %v2721 = vadd.f32 %v2650, %v2686
        %v2722 = vadd.f32 %v2651, %v2686
        %v2723 = vadd.f32 %v2652, %v2686
        %v2724 = vadd.f32 %v2653, %v2686
        %v2725 = vadd.f32 %v2654, %v2686
        %v2726 = vadd.f32 %v2655, %v2686
        %v2727 = vadd.f32 %v2656, %v2686
        %v2728 = vadd.f32 %v2657, %v2686
        %v2729 = vadd.f32 %v2658, %v2686
        %v2730 = vadd.f32 %v2659, %v2686
        %v2731 = vadd.f32 %v2660, %v2686
        %v2732 = vadd.f32 %v2661, %v2686
        %v2733 = vadd.f32 %v2662, %v2686
        %v2734 = vadd.f32 %v2663, %v2686
        %v2735 = vadd.f32 %v2664, %v2686
        %v2736 = vadd.f32 %v2665, %v2686
        %v2737 = vadd.f32 %v2666, %v2686
        %v2738 = vadd.f32 %v2667, %v2686
        %v2739 = vadd.f32 %v2668, %v2686
        %v2740 = vadd.f32 %v2669, %v2686
        %v2741 = vadd.f32 %v2670, %v2686
        %v2742 = vadd.f32 %v2671, %v2686
        %v2743 = vadd.f32 %v2672, %v2686
        %v2744 = vadd.f32 %v2673, %v2686
        %v2745 = vadd.f32 %v2674, %v2686
        %v2746 = vadd.f32 %v2675, %v2686
        %v2747 = vadd.f32 %v2676, %v2686
        %v2748 = vadd.f32 %v2677, %v2686
        %v2749 = vadd.f32 %v2678, %v2686
        %v2750 = vadd.f32 %v2679, %v2686
        %v2751 = vadd.f32 %v2680, %v2686
        %v2752 = vmax.f32 %v2688, 0.0
        %v2753 = vmax.f32 %v2689, 0.0
        %v2754 = vmax.f32 %v2690, 0.0
        %v2755 = vmax.f32 %v2691, 0.0
        %v2756 = vmax.f32 %v2692, 0.0
        %v2757 = vmax.f32 %v2693, 0.0
        %v2758 = vmax.f32 %v2694, 0.0
        %v2759 = vmax.f32 %v2695, 0.0
        %v2760 = vmax.f32 %v2696, 0.0
        %v2761 = vmax.f32 %v2697, 0.0
        %v2762 = vmax.f32 %v2698, 0.0
        %v2763 = vmax.f32 %v2699, 0.0
        %v2764 = vmax.f32 %v2700, 0.0
        %v2765 = vmax.f32 %v2701, 0.0
        %v2766 = vmax.f32 %v2702, 0.0
        %v2767 = vmax.f32 %v2703, 0.0
        %v2768 = vmax.f32 %v2704, 0.0
        %v2769 = vmax.f32 %v2705, 0.0
        %v2770 = vmax.f32 %v2706, 0.0
        %v2771 = vmax.f32 %v2707, 0.0
        %v2772 = vmax.f32 %v2708, 0.0
        %v2773 = vmax.f32 %v2709, 0.0
        %v2774 = vmax.f32 %v2710, 0.0
        %v2775 = vmax.f32 %v2711, 0.0
        %v2776 = vmax.f32 %v2712, 0.0
        %v2777 = vmax.f32 %v2713, 0.0
        %v2778 = vmax.f32 %v2714, 0.0
        %v2779 = vmax.f32 %v2715, 0.0
        %v2780 = vmax.f32 %v2716, 0.0
        %v2781 = vmax.f32 %v2717, 0.0
        %v2782 = vmax.f32 %v2718, 0.0
        %v2783 = vmax.f32 %v2719, 0.0
        %v2784 = vmax.f32 %v2720, 0.0
        %v2785 = vmax.f32 %v2721, 0.0
        %v2786 = vmax.f32 %v2722, 0.0
        %v2787 = vmax.f32 %v2723, 0.0
        %v2788 = vmax.f32 %v2724, 0.0
        %v2789 = vmax.f32 %v2725, 0.0
        %v2790 = vmax.f32 %v2726, 0.0
        %v2791 = vmax.f32 %v2727, 0.0
        %v2792 = vmax.f32 %v2728, 0.0
        %v2793 = vmax.f32 %v2729, 0.0
        %v2794 = vmax.f32 %v2730, 0.0
        %v2795 = vmax.f32 %v2731, 0.0
        %v2796 = vmax.f32 %v2732, 0.0
        %v2797 = vmax.f32 %v2733, 0.0
        %v2798 = vmax.f32 %v2734, 0.0
        %v2799 = vmax.f32 %v2735, 0.0
        %v2800 = vmax.f32 %v2736, 0.0
        %v2801 = vmax.f32 %v2737, 0.0
        %v2802 = vmax.f32 %v2738, 0.0
        %v2803 = vmax.f32 %v2739, 0.0
        %v2804 = vmax.f32 %v2740, 0.0
        %v2805 = vmax.f32 %v2741, 0.0
        %v2806 = vmax.f32 %v2742, 0.0
        %v2807 = vmax.f32 %v2743, 0.0
        %v2808 = vmax.f32 %v2744, 0.0
        %v2809 = vmax.f32 %v2745, 0.0
        %v2810 = vmax.f32 %v2746, 0.0
        %v2811 = vmax.f32 %v2747, 0.0
        %v2812 = vmax.f32 %v2748, 0.0
        %v2813 = vmax.f32 %v2749, 0.0
        %v2814 = vmax.f32 %v2750, 0.0
        %v2815 = vmax.f32 %v2751, 0.0
        %2816 = vst [vmem:[%s238] sm:$0xff] %v2752
        %2817 = vst [vmem:[%s238 + $0x8] sm:$0xff] %v2753
        %2818 = vst [vmem:[%s238 + $0x10] sm:$0xff] %v2754
        %2819 = vst [vmem:[%s238 + $0x18] sm:$0xff] %v2755
        %2820 = vst [vmem:[%s238 + $0x20] sm:$0xff] %v2756
        %2821 = vst [vmem:[%s238 + $0x28] sm:$0xff] %v2757
        %2822 = vst [vmem:[%s238 + $0x30] sm:$0xff] %v2758
        %2823 = vst [vmem:[%s238 + $0x38] sm:$0xff] %v2759
        %2824 = vst [vmem:[%s238 + $0x40] sm:$0xff] %v2760
        %2825 = vst [vmem:[%s238 + $0x48] sm:$0xff] %v2761
        %2826 = vst [vmem:[%s238 + $0x50] sm:$0xff] %v2762
        %2827 = vst [vmem:[%s238 + $0x58] sm:$0xff] %v2763
        %2828 = vst [vmem:[%s238 + $0x60] sm:$0xff] %v2764
        %2829 = vst [vmem:[%s238 + $0x68] sm:$0xff] %v2765
        %2830 = vst [vmem:[%s238 + $0x70] sm:$0xff] %v2766
        %2831 = vst [vmem:[%s238 + $0x78] sm:$0xff] %v2767
        %2832 = vst [vmem:[%s238 + $0x80] sm:$0xff] %v2768
        %2833 = vst [vmem:[%s238 + $0x88] sm:$0xff] %v2769
        %2834 = vst [vmem:[%s238 + $0x90] sm:$0xff] %v2770
        %2835 = vst [vmem:[%s238 + $0x98] sm:$0xff] %v2771
        %2836 = vst [vmem:[%s238 + $0xa0] sm:$0xff] %v2772
        %2837 = vst [vmem:[%s238 + $0xa8] sm:$0xff] %v2773
        %2838 = vst [vmem:[%s238 + $0xb0] sm:$0xff] %v2774
        %2839 = vst [vmem:[%s238 + $0xb8] sm:$0xff] %v2775
        %2840 = vst [vmem:[%s238 + $0xc0] sm:$0xff] %v2776
        %2841 = vst [vmem:[%s238 + $0xc8] sm:$0xff] %v2777
        %2842 = vst [vmem:[%s238 + $0xd0] sm:$0xff] %v2778
        %2843 = vst [vmem:[%s238 + $0xd8] sm:$0xff] %v2779
        %2844 = vst [vmem:[%s238 + $0xe0] sm:$0xff] %v2780
        %2845 = vst [vmem:[%s238 + $0xe8] sm:$0xff] %v2781
        %2846 = vst [vmem:[%s238 + $0xf0] sm:$0xff] %v2782
        %2847 = vst [vmem:[%s238 + $0xf8] sm:$0xff] %v2783
        %2848 = vst [vmem:[%s238 + $0x100] sm:$0xff] %v2784
        %2849 = vst [vmem:[%s238 + $0x108] sm:$0xff] %v2785
        %2850 = vst [vmem:[%s238 + $0x110] sm:$0xff] %v2786
        %2851 = vst [vmem:[%s238 + $0x118] sm:$0xff] %v2787
        %2852 = vst [vmem:[%s238 + $0x120] sm:$0xff] %v2788
        %2853 = vst [vmem:[%s238 + $0x128] sm:$0xff] %v2789
        %2854 = vst [vmem:[%s238 + $0x130] sm:$0xff] %v2790
        %2855 = vst [vmem:[%s238 + $0x138] sm:$0xff] %v2791
        %2856 = vst [vmem:[%s238 + $0x140] sm:$0xff] %v2792
        %2857 = vst [vmem:[%s238 + $0x148] sm:$0xff] %v2793
        %2858 = vst [vmem:[%s238 + $0x150] sm:$0xff] %v2794
        %2859 = vst [vmem:[%s238 + $0x158] sm:$0xff] %v2795
        %2860 = vst [vmem:[%s238 + $0x160] sm:$0xff] %v2796
        %2861 = vst [vmem:[%s238 + $0x168] sm:$0xff] %v2797
        %2862 = vst [vmem:[%s238 + $0x170] sm:$0xff] %v2798
        %2863 = vst [vmem:[%s238 + $0x178] sm:$0xff] %v2799
        %2864 = vst [vmem:[%s238 + $0x180] sm:$0xff] %v2800
        %2865 = vst [vmem:[%s238 + $0x188] sm:$0xff] %v2801
        %2866 = vst [vmem:[%s238 + $0x190] sm:$0xff] %v2802
        %2867 = vst [vmem:[%s238 + $0x198] sm:$0xff] %v2803
        %2868 = vst [vmem:[%s238 + $0x1a0] sm:$0xff] %v2804
        %2869 = vst [vmem:[%s238 + $0x1a8] sm:$0xff] %v2805
        %2870 = vst [vmem:[%s238 + $0x1b0] sm:$0xff] %v2806
        %2871 = vst [vmem:[%s238 + $0x1b8] sm:$0xff] %v2807
        %2872 = vst [vmem:[%s238 + $0x1c0] sm:$0xff] %v2808
        %2873 = vst [vmem:[%s238 + $0x1c8] sm:$0xff] %v2809
        %2874 = vst [vmem:[%s238 + $0x1d0] sm:$0xff] %v2810
        %2875 = vst [vmem:[%s238 + $0x1d8] sm:$0xff] %v2811
        %2876 = vst [vmem:[%s238 + $0x1e0] sm:$0xff] %v2812
        %2877 = vst [vmem:[%s238 + $0x1e8] sm:$0xff] %v2813
        %2878 = vst [vmem:[%s238 + $0x1f0] sm:$0xff] %v2814
        %2879 = vst [vmem:[%s238 + $0x1f8] sm:$0xff] %v2815
        %v2880 = vld [vmem:[%s256] sm:$0xff]
        %v2881 = vld [vmem:[%s256 + $0x8] sm:$0xff]
        %v2882 = vld [vmem:[%s256 + $0x10] sm:$0xff]
        %v2883 = vld [vmem:[%s256 + $0x18] sm:$0xff]
        %v2888 = vcombine.high %v2880, %v2880
        %v2890 = vunpack.c.l.s4 1966171168
        %v2891 = vunpack.c.0.s8 %v2890
        %v2892 = vlaneseq
        %v2893 = vshrl.u32 %v2892, 7
        %v2894 = vsub.s32 %v2891, %v2893
        %v2895 = vrot.slane %v2880, %v2894
        %v2897 = vunpack.c.l.s4 1966171168
        %v2898 = vunpack.c.0.s8 %v2897
        %v2899 = vlaneseq
        %v2900 = vshrl.u32 %v2899, 7
        %v2901 = vsub.s32 %v2898, %v2900
        %v2902 = vrot.slane %v2888, %v2901
        %v2903 = vcombine.high %v2895, %v2895
        %v2904 = vcombine.high %v2902, %v2902
        %v2906 = vunpack.c.l.s4 1966171168
        %v2907 = vunpack.c.0.s8 %v2906
        %v2908 = vlaneseq
        %v2909 = vshrl.u32 %v2908, 7
        %v2910 = vsub.s32 %v2907, %v2909
        %v2911 = vrot.slane %v2895, %v2910
        %v2913 = vunpack.c.l.s4 1966171168
        %v2914 = vunpack.c.0.s8 %v2913
        %v2915 = vlaneseq
        %v2916 = vshrl.u32 %v2915, 7
        %v2917 = vsub.s32 %v2914, %v2916
        %v2918 = vrot.slane %v2902, %v2917
        %v2920 = vunpack.c.l.s4 1966171168
        %v2921 = vunpack.c.0.s8 %v2920
        %v2922 = vlaneseq
        %v2923 = vshrl.u32 %v2922, 7
        %v2924 = vsub.s32 %v2921, %v2923
        %v2925 = vrot.slane %v2903, %v2924
        %v2927 = vunpack.c.l.s4 1966171168
        %v2928 = vunpack.c.0.s8 %v2927
        %v2929 = vlaneseq
        %v2930 = vshrl.u32 %v2929, 7
        %v2931 = vsub.s32 %v2928, %v2930
        %v2932 = vrot.slane %v2904, %v2931
        %v2933 = vcombine.high %v2911, %v2911
        %v2934 = vcombine.high %v2918, %v2918
        %v2935 = vcombine.high %v2925, %v2925
        %v2936 = vcombine.high %v2932, %v2932
        %v2937 = vcombine.high %v2881, %v2881
        %v2939 = vunpack.c.l.s4 1966171168
        %v2940 = vunpack.c.0.s8 %v2939
        %v2941 = vlaneseq
        %v2942 = vshrl.u32 %v2941, 7
        %v2943 = vsub.s32 %v2940, %v2942
        %v2944 = vrot.slane %v2881, %v2943
        %v2946 = vunpack.c.l.s4 1966171168
        %v2947 = vunpack.c.0.s8 %v2946
        %v2948 = vlaneseq
        %v2949 = vshrl.u32 %v2948, 7
        %v2950 = vsub.s32 %v2947, %v2949
        %v2951 = vrot.slane %v2937, %v2950
        %v2952 = vcombine.high %v2944, %v2944
        %v2953 = vcombine.high %v2951, %v2951
        %v2955 = vunpack.c.l.s4 1966171168
        %v2956 = vunpack.c.0.s8 %v2955
        %v2957 = vlaneseq
        %v2958 = vshrl.u32 %v2957, 7
        %v2959 = vsub.s32 %v2956, %v2958
        %v2960 = vrot.slane %v2944, %v2959
        %v2962 = vunpack.c.l.s4 1966171168
        %v2963 = vunpack.c.0.s8 %v2962
        %v2964 = vlaneseq
        %v2965 = vshrl.u32 %v2964, 7
        %v2966 = vsub.s32 %v2963, %v2965
        %v2967 = vrot.slane %v2951, %v2966
        %v2969 = vunpack.c.l.s4 1966171168
        %v2970 = vunpack.c.0.s8 %v2969
        %v2971 = vlaneseq
        %v2972 = vshrl.u32 %v2971, 7
        %v2973 = vsub.s32 %v2970, %v2972
        %v2974 = vrot.slane %v2952, %v2973
        %v2976 = vunpack.c.l.s4 1966171168
        %v2977 = vunpack.c.0.s8 %v2976
        %v2978 = vlaneseq
        %v2979 = vshrl.u32 %v2978, 7
        %v2980 = vsub.s32 %v2977, %v2979
        %v2981 = vrot.slane %v2953, %v2980
        %v2982 = vcombine.high %v2960, %v2960
        %v2983 = vcombine.high %v2967, %v2967
        %v2984 = vcombine.high %v2974, %v2974
        %v2985 = vcombine.high %v2981, %v2981
        %v2986 = vcombine.high %v2882, %v2882
        %v2988 = vunpack.c.l.s4 1966171168
        %v2989 = vunpack.c.0.s8 %v2988
        %v2990 = vlaneseq
        %v2991 = vshrl.u32 %v2990, 7
        %v2992 = vsub.s32 %v2989, %v2991
        %v2993 = vrot.slane %v2882, %v2992
        %v2995 = vunpack.c.l.s4 1966171168
        %v2996 = vunpack.c.0.s8 %v2995
        %v2997 = vlaneseq
        %v2998 = vshrl.u32 %v2997, 7
        %v2999 = vsub.s32 %v2996, %v2998
        %v3000 = vrot.slane %v2986, %v2999
        %v3001 = vcombine.high %v2993, %v2993
        %v3002 = vcombine.high %v3000, %v3000
        %v3004 = vunpack.c.l.s4 1966171168
        %v3005 = vunpack.c.0.s8 %v3004
        %v3006 = vlaneseq
        %v3007 = vshrl.u32 %v3006, 7
        %v3008 = vsub.s32 %v3005, %v3007
        %v3009 = vrot.slane %v2993, %v3008
        %v3011 = vunpack.c.l.s4 1966171168
        %v3012 = vunpack.c.0.s8 %v3011
        %v3013 = vlaneseq
        %v3014 = vshrl.u32 %v3013, 7
        %v3015 = vsub.s32 %v3012, %v3014
        %v3016 = vrot.slane %v3000, %v3015
        %v3018 = vunpack.c.l.s4 1966171168
        %v3019 = vunpack.c.0.s8 %v3018
        %v3020 = vlaneseq
        %v3021 = vshrl.u32 %v3020, 7
        %v3022 = vsub.s32 %v3019, %v3021
        %v3023 = vrot.slane %v3001, %v3022
        %v3025 = vunpack.c.l.s4 1966171168
        %v3026 = vunpack.c.0.s8 %v3025
        %v3027 = vlaneseq
        %v3028 = vshrl.u32 %v3027, 7
        %v3029 = vsub.s32 %v3026, %v3028
        %v3030 = vrot.slane %v3002, %v3029
        %v3031 = vcombine.high %v3009, %v3009
        %v3032 = vcombine.high %v3016, %v3016
        %v3033 = vcombine.high %v3023, %v3023
        %v3034 = vcombine.high %v3030, %v3030
        %v3035 = vcombine.high %v2883, %v2883
        %v3037 = vunpack.c.l.s4 1966171168
        %v3038 = vunpack.c.0.s8 %v3037
        %v3039 = vlaneseq
        %v3040 = vshrl.u32 %v3039, 7
        %v3041 = vsub.s32 %v3038, %v3040
        %v3042 = vrot.slane %v2883, %v3041
        %v3044 = vunpack.c.l.s4 1966171168
        %v3045 = vunpack.c.0.s8 %v3044
        %v3046 = vlaneseq
        %v3047 = vshrl.u32 %v3046, 7
        %v3048 = vsub.s32 %v3045, %v3047
        %v3049 = vrot.slane %v3035, %v3048
        %v3050 = vcombine.high %v3042, %v3042
        %v3051 = vcombine.high %v3049, %v3049
        %v3053 = vunpack.c.l.s4 1966171168
        %v3054 = vunpack.c.0.s8 %v3053
        %v3055 = vlaneseq
        %v3056 = vshrl.u32 %v3055, 7
        %v3057 = vsub.s32 %v3054, %v3056
        %v3058 = vrot.slane %v3042, %v3057
        %v3060 = vunpack.c.l.s4 1966171168
        %v3061 = vunpack.c.0.s8 %v3060
        %v3062 = vlaneseq
        %v3063 = vshrl.u32 %v3062, 7
        %v3064 = vsub.s32 %v3061, %v3063
        %v3065 = vrot.slane %v3049, %v3064
        %v3067 = vunpack.c.l.s4 1966171168
        %v3068 = vunpack.c.0.s8 %v3067
        %v3069 = vlaneseq
        %v3070 = vshrl.u32 %v3069, 7
        %v3071 = vsub.s32 %v3068, %v3070
        %v3072 = vrot.slane %v3050, %v3071
        %v3074 = vunpack.c.l.s4 1966171168
        %v3075 = vunpack.c.0.s8 %v3074
        %v3076 = vlaneseq
        %v3077 = vshrl.u32 %v3076, 7
        %v3078 = vsub.s32 %v3075, %v3077
        %v3079 = vrot.slane %v3051, %v3078
        %v3080 = vcombine.high %v3058, %v3058
        %v3081 = vcombine.high %v3065, %v3065
        %v3082 = vcombine.high %v3072, %v3072
        %v3083 = vcombine.high %v3079, %v3079
        %v3084 = vlaneseq
        %v3085 = vshrl.u32 %v3084, 7
        %v3086 = vsub.s32 0, %v3085
        %v3087 = vrot.slane %v2911, %v3086
        %v3088 = vlaneseq
        %v3089 = vshrl.u32 %v3088, 7
        %v3090 = vsub.s32 0, %v3089
        %v3091 = vrot.slane %v2925, %v3090
        %v3092 = vlaneseq
        %v3093 = vshrl.u32 %v3092, 7
        %v3094 = vsub.s32 0, %v3093
        %v3095 = vrot.slane %v2933, %v3094
        %v3096 = vlaneseq
        %v3097 = vshrl.u32 %v3096, 7
        %v3098 = vsub.s32 0, %v3097
        %v3099 = vrot.slane %v2935, %v3098
        %v3100 = vlaneseq
        %v3101 = vshrl.u32 %v3100, 7
        %v3102 = vsub.s32 0, %v3101
        %v3103 = vrot.slane %v2918, %v3102
        %v3104 = vlaneseq
        %v3105 = vshrl.u32 %v3104, 7
        %v3106 = vsub.s32 0, %v3105
        %v3107 = vrot.slane %v2932, %v3106
        %v3108 = vlaneseq
        %v3109 = vshrl.u32 %v3108, 7
        %v3110 = vsub.s32 0, %v3109
        %v3111 = vrot.slane %v2934, %v3110
        %v3112 = vlaneseq
        %v3113 = vshrl.u32 %v3112, 7
        %v3114 = vsub.s32 0, %v3113
        %v3115 = vrot.slane %v2936, %v3114
        %v3116 = vlaneseq
        %v3117 = vshrl.u32 %v3116, 7
        %v3118 = vsub.s32 0, %v3117
        %v3119 = vrot.slane %v2960, %v3118
        %v3120 = vlaneseq
        %v3121 = vshrl.u32 %v3120, 7
        %v3122 = vsub.s32 0, %v3121
        %v3123 = vrot.slane %v2974, %v3122
        %v3124 = vlaneseq
        %v3125 = vshrl.u32 %v3124, 7
        %v3126 = vsub.s32 0, %v3125
        %v3127 = vrot.slane %v2982, %v3126
        %v3128 = vlaneseq
        %v3129 = vshrl.u32 %v3128, 7
        %v3130 = vsub.s32 0, %v3129
        %v3131 = vrot.slane %v2984, %v3130
        %v3132 = vlaneseq
        %v3133 = vshrl.u32 %v3132, 7
        %v3134 = vsub.s32 0, %v3133
        %v3135 = vrot.slane %v2967, %v3134
        %v3136 = vlaneseq
        %v3137 = vshrl.u32 %v3136, 7
        %v3138 = vsub.s32 0, %v3137
        %v3139 = vrot.slane %v2981, %v3138
        %v3140 = vlaneseq
        %v3141 = vshrl.u32 %v3140, 7
        %v3142 = vsub.s32 0, %v3141
        %v3143 = vrot.slane %v2983, %v3142
        %v3144 = vlaneseq
        %v3145 = vshrl.u32 %v3144, 7
        %v3146 = vsub.s32 0, %v3145
        %v3147 = vrot.slane %v2985, %v3146
        %v3148 = vlaneseq
        %v3149 = vshrl.u32 %v3148, 7
        %v3150 = vsub.s32 0, %v3149
        %v3151 = vrot.slane %v3009, %v3150
        %v3152 = vlaneseq
        %v3153 = vshrl.u32 %v3152, 7
        %v3154 = vsub.s32 0, %v3153
        %v3155 = vrot.slane %v3023, %v3154
        %v3156 = vlaneseq
        %v3157 = vshrl.u32 %v3156, 7
        %v3158 = vsub.s32 0, %v3157
        %v3159 = vrot.slane %v3031, %v3158
        %v3160 = vlaneseq
        %v3161 = vshrl.u32 %v3160, 7
        %v3162 = vsub.s32 0, %v3161
        %v3163 = vrot.slane %v3033, %v3162
        %v3164 = vlaneseq
        %v3165 = vshrl.u32 %v3164, 7
        %v3166 = vsub.s32 0, %v3165
        %v3167 = vrot.slane %v3016, %v3166
        %v3168 = vlaneseq
        %v3169 = vshrl.u32 %v3168, 7
        %v3170 = vsub.s32 0, %v3169
        %v3171 = vrot.slane %v3030, %v3170
        %v3172 = vlaneseq
        %v3173 = vshrl.u32 %v3172, 7
        %v3174 = vsub.s32 0, %v3173
        %v3175 = vrot.slane %v3032, %v3174
        %v3176 = vlaneseq
        %v3177 = vshrl.u32 %v3176, 7
        %v3178 = vsub.s32 0, %v3177
        %v3179 = vrot.slane %v3034, %v3178
        %v3180 = vlaneseq
        %v3181 = vshrl.u32 %v3180, 7
        %v3182 = vsub.s32 0, %v3181
        %v3183 = vrot.slane %v3058, %v3182
        %v3184 = vlaneseq
        %v3185 = vshrl.u32 %v3184, 7
        %v3186 = vsub.s32 0, %v3185
        %v3187 = vrot.slane %v3072, %v3186
        %v3188 = vlaneseq
        %v3189 = vshrl.u32 %v3188, 7
        %v3190 = vsub.s32 0, %v3189
        %v3191 = vrot.slane %v3080, %v3190
        %v3192 = vlaneseq
        %v3193 = vshrl.u32 %v3192, 7
        %v3194 = vsub.s32 0, %v3193
        %v3195 = vrot.slane %v3082, %v3194
        %v3196 = vlaneseq
        %v3197 = vshrl.u32 %v3196, 7
        %v3198 = vsub.s32 0, %v3197
        %v3199 = vrot.slane %v3065, %v3198
        %v3200 = vlaneseq
        %v3201 = vshrl.u32 %v3200, 7
        %v3202 = vsub.s32 0, %v3201
        %v3203 = vrot.slane %v3079, %v3202
        %v3204 = vlaneseq
        %v3205 = vshrl.u32 %v3204, 7
        %v3206 = vsub.s32 0, %v3205
        %v3207 = vrot.slane %v3081, %v3206
        %v3208 = vlaneseq
        %v3209 = vshrl.u32 %v3208, 7
        %v3210 = vsub.s32 0, %v3209
        %v3211 = vrot.slane %v3083, %v3210
        %v3244 = vmul.f32 %v2752, %v3087
        %v3245 = vmul.f32 %v2753, %v3087
        %v3246 = vmul.f32 %v2754, %v3091
        %v3247 = vmul.f32 %v2755, %v3091
        %v3248 = vmul.f32 %v2756, %v3095
        %v3249 = vmul.f32 %v2757, %v3095
        %v3250 = vmul.f32 %v2758, %v3099
        %v3251 = vmul.f32 %v2759, %v3099
        %v3252 = vmul.f32 %v2760, %v3103
        %v3253 = vmul.f32 %v2761, %v3103
        %v3254 = vmul.f32 %v2762, %v3107
        %v3255 = vmul.f32 %v2763, %v3107
        %v3256 = vmul.f32 %v2764, %v3111
        %v3257 = vmul.f32 %v2765, %v3111
        %v3258 = vmul.f32 %v2766, %v3115
        %v3259 = vmul.f32 %v2767, %v3115
        %v3260 = vmul.f32 %v2768, %v3119
        %v3261 = vmul.f32 %v2769, %v3119
        %v3262 = vmul.f32 %v2770, %v3123
        %v3263 = vmul.f32 %v2771, %v3123
        %v3264 = vmul.f32 %v2772, %v3127
        %v3265 = vmul.f32 %v2773, %v3127
        %v3266 = vmul.f32 %v2774, %v3131
        %v3267 = vmul.f32 %v2775, %v3131
        %v3268 = vmul.f32 %v2776, %v3135
        %v3269 = vmul.f32 %v2777, %v3135
        %v3270 = vmul.f32 %v2778, %v3139
        %v3271 = vmul.f32 %v2779, %v3139
        %v3272 = vmul.f32 %v2780, %v3143
        %v3273 = vmul.f32 %v2781, %v3143
        %v3274 = vmul.f32 %v2782, %v3147
        %v3275 = vmul.f32 %v2783, %v3147
        %v3276 = vmul.f32 %v2784, %v3151
        %v3277 = vmul.f32 %v2785, %v3151
        %v3278 = vmul.f32 %v2786, %v3155
        %v3279 = vmul.f32 %v2787, %v3155
        %v3280 = vmul.f32 %v2788, %v3159
        %v3281 = vmul.f32 %v2789, %v3159
        %v3282 = vmul.f32 %v2790, %v3163
        %v3283 = vmul.f32 %v2791, %v3163
        %v3284 = vmul.f32 %v2792, %v3167
        %v3285 = vmul.f32 %v2793, %v3167
        %v3286 = vmul.f32 %v2794, %v3171
        %v3287 = vmul.f32 %v2795, %v3171
        %v3288 = vmul.f32 %v2796, %v3175
        %v3289 = vmul.f32 %v2797, %v3175
        %v3290 = vmul.f32 %v2798, %v3179
        %v3291 = vmul.f32 %v2799, %v3179
        %v3292 = vmul.f32 %v2800, %v3183
        %v3293 = vmul.f32 %v2801, %v3183
        %v3294 = vmul.f32 %v2802, %v3187
        %v3295 = vmul.f32 %v2803, %v3187
        %v3296 = vmul.f32 %v2804, %v3191
        %v3297 = vmul.f32 %v2805, %v3191
        %v3298 = vmul.f32 %v2806, %v3195
        %v3299 = vmul.f32 %v2807, %v3195
        %v3300 = vmul.f32 %v2808, %v3199
        %v3301 = vmul.f32 %v2809, %v3199
        %v3302 = vmul.f32 %v2810, %v3203
        %v3303 = vmul.f32 %v2811, %v3203
        %v3304 = vmul.f32 %v2812, %v3207
        %v3305 = vmul.f32 %v2813, %v3207
        %v3306 = vmul.f32 %v2814, %v3211
        %v3307 = vmul.f32 %v2815, %v3211
        %3308 = vadd.xlane.f32.xlu0 %v3244
        %v3309 = vpop.xlane.xlu0 %3308
        %3310 = vadd.xlane.f32.xlu0 %v3245
        %v3311 = vpop.xlane.xlu0 %3310
        %3312 = vadd.xlane.f32.xlu0 %v3246
        %v3313 = vpop.xlane.xlu0 %3312
        %3314 = vadd.xlane.f32.xlu0 %v3247
        %v3315 = vpop.xlane.xlu0 %3314
        %3316 = vadd.xlane.f32.xlu0 %v3248
        %v3317 = vpop.xlane.xlu0 %3316
        %3318 = vadd.xlane.f32.xlu0 %v3249
        %v3319 = vpop.xlane.xlu0 %3318
        %3320 = vadd.xlane.f32.xlu0 %v3250
        %v3321 = vpop.xlane.xlu0 %3320
        %3322 = vadd.xlane.f32.xlu0 %v3251
        %v3323 = vpop.xlane.xlu0 %3322
        %3324 = vadd.xlane.f32.xlu0 %v3252
        %v3325 = vpop.xlane.xlu0 %3324
        %3326 = vadd.xlane.f32.xlu0 %v3253
        %v3327 = vpop.xlane.xlu0 %3326
        %3328 = vadd.xlane.f32.xlu0 %v3254
        %v3329 = vpop.xlane.xlu0 %3328
        %3330 = vadd.xlane.f32.xlu0 %v3255
        %v3331 = vpop.xlane.xlu0 %3330
        %3332 = vadd.xlane.f32.xlu0 %v3256
        %v3333 = vpop.xlane.xlu0 %3332
        %3334 = vadd.xlane.f32.xlu0 %v3257
        %v3335 = vpop.xlane.xlu0 %3334
        %3336 = vadd.xlane.f32.xlu0 %v3258
        %v3337 = vpop.xlane.xlu0 %3336
        %3338 = vadd.xlane.f32.xlu0 %v3259
        %v3339 = vpop.xlane.xlu0 %3338
        %3340 = vadd.xlane.f32.xlu0 %v3260
        %v3341 = vpop.xlane.xlu0 %3340
        %3342 = vadd.xlane.f32.xlu0 %v3261
        %v3343 = vpop.xlane.xlu0 %3342
        %3344 = vadd.xlane.f32.xlu0 %v3262
        %v3345 = vpop.xlane.xlu0 %3344
        %3346 = vadd.xlane.f32.xlu0 %v3263
        %v3347 = vpop.xlane.xlu0 %3346
        %3348 = vadd.xlane.f32.xlu0 %v3264
        %v3349 = vpop.xlane.xlu0 %3348
        %3350 = vadd.xlane.f32.xlu0 %v3265
        %v3351 = vpop.xlane.xlu0 %3350
        %3352 = vadd.xlane.f32.xlu0 %v3266
        %v3353 = vpop.xlane.xlu0 %3352
        %3354 = vadd.xlane.f32.xlu0 %v3267
        %v3355 = vpop.xlane.xlu0 %3354
        %3356 = vadd.xlane.f32.xlu0 %v3268
        %v3357 = vpop.xlane.xlu0 %3356
        %3358 = vadd.xlane.f32.xlu0 %v3269
        %v3359 = vpop.xlane.xlu0 %3358
        %3360 = vadd.xlane.f32.xlu0 %v3270
        %v3361 = vpop.xlane.xlu0 %3360
        %3362 = vadd.xlane.f32.xlu0 %v3271
        %v3363 = vpop.xlane.xlu0 %3362
        %3364 = vadd.xlane.f32.xlu0 %v3272
        %v3365 = vpop.xlane.xlu0 %3364
        %3366 = vadd.xlane.f32.xlu0 %v3273
        %v3367 = vpop.xlane.xlu0 %3366
        %3368 = vadd.xlane.f32.xlu0 %v3274
        %v3369 = vpop.xlane.xlu0 %3368
        %3370 = vadd.xlane.f32.xlu0 %v3275
        %v3371 = vpop.xlane.xlu0 %3370
        %3372 = vadd.xlane.f32.xlu0 %v3276
        %v3373 = vpop.xlane.xlu0 %3372
        %3374 = vadd.xlane.f32.xlu0 %v3277
        %v3375 = vpop.xlane.xlu0 %3374
        %3376 = vadd.xlane.f32.xlu0 %v3278
        %v3377 = vpop.xlane.xlu0 %3376
        %3378 = vadd.xlane.f32.xlu0 %v3279
        %v3379 = vpop.xlane.xlu0 %3378
        %3380 = vadd.xlane.f32.xlu0 %v3280
        %v3381 = vpop.xlane.xlu0 %3380
        %3382 = vadd.xlane.f32.xlu0 %v3281
        %v3383 = vpop.xlane.xlu0 %3382
        %3384 = vadd.xlane.f32.xlu0 %v3282
        %v3385 = vpop.xlane.xlu0 %3384
        %3386 = vadd.xlane.f32.xlu0 %v3283
        %v3387 = vpop.xlane.xlu0 %3386
        %3388 = vadd.xlane.f32.xlu0 %v3284
        %v3389 = vpop.xlane.xlu0 %3388
        %3390 = vadd.xlane.f32.xlu0 %v3285
        %v3391 = vpop.xlane.xlu0 %3390
        %3392 = vadd.xlane.f32.xlu0 %v3286
        %v3393 = vpop.xlane.xlu0 %3392
        %3394 = vadd.xlane.f32.xlu0 %v3287
        %v3395 = vpop.xlane.xlu0 %3394
        %3396 = vadd.xlane.f32.xlu0 %v3288
        %v3397 = vpop.xlane.xlu0 %3396
        %3398 = vadd.xlane.f32.xlu0 %v3289
        %v3399 = vpop.xlane.xlu0 %3398
        %3400 = vadd.xlane.f32.xlu0 %v3290
        %v3401 = vpop.xlane.xlu0 %3400
        %3402 = vadd.xlane.f32.xlu0 %v3291
        %v3403 = vpop.xlane.xlu0 %3402
        %3404 = vadd.xlane.f32.xlu0 %v3292
        %v3405 = vpop.xlane.xlu0 %3404
        %3406 = vadd.xlane.f32.xlu0 %v3293
        %v3407 = vpop.xlane.xlu0 %3406
        %3408 = vadd.xlane.f32.xlu0 %v3294
        %v3409 = vpop.xlane.xlu0 %3408
        %3410 = vadd.xlane.f32.xlu0 %v3295
        %v3411 = vpop.xlane.xlu0 %3410
        %3412 = vadd.xlane.f32.xlu0 %v3296
        %v3413 = vpop.xlane.xlu0 %3412
        %3414 = vadd.xlane.f32.xlu0 %v3297
        %v3415 = vpop.xlane.xlu0 %3414
        %3416 = vadd.xlane.f32.xlu0 %v3298
        %v3417 = vpop.xlane.xlu0 %3416
        %3418 = vadd.xlane.f32.xlu0 %v3299
        %v3419 = vpop.xlane.xlu0 %3418
        %3420 = vadd.xlane.f32.xlu0 %v3300
        %v3421 = vpop.xlane.xlu0 %3420
        %3422 = vadd.xlane.f32.xlu0 %v3301
        %v3423 = vpop.xlane.xlu0 %3422
        %3424 = vadd.xlane.f32.xlu0 %v3302
        %v3425 = vpop.xlane.xlu0 %3424
        %3426 = vadd.xlane.f32.xlu0 %v3303
        %v3427 = vpop.xlane.xlu0 %3426
        %3428 = vadd.xlane.f32.xlu0 %v3304
        %v3429 = vpop.xlane.xlu0 %3428
        %3430 = vadd.xlane.f32.xlu0 %v3305
        %v3431 = vpop.xlane.xlu0 %3430
        %3432 = vadd.xlane.f32.xlu0 %v3306
        %v3433 = vpop.xlane.xlu0 %3432
        %3434 = vadd.xlane.f32.xlu0 %v3307
        %v3435 = vpop.xlane.xlu0 %3434
        %v3436 = vmul.f32 %v3309, 0.088388346
        %v3437 = vmul.f32 %v3311, 0.088388346
        %v3438 = vmul.f32 %v3313, 0.088388346
        %v3439 = vmul.f32 %v3315, 0.088388346
        %v3440 = vmul.f32 %v3317, 0.088388346
        %v3441 = vmul.f32 %v3319, 0.088388346
        %v3442 = vmul.f32 %v3321, 0.088388346
        %v3443 = vmul.f32 %v3323, 0.088388346
        %v3444 = vmul.f32 %v3325, 0.088388346
        %v3445 = vmul.f32 %v3327, 0.088388346
        %v3446 = vmul.f32 %v3329, 0.088388346
        %v3447 = vmul.f32 %v3331, 0.088388346
        %v3448 = vmul.f32 %v3333, 0.088388346
        %v3449 = vmul.f32 %v3335, 0.088388346
        %v3450 = vmul.f32 %v3337, 0.088388346
        %v3451 = vmul.f32 %v3339, 0.088388346
        %v3452 = vmul.f32 %v3341, 0.088388346
        %v3453 = vmul.f32 %v3343, 0.088388346
        %v3454 = vmul.f32 %v3345, 0.088388346
        %v3455 = vmul.f32 %v3347, 0.088388346
        %v3456 = vmul.f32 %v3349, 0.088388346
        %v3457 = vmul.f32 %v3351, 0.088388346
        %v3458 = vmul.f32 %v3353, 0.088388346
        %v3459 = vmul.f32 %v3355, 0.088388346
        %v3460 = vmul.f32 %v3357, 0.088388346
        %v3461 = vmul.f32 %v3359, 0.088388346
        %v3462 = vmul.f32 %v3361, 0.088388346
        %v3463 = vmul.f32 %v3363, 0.088388346
        %v3464 = vmul.f32 %v3365, 0.088388346
        %v3465 = vmul.f32 %v3367, 0.088388346
        %v3466 = vmul.f32 %v3369, 0.088388346
        %v3467 = vmul.f32 %v3371, 0.088388346
        %v3468 = vmul.f32 %v3373, 0.088388346
        %v3469 = vmul.f32 %v3375, 0.088388346
        %v3470 = vmul.f32 %v3377, 0.088388346
        %v3471 = vmul.f32 %v3379, 0.088388346
        %v3472 = vmul.f32 %v3381, 0.088388346
        %v3473 = vmul.f32 %v3383, 0.088388346
        %v3474 = vmul.f32 %v3385, 0.088388346
        %v3475 = vmul.f32 %v3387, 0.088388346
        %v3476 = vmul.f32 %v3389, 0.088388346
        %v3477 = vmul.f32 %v3391, 0.088388346
        %v3478 = vmul.f32 %v3393, 0.088388346
        %v3479 = vmul.f32 %v3395, 0.088388346
        %v3480 = vmul.f32 %v3397, 0.088388346
        %v3481 = vmul.f32 %v3399, 0.088388346
        %v3482 = vmul.f32 %v3401, 0.088388346
        %v3483 = vmul.f32 %v3403, 0.088388346
        %v3484 = vmul.f32 %v3405, 0.088388346
        %v3485 = vmul.f32 %v3407, 0.088388346
        %v3486 = vmul.f32 %v3409, 0.088388346
        %v3487 = vmul.f32 %v3411, 0.088388346
        %v3488 = vmul.f32 %v3413, 0.088388346
        %v3489 = vmul.f32 %v3415, 0.088388346
        %v3490 = vmul.f32 %v3417, 0.088388346
        %v3491 = vmul.f32 %v3419, 0.088388346
        %v3492 = vmul.f32 %v3421, 0.088388346
        %v3493 = vmul.f32 %v3423, 0.088388346
        %v3494 = vmul.f32 %v3425, 0.088388346
        %v3495 = vmul.f32 %v3427, 0.088388346
        %v3496 = vmul.f32 %v3429, 0.088388346
        %v3497 = vmul.f32 %v3431, 0.088388346
        %v3498 = vmul.f32 %v3433, 0.088388346
        %v3499 = vmul.f32 %v3435, 0.088388346
        %v3564 = vlaneseq
        %v3565 = vand.u32 %v3564, 127
        %v3566 = vlaneseq
        %v3567 = vshrl.u32 %v3566, 7
        %v3568 = vsub.s32 %v3565, %v3567
        %v3569 = vrot.slane %v3436, %v3568
        %v3570 = vadd.s32 %v3565, 4294967288
        %v3571 = vlaneseq
        %v3572 = vshrl.u32 %v3571, 7
        %v3573 = vsub.s32 %v3570, %v3572
        %v3574 = vrot.slane %v3437, %v3573
        %vm3575 = vcmask 130112
        %v3576 = vsel %vm3575, %v3574, %v3569
        %v3577 = vlaneseq
        %v3578 = vshrl.u32 %v3577, 7
        %v3579 = vsub.s32 %v3565, %v3578
        %v3580 = vrot.slane %v3438, %v3579
        %v3581 = vlaneseq
        %v3582 = vshrl.u32 %v3581, 7
        %v3583 = vsub.s32 %v3570, %v3582
        %v3584 = vrot.slane %v3439, %v3583
        %v3585 = vsel %vm3575, %v3584, %v3580
        %v3586 = vlaneseq
        %v3587 = vshrl.u32 %v3586, 7
        %v3588 = vsub.s32 %v3565, %v3587
        %v3589 = vrot.slane %v3440, %v3588
        %v3590 = vlaneseq
        %v3591 = vshrl.u32 %v3590, 7
        %v3592 = vsub.s32 %v3570, %v3591
        %v3593 = vrot.slane %v3441, %v3592
        %v3594 = vsel %vm3575, %v3593, %v3589
        %v3595 = vlaneseq
        %v3596 = vshrl.u32 %v3595, 7
        %v3597 = vsub.s32 %v3565, %v3596
        %v3598 = vrot.slane %v3442, %v3597
        %v3599 = vlaneseq
        %v3600 = vshrl.u32 %v3599, 7
        %v3601 = vsub.s32 %v3570, %v3600
        %v3602 = vrot.slane %v3443, %v3601
        %v3603 = vsel %vm3575, %v3602, %v3598
        %v3604 = vlaneseq
        %v3605 = vshrl.u32 %v3604, 7
        %v3606 = vsub.s32 %v3565, %v3605
        %v3607 = vrot.slane %v3444, %v3606
        %v3608 = vlaneseq
        %v3609 = vshrl.u32 %v3608, 7
        %v3610 = vsub.s32 %v3570, %v3609
        %v3611 = vrot.slane %v3445, %v3610
        %v3612 = vsel %vm3575, %v3611, %v3607
        %v3613 = vlaneseq
        %v3614 = vshrl.u32 %v3613, 7
        %v3615 = vsub.s32 %v3565, %v3614
        %v3616 = vrot.slane %v3446, %v3615
        %v3617 = vlaneseq
        %v3618 = vshrl.u32 %v3617, 7
        %v3619 = vsub.s32 %v3570, %v3618
        %v3620 = vrot.slane %v3447, %v3619
        %v3621 = vsel %vm3575, %v3620, %v3616
        %v3622 = vlaneseq
        %v3623 = vshrl.u32 %v3622, 7
        %v3624 = vsub.s32 %v3565, %v3623
        %v3625 = vrot.slane %v3448, %v3624
        %v3626 = vlaneseq
        %v3627 = vshrl.u32 %v3626, 7
        %v3628 = vsub.s32 %v3570, %v3627
        %v3629 = vrot.slane %v3449, %v3628
        %v3630 = vsel %vm3575, %v3629, %v3625
        %v3631 = vlaneseq
        %v3632 = vshrl.u32 %v3631, 7
        %v3633 = vsub.s32 %v3565, %v3632
        %v3634 = vrot.slane %v3450, %v3633
        %v3635 = vlaneseq
        %v3636 = vshrl.u32 %v3635, 7
        %v3637 = vsub.s32 %v3570, %v3636
        %v3638 = vrot.slane %v3451, %v3637
        %v3639 = vsel %vm3575, %v3638, %v3634
        %v3640 = vlaneseq
        %v3641 = vshrl.u32 %v3640, 7
        %v3642 = vsub.s32 %v3565, %v3641
        %v3643 = vrot.slane %v3452, %v3642
        %v3644 = vlaneseq
        %v3645 = vshrl.u32 %v3644, 7
        %v3646 = vsub.s32 %v3570, %v3645
        %v3647 = vrot.slane %v3453, %v3646
        %v3648 = vsel %vm3575, %v3647, %v3643
        %v3649 = vlaneseq
        %v3650 = vshrl.u32 %v3649, 7
        %v3651 = vsub.s32 %v3565, %v3650
        %v3652 = vrot.slane %v3454, %v3651
        %v3653 = vlaneseq
        %v3654 = vshrl.u32 %v3653, 7
        %v3655 = vsub.s32 %v3570, %v3654
        %v3656 = vrot.slane %v3455, %v3655
        %v3657 = vsel %vm3575, %v3656, %v3652
        %v3658 = vlaneseq
        %v3659 = vshrl.u32 %v3658, 7
        %v3660 = vsub.s32 %v3565, %v3659
        %v3661 = vrot.slane %v3456, %v3660
        %v3662 = vlaneseq
        %v3663 = vshrl.u32 %v3662, 7
        %v3664 = vsub.s32 %v3570, %v3663
        %v3665 = vrot.slane %v3457, %v3664
        %v3666 = vsel %vm3575, %v3665, %v3661
        %v3667 = vlaneseq
        %v3668 = vshrl.u32 %v3667, 7
        %v3669 = vsub.s32 %v3565, %v3668
        %v3670 = vrot.slane %v3458, %v3669
        %v3671 = vlaneseq
        %v3672 = vshrl.u32 %v3671, 7
        %v3673 = vsub.s32 %v3570, %v3672
        %v3674 = vrot.slane %v3459, %v3673
        %v3675 = vsel %vm3575, %v3674, %v3670
        %v3676 = vlaneseq
        %v3677 = vshrl.u32 %v3676, 7
        %v3678 = vsub.s32 %v3565, %v3677
        %v3679 = vrot.slane %v3460, %v3678
        %v3680 = vlaneseq
        %v3681 = vshrl.u32 %v3680, 7
        %v3682 = vsub.s32 %v3570, %v3681
        %v3683 = vrot.slane %v3461, %v3682
        %v3684 = vsel %vm3575, %v3683, %v3679
        %v3685 = vlaneseq
        %v3686 = vshrl.u32 %v3685, 7
        %v3687 = vsub.s32 %v3565, %v3686
        %v3688 = vrot.slane %v3462, %v3687
        %v3689 = vlaneseq
        %v3690 = vshrl.u32 %v3689, 7
        %v3691 = vsub.s32 %v3570, %v3690
        %v3692 = vrot.slane %v3463, %v3691
        %v3693 = vsel %vm3575, %v3692, %v3688
        %v3694 = vlaneseq
        %v3695 = vshrl.u32 %v3694, 7
        %v3696 = vsub.s32 %v3565, %v3695
        %v3697 = vrot.slane %v3464, %v3696
        %v3698 = vlaneseq
        %v3699 = vshrl.u32 %v3698, 7
        %v3700 = vsub.s32 %v3570, %v3699
        %v3701 = vrot.slane %v3465, %v3700
        %v3702 = vsel %vm3575, %v3701, %v3697
        %v3703 = vlaneseq
        %v3704 = vshrl.u32 %v3703, 7
        %v3705 = vsub.s32 %v3565, %v3704
        %v3706 = vrot.slane %v3466, %v3705
        %v3707 = vlaneseq
        %v3708 = vshrl.u32 %v3707, 7
        %v3709 = vsub.s32 %v3570, %v3708
        %v3710 = vrot.slane %v3467, %v3709
        %v3711 = vsel %vm3575, %v3710, %v3706
        %v3712 = vlaneseq
        %v3713 = vshrl.u32 %v3712, 7
        %v3714 = vsub.s32 %v3565, %v3713
        %v3715 = vrot.slane %v3468, %v3714
        %v3716 = vlaneseq
        %v3717 = vshrl.u32 %v3716, 7
        %v3718 = vsub.s32 %v3570, %v3717
        %v3719 = vrot.slane %v3469, %v3718
        %v3720 = vsel %vm3575, %v3719, %v3715
        %v3721 = vlaneseq
        %v3722 = vshrl.u32 %v3721, 7
        %v3723 = vsub.s32 %v3565, %v3722
        %v3724 = vrot.slane %v3470, %v3723
        %v3725 = vlaneseq
        %v3726 = vshrl.u32 %v3725, 7
        %v3727 = vsub.s32 %v3570, %v3726
        %v3728 = vrot.slane %v3471, %v3727
        %v3729 = vsel %vm3575, %v3728, %v3724
        %v3730 = vlaneseq
        %v3731 = vshrl.u32 %v3730, 7
        %v3732 = vsub.s32 %v3565, %v3731
        %v3733 = vrot.slane %v3472, %v3732
        %v3734 = vlaneseq
        %v3735 = vshrl.u32 %v3734, 7
        %v3736 = vsub.s32 %v3570, %v3735
        %v3737 = vrot.slane %v3473, %v3736
        %v3738 = vsel %vm3575, %v3737, %v3733
        %v3739 = vlaneseq
        %v3740 = vshrl.u32 %v3739, 7
        %v3741 = vsub.s32 %v3565, %v3740
        %v3742 = vrot.slane %v3474, %v3741
        %v3743 = vlaneseq
        %v3744 = vshrl.u32 %v3743, 7
        %v3745 = vsub.s32 %v3570, %v3744
        %v3746 = vrot.slane %v3475, %v3745
        %v3747 = vsel %vm3575, %v3746, %v3742
        %v3748 = vlaneseq
        %v3749 = vshrl.u32 %v3748, 7
        %v3750 = vsub.s32 %v3565, %v3749
        %v3751 = vrot.slane %v3476, %v3750
        %v3752 = vlaneseq
        %v3753 = vshrl.u32 %v3752, 7
        %v3754 = vsub.s32 %v3570, %v3753
        %v3755 = vrot.slane %v3477, %v3754
        %v3756 = vsel %vm3575, %v3755, %v3751
        %v3757 = vlaneseq
        %v3758 = vshrl.u32 %v3757, 7
        %v3759 = vsub.s32 %v3565, %v3758
        %v3760 = vrot.slane %v3478, %v3759
        %v3761 = vlaneseq
        %v3762 = vshrl.u32 %v3761, 7
        %v3763 = vsub.s32 %v3570, %v3762
        %v3764 = vrot.slane %v3479, %v3763
        %v3765 = vsel %vm3575, %v3764, %v3760
        %v3766 = vlaneseq
        %v3767 = vshrl.u32 %v3766, 7
        %v3768 = vsub.s32 %v3565, %v3767
        %v3769 = vrot.slane %v3480, %v3768
        %v3770 = vlaneseq
        %v3771 = vshrl.u32 %v3770, 7
        %v3772 = vsub.s32 %v3570, %v3771
        %v3773 = vrot.slane %v3481, %v3772
        %v3774 = vsel %vm3575, %v3773, %v3769
        %v3775 = vlaneseq
        %v3776 = vshrl.u32 %v3775, 7
        %v3777 = vsub.s32 %v3565, %v3776
        %v3778 = vrot.slane %v3482, %v3777
        %v3779 = vlaneseq
        %v3780 = vshrl.u32 %v3779, 7
        %v3781 = vsub.s32 %v3570, %v3780
        %v3782 = vrot.slane %v3483, %v3781
        %v3783 = vsel %vm3575, %v3782, %v3778
        %v3784 = vlaneseq
        %v3785 = vshrl.u32 %v3784, 7
        %v3786 = vsub.s32 %v3565, %v3785
        %v3787 = vrot.slane %v3484, %v3786
        %v3788 = vlaneseq
        %v3789 = vshrl.u32 %v3788, 7
        %v3790 = vsub.s32 %v3570, %v3789
        %v3791 = vrot.slane %v3485, %v3790
        %v3792 = vsel %vm3575, %v3791, %v3787
        %v3793 = vlaneseq
        %v3794 = vshrl.u32 %v3793, 7
        %v3795 = vsub.s32 %v3565, %v3794
        %v3796 = vrot.slane %v3486, %v3795
        %v3797 = vlaneseq
        %v3798 = vshrl.u32 %v3797, 7
        %v3799 = vsub.s32 %v3570, %v3798
        %v3800 = vrot.slane %v3487, %v3799
        %v3801 = vsel %vm3575, %v3800, %v3796
        %v3802 = vlaneseq
        %v3803 = vshrl.u32 %v3802, 7
        %v3804 = vsub.s32 %v3565, %v3803
        %v3805 = vrot.slane %v3488, %v3804
        %v3806 = vlaneseq
        %v3807 = vshrl.u32 %v3806, 7
        %v3808 = vsub.s32 %v3570, %v3807
        %v3809 = vrot.slane %v3489, %v3808
        %v3810 = vsel %vm3575, %v3809, %v3805
        %v3811 = vlaneseq
        %v3812 = vshrl.u32 %v3811, 7
        %v3813 = vsub.s32 %v3565, %v3812
        %v3814 = vrot.slane %v3490, %v3813
        %v3815 = vlaneseq
        %v3816 = vshrl.u32 %v3815, 7
        %v3817 = vsub.s32 %v3570, %v3816
        %v3818 = vrot.slane %v3491, %v3817
        %v3819 = vsel %vm3575, %v3818, %v3814
        %v3820 = vlaneseq
        %v3821 = vshrl.u32 %v3820, 7
        %v3822 = vsub.s32 %v3565, %v3821
        %v3823 = vrot.slane %v3492, %v3822
        %v3824 = vlaneseq
        %v3825 = vshrl.u32 %v3824, 7
        %v3826 = vsub.s32 %v3570, %v3825
        %v3827 = vrot.slane %v3493, %v3826
        %v3828 = vsel %vm3575, %v3827, %v3823
        %v3829 = vlaneseq
        %v3830 = vshrl.u32 %v3829, 7
        %v3831 = vsub.s32 %v3565, %v3830
        %v3832 = vrot.slane %v3494, %v3831
        %v3833 = vlaneseq
        %v3834 = vshrl.u32 %v3833, 7
        %v3835 = vsub.s32 %v3570, %v3834
        %v3836 = vrot.slane %v3495, %v3835
        %v3837 = vsel %vm3575, %v3836, %v3832
        %v3838 = vlaneseq
        %v3839 = vshrl.u32 %v3838, 7
        %v3840 = vsub.s32 %v3565, %v3839
        %v3841 = vrot.slane %v3496, %v3840
        %v3842 = vlaneseq
        %v3843 = vshrl.u32 %v3842, 7
        %v3844 = vsub.s32 %v3570, %v3843
        %v3845 = vrot.slane %v3497, %v3844
        %v3846 = vsel %vm3575, %v3845, %v3841
        %v3847 = vlaneseq
        %v3848 = vshrl.u32 %v3847, 7
        %v3849 = vsub.s32 %v3565, %v3848
        %v3850 = vrot.slane %v3498, %v3849
        %v3851 = vlaneseq
        %v3852 = vshrl.u32 %v3851, 7
        %v3853 = vsub.s32 %v3570, %v3852
        %v3854 = vrot.slane %v3499, %v3853
        %v3855 = vsel %vm3575, %v3854, %v3850
        %vm3856 = vcmask 1041409
        %v3857 = vsel %vm3856, %v3585, %v3576
        %vm3858 = vcmask 1042434
        %v3859 = vsel %vm3858, %v3594, %v3857
        %vm3860 = vcmask 1043459
        %v3861 = vsel %vm3860, %v3603, %v3859
        %vm3862 = vcmask 1044484
        %v3863 = vsel %vm3862, %v3612, %v3861
        %vm3864 = vcmask 1045509
        %v3865 = vsel %vm3864, %v3621, %v3863
        %vm3866 = vcmask 1046534
        %v3867 = vsel %vm3866, %v3630, %v3865
        %vm3868 = vcmask 1047559
        %v3869 = vsel %vm3868, %v3639, %v3867
        %v3870 = vsel %vm3856, %v3657, %v3648
        %v3871 = vsel %vm3858, %v3666, %v3870
        %v3872 = vsel %vm3860, %v3675, %v3871
        %v3873 = vsel %vm3862, %v3684, %v3872
        %v3874 = vsel %vm3864, %v3693, %v3873
        %v3875 = vsel %vm3866, %v3702, %v3874
        %v3876 = vsel %vm3868, %v3711, %v3875
        %v3877 = vsel %vm3856, %v3729, %v3720
        %v3878 = vsel %vm3858, %v3738, %v3877
        %v3879 = vsel %vm3860, %v3747, %v3878
        %v3880 = vsel %vm3862, %v3756, %v3879
        %v3881 = vsel %vm3864, %v3765, %v3880
        %v3882 = vsel %vm3866, %v3774, %v3881
        %v3883 = vsel %vm3868, %v3783, %v3882
        %v3884 = vsel %vm3856, %v3801, %v3792
        %v3885 = vsel %vm3858, %v3810, %v3884
        %v3886 = vsel %vm3860, %v3819, %v3885
        %v3887 = vsel %vm3862, %v3828, %v3886
        %v3888 = vsel %vm3864, %v3837, %v3887
        %v3889 = vsel %vm3866, %v3846, %v3888
        %v3890 = vsel %vm3868, %v3855, %v3889
        %vm3895 = vcmask 130048
        %v3896 = vsel %vm3895, %v3869, -inf
        %3897 = vmax.xlane.f32.xlu0 %v3896
        %v3898 = vpop.xlane.xlu0 %3897
        %v3899 = vsel %vm3895, %v3876, -inf
        %3900 = vmax.xlane.f32.xlu0 %v3899
        %v3901 = vpop.xlane.xlu0 %3900
        %v3902 = vsel %vm3895, %v3883, -inf
        %3903 = vmax.xlane.f32.xlu0 %v3902
        %v3904 = vpop.xlane.xlu0 %3903
        %v3905 = vsel %vm3895, %v3890, -inf
        %3906 = vmax.xlane.f32.xlu0 %v3905
        %v3907 = vpop.xlane.xlu0 %3906
        %v3912 = vlaneseq
        %v3913 = vshrl.u32 %v3912, 7
        %v3914 = vsub.s32 0, %v3913
        %v3915 = vrot.slane %v3898, %v3914
        %v3916 = vlaneseq
        %v3917 = vshrl.u32 %v3916, 7
        %v3918 = vsub.s32 1, %v3917
        %v3919 = vrot.slane %v3898, %v3918
        %v3920 = vlaneseq
        %v3921 = vshrl.u32 %v3920, 7
        %v3922 = vsub.s32 2, %v3921
        %v3923 = vrot.slane %v3898, %v3922
        %v3924 = vlaneseq
        %v3925 = vshrl.u32 %v3924, 7
        %v3926 = vsub.s32 3, %v3925
        %v3927 = vrot.slane %v3898, %v3926
        %v3928 = vlaneseq
        %v3929 = vshrl.u32 %v3928, 7
        %v3930 = vsub.s32 4, %v3929
        %v3931 = vrot.slane %v3898, %v3930
        %v3932 = vlaneseq
        %v3933 = vshrl.u32 %v3932, 7
        %v3934 = vsub.s32 5, %v3933
        %v3935 = vrot.slane %v3898, %v3934
        %v3936 = vlaneseq
        %v3937 = vshrl.u32 %v3936, 7
        %v3938 = vsub.s32 6, %v3937
        %v3939 = vrot.slane %v3898, %v3938
        %v3940 = vlaneseq
        %v3941 = vshrl.u32 %v3940, 7
        %v3942 = vsub.s32 7, %v3941
        %v3943 = vrot.slane %v3898, %v3942
        %v3944 = vlaneseq
        %v3945 = vshrl.u32 %v3944, 7
        %v3946 = vsub.s32 0, %v3945
        %v3947 = vrot.slane %v3901, %v3946
        %v3948 = vlaneseq
        %v3949 = vshrl.u32 %v3948, 7
        %v3950 = vsub.s32 1, %v3949
        %v3951 = vrot.slane %v3901, %v3950
        %v3952 = vlaneseq
        %v3953 = vshrl.u32 %v3952, 7
        %v3954 = vsub.s32 2, %v3953
        %v3955 = vrot.slane %v3901, %v3954
        %v3956 = vlaneseq
        %v3957 = vshrl.u32 %v3956, 7
        %v3958 = vsub.s32 3, %v3957
        %v3959 = vrot.slane %v3901, %v3958
        %v3960 = vlaneseq
        %v3961 = vshrl.u32 %v3960, 7
        %v3962 = vsub.s32 4, %v3961
        %v3963 = vrot.slane %v3901, %v3962
        %v3964 = vlaneseq
        %v3965 = vshrl.u32 %v3964, 7
        %v3966 = vsub.s32 5, %v3965
        %v3967 = vrot.slane %v3901, %v3966
        %v3968 = vlaneseq
        %v3969 = vshrl.u32 %v3968, 7
        %v3970 = vsub.s32 6, %v3969
        %v3971 = vrot.slane %v3901, %v3970
        %v3972 = vlaneseq
        %v3973 = vshrl.u32 %v3972, 7
        %v3974 = vsub.s32 7, %v3973
        %v3975 = vrot.slane %v3901, %v3974
        %v3976 = vlaneseq
        %v3977 = vshrl.u32 %v3976, 7
        %v3978 = vsub.s32 0, %v3977
        %v3979 = vrot.slane %v3904, %v3978
        %v3980 = vlaneseq
        %v3981 = vshrl.u32 %v3980, 7
        %v3982 = vsub.s32 1, %v3981
        %v3983 = vrot.slane %v3904, %v3982
        %v3984 = vlaneseq
        %v3985 = vshrl.u32 %v3984, 7
        %v3986 = vsub.s32 2, %v3985
        %v3987 = vrot.slane %v3904, %v3986
        %v3988 = vlaneseq
        %v3989 = vshrl.u32 %v3988, 7
        %v3990 = vsub.s32 3, %v3989
        %v3991 = vrot.slane %v3904, %v3990
        %v3992 = vlaneseq
        %v3993 = vshrl.u32 %v3992, 7
        %v3994 = vsub.s32 4, %v3993
        %v3995 = vrot.slane %v3904, %v3994
        %v3996 = vlaneseq
        %v3997 = vshrl.u32 %v3996, 7
        %v3998 = vsub.s32 5, %v3997
        %v3999 = vrot.slane %v3904, %v3998
        %v4000 = vlaneseq
        %v4001 = vshrl.u32 %v4000, 7
        %v4002 = vsub.s32 6, %v4001
        %v4003 = vrot.slane %v3904, %v4002
        %v4004 = vlaneseq
        %v4005 = vshrl.u32 %v4004, 7
        %v4006 = vsub.s32 7, %v4005
        %v4007 = vrot.slane %v3904, %v4006
        %v4008 = vlaneseq
        %v4009 = vshrl.u32 %v4008, 7
        %v4010 = vsub.s32 0, %v4009
        %v4011 = vrot.slane %v3907, %v4010
        %v4012 = vlaneseq
        %v4013 = vshrl.u32 %v4012, 7
        %v4014 = vsub.s32 1, %v4013
        %v4015 = vrot.slane %v3907, %v4014
        %v4016 = vlaneseq
        %v4017 = vshrl.u32 %v4016, 7
        %v4018 = vsub.s32 2, %v4017
        %v4019 = vrot.slane %v3907, %v4018
        %v4020 = vlaneseq
        %v4021 = vshrl.u32 %v4020, 7
        %v4022 = vsub.s32 3, %v4021
        %v4023 = vrot.slane %v3907, %v4022
        %v4024 = vlaneseq
        %v4025 = vshrl.u32 %v4024, 7
        %v4026 = vsub.s32 4, %v4025
        %v4027 = vrot.slane %v3907, %v4026
        %v4028 = vlaneseq
        %v4029 = vshrl.u32 %v4028, 7
        %v4030 = vsub.s32 5, %v4029
        %v4031 = vrot.slane %v3907, %v4030
        %v4032 = vlaneseq
        %v4033 = vshrl.u32 %v4032, 7
        %v4034 = vsub.s32 6, %v4033
        %v4035 = vrot.slane %v3907, %v4034
        %v4036 = vlaneseq
        %v4037 = vshrl.u32 %v4036, 7
        %v4038 = vsub.s32 7, %v4037
        %v4039 = vrot.slane %v3907, %v4038
        %v4072 = vsub.f32 %v3436, %v3915
        %v4073 = vsub.f32 %v3437, %v3915
        %v4074 = vsub.f32 %v3438, %v3919
        %v4075 = vsub.f32 %v3439, %v3919
        %v4076 = vsub.f32 %v3440, %v3923
        %v4077 = vsub.f32 %v3441, %v3923
        %v4078 = vsub.f32 %v3442, %v3927
        %v4079 = vsub.f32 %v3443, %v3927
        %v4080 = vsub.f32 %v3444, %v3931
        %v4081 = vsub.f32 %v3445, %v3931
        %v4082 = vsub.f32 %v3446, %v3935
        %v4083 = vsub.f32 %v3447, %v3935
        %v4084 = vsub.f32 %v3448, %v3939
        %v4085 = vsub.f32 %v3449, %v3939
        %v4086 = vsub.f32 %v3450, %v3943
        %v4087 = vsub.f32 %v3451, %v3943
        %v4088 = vsub.f32 %v3452, %v3947
        %v4089 = vsub.f32 %v3453, %v3947
        %v4090 = vsub.f32 %v3454, %v3951
        %v4091 = vsub.f32 %v3455, %v3951
        %v4092 = vsub.f32 %v3456, %v3955
        %v4093 = vsub.f32 %v3457, %v3955
        %v4094 = vsub.f32 %v3458, %v3959
        %v4095 = vsub.f32 %v3459, %v3959
        %v4096 = vsub.f32 %v3460, %v3963
        %v4097 = vsub.f32 %v3461, %v3963
        %v4098 = vsub.f32 %v3462, %v3967
        %v4099 = vsub.f32 %v3463, %v3967
        %v4100 = vsub.f32 %v3464, %v3971
        %v4101 = vsub.f32 %v3465, %v3971
        %v4102 = vsub.f32 %v3466, %v3975
        %v4103 = vsub.f32 %v3467, %v3975
        %v4104 = vsub.f32 %v3468, %v3979
        %v4105 = vsub.f32 %v3469, %v3979
        %v4106 = vsub.f32 %v3470, %v3983
        %v4107 = vsub.f32 %v3471, %v3983
        %v4108 = vsub.f32 %v3472, %v3987
        %v4109 = vsub.f32 %v3473, %v3987
        %v4110 = vsub.f32 %v3474, %v3991
        %v4111 = vsub.f32 %v3475, %v3991
        %v4112 = vsub.f32 %v3476, %v3995
        %v4113 = vsub.f32 %v3477, %v3995
        %v4114 = vsub.f32 %v3478, %v3999
        %v4115 = vsub.f32 %v3479, %v3999
        %v4116 = vsub.f32 %v3480, %v4003
        %v4117 = vsub.f32 %v3481, %v4003
        %v4118 = vsub.f32 %v3482, %v4007
        %v4119 = vsub.f32 %v3483, %v4007
        %v4120 = vsub.f32 %v3484, %v4011
        %v4121 = vsub.f32 %v3485, %v4011
        %v4122 = vsub.f32 %v3486, %v4015
        %v4123 = vsub.f32 %v3487, %v4015
        %v4124 = vsub.f32 %v3488, %v4019
        %v4125 = vsub.f32 %v3489, %v4019
        %v4126 = vsub.f32 %v3490, %v4023
        %v4127 = vsub.f32 %v3491, %v4023
        %v4128 = vsub.f32 %v3492, %v4027
        %v4129 = vsub.f32 %v3493, %v4027
        %v4130 = vsub.f32 %v3494, %v4031
        %v4131 = vsub.f32 %v3495, %v4031
        %v4132 = vsub.f32 %v3496, %v4035
        %v4133 = vsub.f32 %v3497, %v4035
        %v4134 = vsub.f32 %v3498, %v4039
        %v4135 = vsub.f32 %v3499, %v4039
        %v4136 = vmul.f32 %v4072, 1.442695
        %v4137 = vpow.pop %v4136
        %v4138 = vmul.f32 %v4073, 1.442695
        %v4139 = vpow.pop %v4138
        %v4140 = vmul.f32 %v4074, 1.442695
        %v4141 = vpow.pop %v4140
        %v4142 = vmul.f32 %v4075, 1.442695
        %v4143 = vpow.pop %v4142
        %v4144 = vmul.f32 %v4076, 1.442695
        %v4145 = vpow.pop %v4144
        %v4146 = vmul.f32 %v4077, 1.442695
        %v4147 = vpow.pop %v4146
        %v4148 = vmul.f32 %v4078, 1.442695
        %v4149 = vpow.pop %v4148
        %v4150 = vmul.f32 %v4079, 1.442695
        %v4151 = vpow.pop %v4150
        %v4152 = vmul.f32 %v4080, 1.442695
        %v4153 = vpow.pop %v4152
        %v4154 = vmul.f32 %v4081, 1.442695
        %v4155 = vpow.pop %v4154
        %v4156 = vmul.f32 %v4082, 1.442695
        %v4157 = vpow.pop %v4156
        %v4158 = vmul.f32 %v4083, 1.442695
        %v4159 = vpow.pop %v4158
        %v4160 = vmul.f32 %v4084, 1.442695
        %v4161 = vpow.pop %v4160
        %v4162 = vmul.f32 %v4085, 1.442695
        %v4163 = vpow.pop %v4162
        %v4164 = vmul.f32 %v4086, 1.442695
        %v4165 = vpow.pop %v4164
        %v4166 = vmul.f32 %v4087, 1.442695
        %v4167 = vpow.pop %v4166
        %v4168 = vmul.f32 %v4088, 1.442695
        %v4169 = vpow.pop %v4168
        %v4170 = vmul.f32 %v4089, 1.442695
        %v4171 = vpow.pop %v4170
        %v4172 = vmul.f32 %v4090, 1.442695
        %v4173 = vpow.pop %v4172
        %v4174 = vmul.f32 %v4091, 1.442695
        %v4175 = vpow.pop %v4174
        %v4176 = vmul.f32 %v4092, 1.442695
        %v4177 = vpow.pop %v4176
        %v4178 = vmul.f32 %v4093, 1.442695
        %v4179 = vpow.pop %v4178
        %v4180 = vmul.f32 %v4094, 1.442695
        %v4181 = vpow.pop %v4180
        %v4182 = vmul.f32 %v4095, 1.442695
        %v4183 = vpow.pop %v4182
        %v4184 = vmul.f32 %v4096, 1.442695
        %v4185 = vpow.pop %v4184
        %v4186 = vmul.f32 %v4097, 1.442695
        %v4187 = vpow.pop %v4186
        %v4188 = vmul.f32 %v4098, 1.442695
        %v4189 = vpow.pop %v4188
        %v4190 = vmul.f32 %v4099, 1.442695
        %v4191 = vpow.pop %v4190
        %v4192 = vmul.f32 %v4100, 1.442695
        %v4193 = vpow.pop %v4192
        %v4194 = vmul.f32 %v4101, 1.442695
        %v4195 = vpow.pop %v4194
        %v4196 = vmul.f32 %v4102, 1.442695
        %v4197 = vpow.pop %v4196
        %v4198 = vmul.f32 %v4103, 1.442695
        %v4199 = vpow.pop %v4198
        %v4200 = vmul.f32 %v4104, 1.442695
        %v4201 = vpow.pop %v4200
        %v4202 = vmul.f32 %v4105, 1.442695
        %v4203 = vpow.pop %v4202
        %v4204 = vmul.f32 %v4106, 1.442695
        %v4205 = vpow.pop %v4204
        %v4206 = vmul.f32 %v4107, 1.442695
        %v4207 = vpow.pop %v4206
        %v4208 = vmul.f32 %v4108, 1.442695
        %v4209 = vpow.pop %v4208
        %v4210 = vmul.f32 %v4109, 1.442695
        %v4211 = vpow.pop %v4210
        %v4212 = vmul.f32 %v4110, 1.442695
        %v4213 = vpow.pop %v4212
        %v4214 = vmul.f32 %v4111, 1.442695
        %v4215 = vpow.pop %v4214
        %v4216 = vmul.f32 %v4112, 1.442695
        %v4217 = vpow.pop %v4216
        %v4218 = vmul.f32 %v4113, 1.442695
        %v4219 = vpow.pop %v4218
        %v4220 = vmul.f32 %v4114, 1.442695
        %v4221 = vpow.pop %v4220
        %v4222 = vmul.f32 %v4115, 1.442695
        %v4223 = vpow.pop %v4222
        %v4224 = vmul.f32 %v4116, 1.442695
        %v4225 = vpow.pop %v4224
        %v4226 = vmul.f32 %v4117, 1.442695
        %v4227 = vpow.pop %v4226
        %v4228 = vmul.f32 %v4118, 1.442695
        %v4229 = vpow.pop %v4228
        %v4230 = vmul.f32 %v4119, 1.442695
        %v4231 = vpow.pop %v4230
        %v4232 = vmul.f32 %v4120, 1.442695
        %v4233 = vpow.pop %v4232
        %v4234 = vmul.f32 %v4121, 1.442695
        %v4235 = vpow.pop %v4234
        %v4236 = vmul.f32 %v4122, 1.442695
        %v4237 = vpow.pop %v4236
        %v4238 = vmul.f32 %v4123, 1.442695
        %v4239 = vpow.pop %v4238
        %v4240 = vmul.f32 %v4124, 1.442695
        %v4241 = vpow.pop %v4240
        %v4242 = vmul.f32 %v4125, 1.442695
        %v4243 = vpow.pop %v4242
        %v4244 = vmul.f32 %v4126, 1.442695
        %v4245 = vpow.pop %v4244
        %v4246 = vmul.f32 %v4127, 1.442695
        %v4247 = vpow.pop %v4246
        %v4248 = vmul.f32 %v4128, 1.442695
        %v4249 = vpow.pop %v4248
        %v4250 = vmul.f32 %v4129, 1.442695
        %v4251 = vpow.pop %v4250
        %v4252 = vmul.f32 %v4130, 1.442695
        %v4253 = vpow.pop %v4252
        %v4254 = vmul.f32 %v4131, 1.442695
        %v4255 = vpow.pop %v4254
        %v4256 = vmul.f32 %v4132, 1.442695
        %v4257 = vpow.pop %v4256
        %v4258 = vmul.f32 %v4133, 1.442695
        %v4259 = vpow.pop %v4258
        %v4260 = vmul.f32 %v4134, 1.442695
        %v4261 = vpow.pop %v4260
        %v4262 = vmul.f32 %v4135, 1.442695
        %v4263 = vpow.pop %v4262
        %4328 = vset.pattern.permute.xlu0 0
        %4329 = vperm.xlu0 %4328, %v4137
        %v4330 = vpop.permute.xlu0 %4329
        %4331 = vset.pattern.permute.xlu0 0
        %4332 = vperm.xlu0 %4331, %v4139
        %v4333 = vpop.permute.xlu0 %4332
        %4334 = vset.pattern.permute.xlu0 0
        %4335 = vperm.xlu0 %4334, %v4141
        %v4336 = vpop.permute.xlu0 %4335
        %4337 = vset.pattern.permute.xlu0 0
        %4338 = vperm.xlu0 %4337, %v4143
        %v4339 = vpop.permute.xlu0 %4338
        %4340 = vset.pattern.permute.xlu0 0
        %4341 = vperm.xlu0 %4340, %v4145
        %v4342 = vpop.permute.xlu0 %4341
        %4343 = vset.pattern.permute.xlu0 0
        %4344 = vperm.xlu0 %4343, %v4147
        %v4345 = vpop.permute.xlu0 %4344
        %4346 = vset.pattern.permute.xlu0 0
        %4347 = vperm.xlu0 %4346, %v4149
        %v4348 = vpop.permute.xlu0 %4347
        %4349 = vset.pattern.permute.xlu0 0
        %4350 = vperm.xlu0 %4349, %v4151
        %v4351 = vpop.permute.xlu0 %4350
        %4352 = vset.pattern.permute.xlu0 0
        %4353 = vperm.xlu0 %4352, %v4153
        %v4354 = vpop.permute.xlu0 %4353
        %4355 = vset.pattern.permute.xlu0 0
        %4356 = vperm.xlu0 %4355, %v4155
        %v4357 = vpop.permute.xlu0 %4356
        %4358 = vset.pattern.permute.xlu0 0
        %4359 = vperm.xlu0 %4358, %v4157
        %v4360 = vpop.permute.xlu0 %4359
        %4361 = vset.pattern.permute.xlu0 0
        %4362 = vperm.xlu0 %4361, %v4159
        %v4363 = vpop.permute.xlu0 %4362
        %4364 = vset.pattern.permute.xlu0 0
        %4365 = vperm.xlu0 %4364, %v4161
        %v4366 = vpop.permute.xlu0 %4365
        %4367 = vset.pattern.permute.xlu0 0
        %4368 = vperm.xlu0 %4367, %v4163
        %v4369 = vpop.permute.xlu0 %4368
        %4370 = vset.pattern.permute.xlu0 0
        %4371 = vperm.xlu0 %4370, %v4165
        %v4372 = vpop.permute.xlu0 %4371
        %4373 = vset.pattern.permute.xlu0 0
        %4374 = vperm.xlu0 %4373, %v4167
        %v4375 = vpop.permute.xlu0 %4374
        %4376 = vset.pattern.permute.xlu0 0
        %4377 = vperm.xlu0 %4376, %v4169
        %v4378 = vpop.permute.xlu0 %4377
        %4379 = vset.pattern.permute.xlu0 0
        %4380 = vperm.xlu0 %4379, %v4171
        %v4381 = vpop.permute.xlu0 %4380
        %4382 = vset.pattern.permute.xlu0 0
        %4383 = vperm.xlu0 %4382, %v4173
        %v4384 = vpop.permute.xlu0 %4383
        %4385 = vset.pattern.permute.xlu0 0
        %4386 = vperm.xlu0 %4385, %v4175
        %v4387 = vpop.permute.xlu0 %4386
        %4388 = vset.pattern.permute.xlu0 0
        %4389 = vperm.xlu0 %4388, %v4177
        %v4390 = vpop.permute.xlu0 %4389
        %4391 = vset.pattern.permute.xlu0 0
        %4392 = vperm.xlu0 %4391, %v4179
        %v4393 = vpop.permute.xlu0 %4392
        %4394 = vset.pattern.permute.xlu0 0
        %4395 = vperm.xlu0 %4394, %v4181
        %v4396 = vpop.permute.xlu0 %4395
        %4397 = vset.pattern.permute.xlu0 0
        %4398 = vperm.xlu0 %4397, %v4183
        %v4399 = vpop.permute.xlu0 %4398
        %4400 = vset.pattern.permute.xlu0 0
        %4401 = vperm.xlu0 %4400, %v4185
        %v4402 = vpop.permute.xlu0 %4401
        %4403 = vset.pattern.permute.xlu0 0
        %4404 = vperm.xlu0 %4403, %v4187
        %v4405 = vpop.permute.xlu0 %4404
        %4406 = vset.pattern.permute.xlu0 0
        %4407 = vperm.xlu0 %4406, %v4189
        %v4408 = vpop.permute.xlu0 %4407
        %4409 = vset.pattern.permute.xlu0 0
        %4410 = vperm.xlu0 %4409, %v4191
        %v4411 = vpop.permute.xlu0 %4410
        %4412 = vset.pattern.permute.xlu0 0
        %4413 = vperm.xlu0 %4412, %v4193
        %v4414 = vpop.permute.xlu0 %4413
        %4415 = vset.pattern.permute.xlu0 0
        %4416 = vperm.xlu0 %4415, %v4195
        %v4417 = vpop.permute.xlu0 %4416
        %4418 = vset.pattern.permute.xlu0 0
        %4419 = vperm.xlu0 %4418, %v4197
        %v4420 = vpop.permute.xlu0 %4419
        %4421 = vset.pattern.permute.xlu0 0
        %4422 = vperm.xlu0 %4421, %v4199
        %v4423 = vpop.permute.xlu0 %4422
        %4424 = vset.pattern.permute.xlu0 0
        %4425 = vperm.xlu0 %4424, %v4201
        %v4426 = vpop.permute.xlu0 %4425
        %4427 = vset.pattern.permute.xlu0 0
        %4428 = vperm.xlu0 %4427, %v4203
        %v4429 = vpop.permute.xlu0 %4428
        %4430 = vset.pattern.permute.xlu0 0
        %4431 = vperm.xlu0 %4430, %v4205
        %v4432 = vpop.permute.xlu0 %4431
        %4433 = vset.pattern.permute.xlu0 0
        %4434 = vperm.xlu0 %4433, %v4207
        %v4435 = vpop.permute.xlu0 %4434
        %4436 = vset.pattern.permute.xlu0 0
        %4437 = vperm.xlu0 %4436, %v4209
        %v4438 = vpop.permute.xlu0 %4437
        %4439 = vset.pattern.permute.xlu0 0
        %4440 = vperm.xlu0 %4439, %v4211
        %v4441 = vpop.permute.xlu0 %4440
        %4442 = vset.pattern.permute.xlu0 0
        %4443 = vperm.xlu0 %4442, %v4213
        %v4444 = vpop.permute.xlu0 %4443
        %4445 = vset.pattern.permute.xlu0 0
        %4446 = vperm.xlu0 %4445, %v4215
        %v4447 = vpop.permute.xlu0 %4446
        %4448 = vset.pattern.permute.xlu0 0
        %4449 = vperm.xlu0 %4448, %v4217
        %v4450 = vpop.permute.xlu0 %4449
        %4451 = vset.pattern.permute.xlu0 0
        %4452 = vperm.xlu0 %4451, %v4219
        %v4453 = vpop.permute.xlu0 %4452
        %4454 = vset.pattern.permute.xlu0 0
        %4455 = vperm.xlu0 %4454, %v4221
        %v4456 = vpop.permute.xlu0 %4455
        %4457 = vset.pattern.permute.xlu0 0
        %4458 = vperm.xlu0 %4457, %v4223
        %v4459 = vpop.permute.xlu0 %4458
        %4460 = vset.pattern.permute.xlu0 0
        %4461 = vperm.xlu0 %4460, %v4225
        %v4462 = vpop.permute.xlu0 %4461
        %4463 = vset.pattern.permute.xlu0 0
        %4464 = vperm.xlu0 %4463, %v4227
        %v4465 = vpop.permute.xlu0 %4464
        %4466 = vset.pattern.permute.xlu0 0
        %4467 = vperm.xlu0 %4466, %v4229
        %v4468 = vpop.permute.xlu0 %4467
        %4469 = vset.pattern.permute.xlu0 0
        %4470 = vperm.xlu0 %4469, %v4231
        %v4471 = vpop.permute.xlu0 %4470
        %4472 = vset.pattern.permute.xlu0 0
        %4473 = vperm.xlu0 %4472, %v4233
        %v4474 = vpop.permute.xlu0 %4473
        %4475 = vset.pattern.permute.xlu0 0
        %4476 = vperm.xlu0 %4475, %v4235
        %v4477 = vpop.permute.xlu0 %4476
        %4478 = vset.pattern.permute.xlu0 0
        %4479 = vperm.xlu0 %4478, %v4237
        %v4480 = vpop.permute.xlu0 %4479
        %4481 = vset.pattern.permute.xlu0 0
        %4482 = vperm.xlu0 %4481, %v4239
        %v4483 = vpop.permute.xlu0 %4482
        %4484 = vset.pattern.permute.xlu0 0
        %4485 = vperm.xlu0 %4484, %v4241
        %v4486 = vpop.permute.xlu0 %4485
        %4487 = vset.pattern.permute.xlu0 0
        %4488 = vperm.xlu0 %4487, %v4243
        %v4489 = vpop.permute.xlu0 %4488
        %4490 = vset.pattern.permute.xlu0 0
        %4491 = vperm.xlu0 %4490, %v4245
        %v4492 = vpop.permute.xlu0 %4491
        %4493 = vset.pattern.permute.xlu0 0
        %4494 = vperm.xlu0 %4493, %v4247
        %v4495 = vpop.permute.xlu0 %4494
        %4496 = vset.pattern.permute.xlu0 0
        %4497 = vperm.xlu0 %4496, %v4249
        %v4498 = vpop.permute.xlu0 %4497
        %4499 = vset.pattern.permute.xlu0 0
        %4500 = vperm.xlu0 %4499, %v4251
        %v4501 = vpop.permute.xlu0 %4500
        %4502 = vset.pattern.permute.xlu0 0
        %4503 = vperm.xlu0 %4502, %v4253
        %v4504 = vpop.permute.xlu0 %4503
        %4505 = vset.pattern.permute.xlu0 0
        %4506 = vperm.xlu0 %4505, %v4255
        %v4507 = vpop.permute.xlu0 %4506
        %4508 = vset.pattern.permute.xlu0 0
        %4509 = vperm.xlu0 %4508, %v4257
        %v4510 = vpop.permute.xlu0 %4509
        %4511 = vset.pattern.permute.xlu0 0
        %4512 = vperm.xlu0 %4511, %v4259
        %v4513 = vpop.permute.xlu0 %4512
        %4514 = vset.pattern.permute.xlu0 0
        %4515 = vperm.xlu0 %4514, %v4261
        %v4516 = vpop.permute.xlu0 %4515
        %4517 = vset.pattern.permute.xlu0 0
        %4518 = vperm.xlu0 %4517, %v4263
        %v4519 = vpop.permute.xlu0 %4518
        %v4520 = vlaneseq
        %v4521 = vshrl.u32 %v4520, 7
        %v4522 = vsub.s32 %v3565, %v4521
        %v4523 = vrot.slane %v4330, %v4522
        %v4524 = vlaneseq
        %v4525 = vshrl.u32 %v4524, 7
        %v4526 = vsub.s32 %v3570, %v4525
        %v4527 = vrot.slane %v4333, %v4526
        %v4528 = vsel %vm3575, %v4527, %v4523
        %v4529 = vlaneseq
        %v4530 = vshrl.u32 %v4529, 7
        %v4531 = vsub.s32 %v3565, %v4530
        %v4532 = vrot.slane %v4336, %v4531
        %v4533 = vlaneseq
        %v4534 = vshrl.u32 %v4533, 7
        %v4535 = vsub.s32 %v3570, %v4534
        %v4536 = vrot.slane %v4339, %v4535
        %v4537 = vsel %vm3575, %v4536, %v4532
        %v4538 = vlaneseq
        %v4539 = vshrl.u32 %v4538, 7
        %v4540 = vsub.s32 %v3565, %v4539
        %v4541 = vrot.slane %v4342, %v4540
        %v4542 = vlaneseq
        %v4543 = vshrl.u32 %v4542, 7
        %v4544 = vsub.s32 %v3570, %v4543
        %v4545 = vrot.slane %v4345, %v4544
        %v4546 = vsel %vm3575, %v4545, %v4541
        %v4547 = vlaneseq
        %v4548 = vshrl.u32 %v4547, 7
        %v4549 = vsub.s32 %v3565, %v4548
        %v4550 = vrot.slane %v4348, %v4549
        %v4551 = vlaneseq
        %v4552 = vshrl.u32 %v4551, 7
        %v4553 = vsub.s32 %v3570, %v4552
        %v4554 = vrot.slane %v4351, %v4553
        %v4555 = vsel %vm3575, %v4554, %v4550
        %v4556 = vlaneseq
        %v4557 = vshrl.u32 %v4556, 7
        %v4558 = vsub.s32 %v3565, %v4557
        %v4559 = vrot.slane %v4354, %v4558
        %v4560 = vlaneseq
        %v4561 = vshrl.u32 %v4560, 7
        %v4562 = vsub.s32 %v3570, %v4561
        %v4563 = vrot.slane %v4357, %v4562
        %v4564 = vsel %vm3575, %v4563, %v4559
        %v4565 = vlaneseq
        %v4566 = vshrl.u32 %v4565, 7
        %v4567 = vsub.s32 %v3565, %v4566
        %v4568 = vrot.slane %v4360, %v4567
        %v4569 = vlaneseq
        %v4570 = vshrl.u32 %v4569, 7
        %v4571 = vsub.s32 %v3570, %v4570
        %v4572 = vrot.slane %v4363, %v4571
        %v4573 = vsel %vm3575, %v4572, %v4568
        %v4574 = vlaneseq
        %v4575 = vshrl.u32 %v4574, 7
        %v4576 = vsub.s32 %v3565, %v4575
        %v4577 = vrot.slane %v4366, %v4576
        %v4578 = vlaneseq
        %v4579 = vshrl.u32 %v4578, 7
        %v4580 = vsub.s32 %v3570, %v4579
        %v4581 = vrot.slane %v4369, %v4580
        %v4582 = vsel %vm3575, %v4581, %v4577
        %v4583 = vlaneseq
        %v4584 = vshrl.u32 %v4583, 7
        %v4585 = vsub.s32 %v3565, %v4584
        %v4586 = vrot.slane %v4372, %v4585
        %v4587 = vlaneseq
        %v4588 = vshrl.u32 %v4587, 7
        %v4589 = vsub.s32 %v3570, %v4588
        %v4590 = vrot.slane %v4375, %v4589
        %v4591 = vsel %vm3575, %v4590, %v4586
        %v4592 = vlaneseq
        %v4593 = vshrl.u32 %v4592, 7
        %v4594 = vsub.s32 %v3565, %v4593
        %v4595 = vrot.slane %v4378, %v4594
        %v4596 = vlaneseq
        %v4597 = vshrl.u32 %v4596, 7
        %v4598 = vsub.s32 %v3570, %v4597
        %v4599 = vrot.slane %v4381, %v4598
        %v4600 = vsel %vm3575, %v4599, %v4595
        %v4601 = vlaneseq
        %v4602 = vshrl.u32 %v4601, 7
        %v4603 = vsub.s32 %v3565, %v4602
        %v4604 = vrot.slane %v4384, %v4603
        %v4605 = vlaneseq
        %v4606 = vshrl.u32 %v4605, 7
        %v4607 = vsub.s32 %v3570, %v4606
        %v4608 = vrot.slane %v4387, %v4607
        %v4609 = vsel %vm3575, %v4608, %v4604
        %v4610 = vlaneseq
        %v4611 = vshrl.u32 %v4610, 7
        %v4612 = vsub.s32 %v3565, %v4611
        %v4613 = vrot.slane %v4390, %v4612
        %v4614 = vlaneseq
        %v4615 = vshrl.u32 %v4614, 7
        %v4616 = vsub.s32 %v3570, %v4615
        %v4617 = vrot.slane %v4393, %v4616
        %v4618 = vsel %vm3575, %v4617, %v4613
        %v4619 = vlaneseq
        %v4620 = vshrl.u32 %v4619, 7
        %v4621 = vsub.s32 %v3565, %v4620
        %v4622 = vrot.slane %v4396, %v4621
        %v4623 = vlaneseq
        %v4624 = vshrl.u32 %v4623, 7
        %v4625 = vsub.s32 %v3570, %v4624
        %v4626 = vrot.slane %v4399, %v4625
        %v4627 = vsel %vm3575, %v4626, %v4622
        %v4628 = vlaneseq
        %v4629 = vshrl.u32 %v4628, 7
        %v4630 = vsub.s32 %v3565, %v4629
        %v4631 = vrot.slane %v4402, %v4630
        %v4632 = vlaneseq
        %v4633 = vshrl.u32 %v4632, 7
        %v4634 = vsub.s32 %v3570, %v4633
        %v4635 = vrot.slane %v4405, %v4634
        %v4636 = vsel %vm3575, %v4635, %v4631
        %v4637 = vlaneseq
        %v4638 = vshrl.u32 %v4637, 7
        %v4639 = vsub.s32 %v3565, %v4638
        %v4640 = vrot.slane %v4408, %v4639
        %v4641 = vlaneseq
        %v4642 = vshrl.u32 %v4641, 7
        %v4643 = vsub.s32 %v3570, %v4642
        %v4644 = vrot.slane %v4411, %v4643
        %v4645 = vsel %vm3575, %v4644, %v4640
        %v4646 = vlaneseq
        %v4647 = vshrl.u32 %v4646, 7
        %v4648 = vsub.s32 %v3565, %v4647
        %v4649 = vrot.slane %v4414, %v4648
        %v4650 = vlaneseq
        %v4651 = vshrl.u32 %v4650, 7
        %v4652 = vsub.s32 %v3570, %v4651
        %v4653 = vrot.slane %v4417, %v4652
        %v4654 = vsel %vm3575, %v4653, %v4649
        %v4655 = vlaneseq
        %v4656 = vshrl.u32 %v4655, 7
        %v4657 = vsub.s32 %v3565, %v4656
        %v4658 = vrot.slane %v4420, %v4657
        %v4659 = vlaneseq
        %v4660 = vshrl.u32 %v4659, 7
        %v4661 = vsub.s32 %v3570, %v4660
        %v4662 = vrot.slane %v4423, %v4661
        %v4663 = vsel %vm3575, %v4662, %v4658
        %v4664 = vlaneseq
        %v4665 = vshrl.u32 %v4664, 7
        %v4666 = vsub.s32 %v3565, %v4665
        %v4667 = vrot.slane %v4426, %v4666
        %v4668 = vlaneseq
        %v4669 = vshrl.u32 %v4668, 7
        %v4670 = vsub.s32 %v3570, %v4669
        %v4671 = vrot.slane %v4429, %v4670
        %v4672 = vsel %vm3575, %v4671, %v4667
        %v4673 = vlaneseq
        %v4674 = vshrl.u32 %v4673, 7
        %v4675 = vsub.s32 %v3565, %v4674
        %v4676 = vrot.slane %v4432, %v4675
        %v4677 = vlaneseq
        %v4678 = vshrl.u32 %v4677, 7
        %v4679 = vsub.s32 %v3570, %v4678
        %v4680 = vrot.slane %v4435, %v4679
        %v4681 = vsel %vm3575, %v4680, %v4676
        %v4682 = vlaneseq
        %v4683 = vshrl.u32 %v4682, 7
        %v4684 = vsub.s32 %v3565, %v4683
        %v4685 = vrot.slane %v4438, %v4684
        %v4686 = vlaneseq
        %v4687 = vshrl.u32 %v4686, 7
        %v4688 = vsub.s32 %v3570, %v4687
        %v4689 = vrot.slane %v4441, %v4688
        %v4690 = vsel %vm3575, %v4689, %v4685
        %v4691 = vlaneseq
        %v4692 = vshrl.u32 %v4691, 7
        %v4693 = vsub.s32 %v3565, %v4692
        %v4694 = vrot.slane %v4444, %v4693
        %v4695 = vlaneseq
        %v4696 = vshrl.u32 %v4695, 7
        %v4697 = vsub.s32 %v3570, %v4696
        %v4698 = vrot.slane %v4447, %v4697
        %v4699 = vsel %vm3575, %v4698, %v4694
        %v4700 = vlaneseq
        %v4701 = vshrl.u32 %v4700, 7
        %v4702 = vsub.s32 %v3565, %v4701
        %v4703 = vrot.slane %v4450, %v4702
        %v4704 = vlaneseq
        %v4705 = vshrl.u32 %v4704, 7
        %v4706 = vsub.s32 %v3570, %v4705
        %v4707 = vrot.slane %v4453, %v4706
        %v4708 = vsel %vm3575, %v4707, %v4703
        %v4709 = vlaneseq
        %v4710 = vshrl.u32 %v4709, 7
        %v4711 = vsub.s32 %v3565, %v4710
        %v4712 = vrot.slane %v4456, %v4711
        %v4713 = vlaneseq
        %v4714 = vshrl.u32 %v4713, 7
        %v4715 = vsub.s32 %v3570, %v4714
        %v4716 = vrot.slane %v4459, %v4715
        %v4717 = vsel %vm3575, %v4716, %v4712
        %v4718 = vlaneseq
        %v4719 = vshrl.u32 %v4718, 7
        %v4720 = vsub.s32 %v3565, %v4719
        %v4721 = vrot.slane %v4462, %v4720
        %v4722 = vlaneseq
        %v4723 = vshrl.u32 %v4722, 7
        %v4724 = vsub.s32 %v3570, %v4723
        %v4725 = vrot.slane %v4465, %v4724
        %v4726 = vsel %vm3575, %v4725, %v4721
        %v4727 = vlaneseq
        %v4728 = vshrl.u32 %v4727, 7
        %v4729 = vsub.s32 %v3565, %v4728
        %v4730 = vrot.slane %v4468, %v4729
        %v4731 = vlaneseq
        %v4732 = vshrl.u32 %v4731, 7
        %v4733 = vsub.s32 %v3570, %v4732
        %v4734 = vrot.slane %v4471, %v4733
        %v4735 = vsel %vm3575, %v4734, %v4730
        %v4736 = vlaneseq
        %v4737 = vshrl.u32 %v4736, 7
        %v4738 = vsub.s32 %v3565, %v4737
        %v4739 = vrot.slane %v4474, %v4738
        %v4740 = vlaneseq
        %v4741 = vshrl.u32 %v4740, 7
        %v4742 = vsub.s32 %v3570, %v4741
        %v4743 = vrot.slane %v4477, %v4742
        %v4744 = vsel %vm3575, %v4743, %v4739
        %v4745 = vlaneseq
        %v4746 = vshrl.u32 %v4745, 7
        %v4747 = vsub.s32 %v3565, %v4746
        %v4748 = vrot.slane %v4480, %v4747
        %v4749 = vlaneseq
        %v4750 = vshrl.u32 %v4749, 7
        %v4751 = vsub.s32 %v3570, %v4750
        %v4752 = vrot.slane %v4483, %v4751
        %v4753 = vsel %vm3575, %v4752, %v4748
        %v4754 = vlaneseq
        %v4755 = vshrl.u32 %v4754, 7
        %v4756 = vsub.s32 %v3565, %v4755
        %v4757 = vrot.slane %v4486, %v4756
        %v4758 = vlaneseq
        %v4759 = vshrl.u32 %v4758, 7
        %v4760 = vsub.s32 %v3570, %v4759
        %v4761 = vrot.slane %v4489, %v4760
        %v4762 = vsel %vm3575, %v4761, %v4757
        %v4763 = vlaneseq
        %v4764 = vshrl.u32 %v4763, 7
        %v4765 = vsub.s32 %v3565, %v4764
        %v4766 = vrot.slane %v4492, %v4765
        %v4767 = vlaneseq
        %v4768 = vshrl.u32 %v4767, 7
        %v4769 = vsub.s32 %v3570, %v4768
        %v4770 = vrot.slane %v4495, %v4769
        %v4771 = vsel %vm3575, %v4770, %v4766
        %v4772 = vlaneseq
        %v4773 = vshrl.u32 %v4772, 7
        %v4774 = vsub.s32 %v3565, %v4773
        %v4775 = vrot.slane %v4498, %v4774
        %v4776 = vlaneseq
        %v4777 = vshrl.u32 %v4776, 7
        %v4778 = vsub.s32 %v3570, %v4777
        %v4779 = vrot.slane %v4501, %v4778
        %v4780 = vsel %vm3575, %v4779, %v4775
        %v4781 = vlaneseq
        %v4782 = vshrl.u32 %v4781, 7
        %v4783 = vsub.s32 %v3565, %v4782
        %v4784 = vrot.slane %v4504, %v4783
        %v4785 = vlaneseq
        %v4786 = vshrl.u32 %v4785, 7
        %v4787 = vsub.s32 %v3570, %v4786
        %v4788 = vrot.slane %v4507, %v4787
        %v4789 = vsel %vm3575, %v4788, %v4784
        %v4790 = vlaneseq
        %v4791 = vshrl.u32 %v4790, 7
        %v4792 = vsub.s32 %v3565, %v4791
        %v4793 = vrot.slane %v4510, %v4792
        %v4794 = vlaneseq
        %v4795 = vshrl.u32 %v4794, 7
        %v4796 = vsub.s32 %v3570, %v4795
        %v4797 = vrot.slane %v4513, %v4796
        %v4798 = vsel %vm3575, %v4797, %v4793
        %v4799 = vlaneseq
        %v4800 = vshrl.u32 %v4799, 7
        %v4801 = vsub.s32 %v3565, %v4800
        %v4802 = vrot.slane %v4516, %v4801
        %v4803 = vlaneseq
        %v4804 = vshrl.u32 %v4803, 7
        %v4805 = vsub.s32 %v3570, %v4804
        %v4806 = vrot.slane %v4519, %v4805
        %v4807 = vsel %vm3575, %v4806, %v4802
        %v4808 = vsel %vm3856, %v4537, %v4528
        %v4809 = vsel %vm3858, %v4546, %v4808
        %v4810 = vsel %vm3860, %v4555, %v4809
        %v4811 = vsel %vm3862, %v4564, %v4810
        %v4812 = vsel %vm3864, %v4573, %v4811
        %v4813 = vsel %vm3866, %v4582, %v4812
        %v4814 = vsel %vm3868, %v4591, %v4813
        %v4815 = vsel %vm3856, %v4609, %v4600
        %v4816 = vsel %vm3858, %v4618, %v4815
        %v4817 = vsel %vm3860, %v4627, %v4816
        %v4818 = vsel %vm3862, %v4636, %v4817
        %v4819 = vsel %vm3864, %v4645, %v4818
        %v4820 = vsel %vm3866, %v4654, %v4819
        %v4821 = vsel %vm3868, %v4663, %v4820
        %v4822 = vsel %vm3856, %v4681, %v4672
        %v4823 = vsel %vm3858, %v4690, %v4822
        %v4824 = vsel %vm3860, %v4699, %v4823
        %v4825 = vsel %vm3862, %v4708, %v4824
        %v4826 = vsel %vm3864, %v4717, %v4825
        %v4827 = vsel %vm3866, %v4726, %v4826
        %v4828 = vsel %vm3868, %v4735, %v4827
        %v4829 = vsel %vm3856, %v4753, %v4744
        %v4830 = vsel %vm3858, %v4762, %v4829
        %v4831 = vsel %vm3860, %v4771, %v4830
        %v4832 = vsel %vm3862, %v4780, %v4831
        %v4833 = vsel %vm3864, %v4789, %v4832
        %v4834 = vsel %vm3866, %v4798, %v4833
        %v4835 = vsel %vm3868, %v4807, %v4834
        %v4840 = vsel %vm3895, %v4814, 0.0
        %4841 = vadd.xlane.f32.xlu0 %v4840
        %v4842 = vpop.xlane.xlu0 %4841
        %v4843 = vsel %vm3895, %v4821, 0.0
        %4844 = vadd.xlane.f32.xlu0 %v4843
        %v4845 = vpop.xlane.xlu0 %4844
        %v4846 = vsel %vm3895, %v4828, 0.0
        %4847 = vadd.xlane.f32.xlu0 %v4846
        %v4848 = vpop.xlane.xlu0 %4847
        %v4849 = vsel %vm3895, %v4835, 0.0
        %4850 = vadd.xlane.f32.xlu0 %v4849
        %v4851 = vpop.xlane.xlu0 %4850
        %v4852 = vrcp.pop %v4842
        %v4853 = vrcp.pop %v4845
        %v4854 = vrcp.pop %v4848
        %v4855 = vrcp.pop %v4851
        %v4860 = vlaneseq
        %v4861 = vshrl.u32 %v4860, 7
        %v4862 = vsub.s32 0, %v4861
        %v4863 = vrot.slane %v4852, %v4862
        %v4864 = vlaneseq
        %v4865 = vshrl.u32 %v4864, 7
        %v4866 = vsub.s32 1, %v4865
        %v4867 = vrot.slane %v4852, %v4866
        %v4868 = vlaneseq
        %v4869 = vshrl.u32 %v4868, 7
        %v4870 = vsub.s32 2, %v4869
        %v4871 = vrot.slane %v4852, %v4870
        %v4872 = vlaneseq
        %v4873 = vshrl.u32 %v4872, 7
        %v4874 = vsub.s32 3, %v4873
        %v4875 = vrot.slane %v4852, %v4874
        %v4876 = vlaneseq
        %v4877 = vshrl.u32 %v4876, 7
        %v4878 = vsub.s32 4, %v4877
        %v4879 = vrot.slane %v4852, %v4878
        %v4880 = vlaneseq
        %v4881 = vshrl.u32 %v4880, 7
        %v4882 = vsub.s32 5, %v4881
        %v4883 = vrot.slane %v4852, %v4882
        %v4884 = vlaneseq
        %v4885 = vshrl.u32 %v4884, 7
        %v4886 = vsub.s32 6, %v4885
        %v4887 = vrot.slane %v4852, %v4886
        %v4888 = vlaneseq
        %v4889 = vshrl.u32 %v4888, 7
        %v4890 = vsub.s32 7, %v4889
        %v4891 = vrot.slane %v4852, %v4890
        %v4892 = vlaneseq
        %v4893 = vshrl.u32 %v4892, 7
        %v4894 = vsub.s32 0, %v4893
        %v4895 = vrot.slane %v4853, %v4894
        %v4896 = vlaneseq
        %v4897 = vshrl.u32 %v4896, 7
        %v4898 = vsub.s32 1, %v4897
        %v4899 = vrot.slane %v4853, %v4898
        %v4900 = vlaneseq
        %v4901 = vshrl.u32 %v4900, 7
        %v4902 = vsub.s32 2, %v4901
        %v4903 = vrot.slane %v4853, %v4902
        %v4904 = vlaneseq
        %v4905 = vshrl.u32 %v4904, 7
        %v4906 = vsub.s32 3, %v4905
        %v4907 = vrot.slane %v4853, %v4906
        %v4908 = vlaneseq
        %v4909 = vshrl.u32 %v4908, 7
        %v4910 = vsub.s32 4, %v4909
        %v4911 = vrot.slane %v4853, %v4910
        %v4912 = vlaneseq
        %v4913 = vshrl.u32 %v4912, 7
        %v4914 = vsub.s32 5, %v4913
        %v4915 = vrot.slane %v4853, %v4914
        %v4916 = vlaneseq
        %v4917 = vshrl.u32 %v4916, 7
        %v4918 = vsub.s32 6, %v4917
        %v4919 = vrot.slane %v4853, %v4918
        %v4920 = vlaneseq
        %v4921 = vshrl.u32 %v4920, 7
        %v4922 = vsub.s32 7, %v4921
        %v4923 = vrot.slane %v4853, %v4922
        %v4924 = vlaneseq
        %v4925 = vshrl.u32 %v4924, 7
        %v4926 = vsub.s32 0, %v4925
        %v4927 = vrot.slane %v4854, %v4926
        %v4928 = vlaneseq
        %v4929 = vshrl.u32 %v4928, 7
        %v4930 = vsub.s32 1, %v4929
        %v4931 = vrot.slane %v4854, %v4930
        %v4932 = vlaneseq
        %v4933 = vshrl.u32 %v4932, 7
        %v4934 = vsub.s32 2, %v4933
        %v4935 = vrot.slane %v4854, %v4934
        %v4936 = vlaneseq
        %v4937 = vshrl.u32 %v4936, 7
        %v4938 = vsub.s32 3, %v4937
        %v4939 = vrot.slane %v4854, %v4938
        %v4940 = vlaneseq
        %v4941 = vshrl.u32 %v4940, 7
        %v4942 = vsub.s32 4, %v4941
        %v4943 = vrot.slane %v4854, %v4942
        %v4944 = vlaneseq
        %v4945 = vshrl.u32 %v4944, 7
        %v4946 = vsub.s32 5, %v4945
        %v4947 = vrot.slane %v4854, %v4946
        %v4948 = vlaneseq
        %v4949 = vshrl.u32 %v4948, 7
        %v4950 = vsub.s32 6, %v4949
        %v4951 = vrot.slane %v4854, %v4950
        %v4952 = vlaneseq
        %v4953 = vshrl.u32 %v4952, 7
        %v4954 = vsub.s32 7, %v4953
        %v4955 = vrot.slane %v4854, %v4954
        %v4956 = vlaneseq
        %v4957 = vshrl.u32 %v4956, 7
        %v4958 = vsub.s32 0, %v4957
        %v4959 = vrot.slane %v4855, %v4958
        %v4960 = vlaneseq
        %v4961 = vshrl.u32 %v4960, 7
        %v4962 = vsub.s32 1, %v4961
        %v4963 = vrot.slane %v4855, %v4962
        %v4964 = vlaneseq
        %v4965 = vshrl.u32 %v4964, 7
        %v4966 = vsub.s32 2, %v4965
        %v4967 = vrot.slane %v4855, %v4966
        %v4968 = vlaneseq
        %v4969 = vshrl.u32 %v4968, 7
        %v4970 = vsub.s32 3, %v4969
        %v4971 = vrot.slane %v4855, %v4970
        %v4972 = vlaneseq
        %v4973 = vshrl.u32 %v4972, 7
        %v4974 = vsub.s32 4, %v4973
        %v4975 = vrot.slane %v4855, %v4974
        %v4976 = vlaneseq
        %v4977 = vshrl.u32 %v4976, 7
        %v4978 = vsub.s32 5, %v4977
        %v4979 = vrot.slane %v4855, %v4978
        %v4980 = vlaneseq
        %v4981 = vshrl.u32 %v4980, 7
        %v4982 = vsub.s32 6, %v4981
        %v4983 = vrot.slane %v4855, %v4982
        %v4984 = vlaneseq
        %v4985 = vshrl.u32 %v4984, 7
        %v4986 = vsub.s32 7, %v4985
        %v4987 = vrot.slane %v4855, %v4986
        %v5020 = vmul.f32 %v4137, %v4863
        %v5021 = vmul.f32 %v4139, %v4863
        %v5022 = vmul.f32 %v4141, %v4867
        %v5023 = vmul.f32 %v4143, %v4867
        %v5024 = vmul.f32 %v4145, %v4871
        %v5025 = vmul.f32 %v4147, %v4871
        %v5026 = vmul.f32 %v4149, %v4875
        %v5027 = vmul.f32 %v4151, %v4875
        %v5028 = vmul.f32 %v4153, %v4879
        %v5029 = vmul.f32 %v4155, %v4879
        %v5030 = vmul.f32 %v4157, %v4883
        %v5031 = vmul.f32 %v4159, %v4883
        %v5032 = vmul.f32 %v4161, %v4887
        %v5033 = vmul.f32 %v4163, %v4887
        %v5034 = vmul.f32 %v4165, %v4891
        %v5035 = vmul.f32 %v4167, %v4891
        %v5036 = vmul.f32 %v4169, %v4895
        %v5037 = vmul.f32 %v4171, %v4895
        %v5038 = vmul.f32 %v4173, %v4899
        %v5039 = vmul.f32 %v4175, %v4899
        %v5040 = vmul.f32 %v4177, %v4903
        %v5041 = vmul.f32 %v4179, %v4903
        %v5042 = vmul.f32 %v4181, %v4907
        %v5043 = vmul.f32 %v4183, %v4907
        %v5044 = vmul.f32 %v4185, %v4911
        %v5045 = vmul.f32 %v4187, %v4911
        %v5046 = vmul.f32 %v4189, %v4915
        %v5047 = vmul.f32 %v4191, %v4915
        %v5048 = vmul.f32 %v4193, %v4919
        %v5049 = vmul.f32 %v4195, %v4919
        %v5050 = vmul.f32 %v4197, %v4923
        %v5051 = vmul.f32 %v4199, %v4923
        %v5052 = vmul.f32 %v4201, %v4927
        %v5053 = vmul.f32 %v4203, %v4927
        %v5054 = vmul.f32 %v4205, %v4931
        %v5055 = vmul.f32 %v4207, %v4931
        %v5056 = vmul.f32 %v4209, %v4935
        %v5057 = vmul.f32 %v4211, %v4935
        %v5058 = vmul.f32 %v4213, %v4939
        %v5059 = vmul.f32 %v4215, %v4939
        %v5060 = vmul.f32 %v4217, %v4943
        %v5061 = vmul.f32 %v4219, %v4943
        %v5062 = vmul.f32 %v4221, %v4947
        %v5063 = vmul.f32 %v4223, %v4947
        %v5064 = vmul.f32 %v4225, %v4951
        %v5065 = vmul.f32 %v4227, %v4951
        %v5066 = vmul.f32 %v4229, %v4955
        %v5067 = vmul.f32 %v4231, %v4955
        %v5068 = vmul.f32 %v4233, %v4959
        %v5069 = vmul.f32 %v4235, %v4959
        %v5070 = vmul.f32 %v4237, %v4963
        %v5071 = vmul.f32 %v4239, %v4963
        %v5072 = vmul.f32 %v4241, %v4967
        %v5073 = vmul.f32 %v4243, %v4967
        %v5074 = vmul.f32 %v4245, %v4971
        %v5075 = vmul.f32 %v4247, %v4971
        %v5076 = vmul.f32 %v4249, %v4975
        %v5077 = vmul.f32 %v4251, %v4975
        %v5078 = vmul.f32 %v4253, %v4979
        %v5079 = vmul.f32 %v4255, %v4979
        %v5080 = vmul.f32 %v4257, %v4983
        %v5081 = vmul.f32 %v4259, %v4983
        %v5082 = vmul.f32 %v4261, %v4987
        %v5083 = vmul.f32 %v4263, %v4987
        %5085 = vset.pattern.permute.xlu0 0
        %5086 = vperm.xlu0 %5085, %v5020
        %v5087 = vpop.permute.xlu0 %5086
        %5090 = vset.pattern.permute.xlu0 0
        %5091 = vperm.xlu0 %5090, %v5021
        %v5092 = vpop.permute.xlu0 %5091
        %5095 = vset.pattern.permute.xlu0 0
        %5096 = vperm.xlu0 %5095, %v5022
        %v5097 = vpop.permute.xlu0 %5096
        %5100 = vset.pattern.permute.xlu0 0
        %5101 = vperm.xlu0 %5100, %v5023
        %v5102 = vpop.permute.xlu0 %5101
        %5105 = vset.pattern.permute.xlu0 0
        %5106 = vperm.xlu0 %5105, %v5024
        %v5107 = vpop.permute.xlu0 %5106
        %5110 = vset.pattern.permute.xlu0 0
        %5111 = vperm.xlu0 %5110, %v5025
        %v5112 = vpop.permute.xlu0 %5111
        %5115 = vset.pattern.permute.xlu0 0
        %5116 = vperm.xlu0 %5115, %v5026
        %v5117 = vpop.permute.xlu0 %5116
        %5120 = vset.pattern.permute.xlu0 0
        %5121 = vperm.xlu0 %5120, %v5027
        %v5122 = vpop.permute.xlu0 %5121
        %5125 = vset.pattern.permute.xlu0 0
        %5126 = vperm.xlu0 %5125, %v5028
        %v5127 = vpop.permute.xlu0 %5126
        %5130 = vset.pattern.permute.xlu0 0
        %5131 = vperm.xlu0 %5130, %v5029
        %v5132 = vpop.permute.xlu0 %5131
        %5135 = vset.pattern.permute.xlu0 0
        %5136 = vperm.xlu0 %5135, %v5030
        %v5137 = vpop.permute.xlu0 %5136
        %5140 = vset.pattern.permute.xlu0 0
        %5141 = vperm.xlu0 %5140, %v5031
        %v5142 = vpop.permute.xlu0 %5141
        %5145 = vset.pattern.permute.xlu0 0
        %5146 = vperm.xlu0 %5145, %v5032
        %v5147 = vpop.permute.xlu0 %5146
        %5150 = vset.pattern.permute.xlu0 0
        %5151 = vperm.xlu0 %5150, %v5033
        %v5152 = vpop.permute.xlu0 %5151
        %5155 = vset.pattern.permute.xlu0 0
        %5156 = vperm.xlu0 %5155, %v5034
        %v5157 = vpop.permute.xlu0 %5156
        %5160 = vset.pattern.permute.xlu0 0
        %5161 = vperm.xlu0 %5160, %v5035
        %v5162 = vpop.permute.xlu0 %5161
        %5165 = vset.pattern.permute.xlu0 0
        %5166 = vperm.xlu0 %5165, %v5036
        %v5167 = vpop.permute.xlu0 %5166
        %5170 = vset.pattern.permute.xlu0 0
        %5171 = vperm.xlu0 %5170, %v5037
        %v5172 = vpop.permute.xlu0 %5171
        %5175 = vset.pattern.permute.xlu0 0
        %5176 = vperm.xlu0 %5175, %v5038
        %v5177 = vpop.permute.xlu0 %5176
        %5180 = vset.pattern.permute.xlu0 0
        %5181 = vperm.xlu0 %5180, %v5039
        %v5182 = vpop.permute.xlu0 %5181
        %5185 = vset.pattern.permute.xlu0 0
        %5186 = vperm.xlu0 %5185, %v5040
        %v5187 = vpop.permute.xlu0 %5186
        %5190 = vset.pattern.permute.xlu0 0
        %5191 = vperm.xlu0 %5190, %v5041
        %v5192 = vpop.permute.xlu0 %5191
        %5195 = vset.pattern.permute.xlu0 0
        %5196 = vperm.xlu0 %5195, %v5042
        %v5197 = vpop.permute.xlu0 %5196
        %5200 = vset.pattern.permute.xlu0 0
        %5201 = vperm.xlu0 %5200, %v5043
        %v5202 = vpop.permute.xlu0 %5201
        %5205 = vset.pattern.permute.xlu0 0
        %5206 = vperm.xlu0 %5205, %v5044
        %v5207 = vpop.permute.xlu0 %5206
        %5210 = vset.pattern.permute.xlu0 0
        %5211 = vperm.xlu0 %5210, %v5045
        %v5212 = vpop.permute.xlu0 %5211
        %5215 = vset.pattern.permute.xlu0 0
        %5216 = vperm.xlu0 %5215, %v5046
        %v5217 = vpop.permute.xlu0 %5216
        %5220 = vset.pattern.permute.xlu0 0
        %5221 = vperm.xlu0 %5220, %v5047
        %v5222 = vpop.permute.xlu0 %5221
        %5225 = vset.pattern.permute.xlu0 0
        %5226 = vperm.xlu0 %5225, %v5048
        %v5227 = vpop.permute.xlu0 %5226
        %5230 = vset.pattern.permute.xlu0 0
        %5231 = vperm.xlu0 %5230, %v5049
        %v5232 = vpop.permute.xlu0 %5231
        %5235 = vset.pattern.permute.xlu0 0
        %5236 = vperm.xlu0 %5235, %v5050
        %v5237 = vpop.permute.xlu0 %5236
        %5240 = vset.pattern.permute.xlu0 0
        %5241 = vperm.xlu0 %5240, %v5051
        %v5242 = vpop.permute.xlu0 %5241
        %5245 = vset.pattern.permute.xlu0 0
        %5246 = vperm.xlu0 %5245, %v5052
        %v5247 = vpop.permute.xlu0 %5246
        %5250 = vset.pattern.permute.xlu0 0
        %5251 = vperm.xlu0 %5250, %v5053
        %v5252 = vpop.permute.xlu0 %5251
        %5255 = vset.pattern.permute.xlu0 0
        %5256 = vperm.xlu0 %5255, %v5054
        %v5257 = vpop.permute.xlu0 %5256
        %5260 = vset.pattern.permute.xlu0 0
        %5261 = vperm.xlu0 %5260, %v5055
        %v5262 = vpop.permute.xlu0 %5261
        %5265 = vset.pattern.permute.xlu0 0
        %5266 = vperm.xlu0 %5265, %v5056
        %v5267 = vpop.permute.xlu0 %5266
        %5270 = vset.pattern.permute.xlu0 0
        %5271 = vperm.xlu0 %5270, %v5057
        %v5272 = vpop.permute.xlu0 %5271
        %5275 = vset.pattern.permute.xlu0 0
        %5276 = vperm.xlu0 %5275, %v5058
        %v5277 = vpop.permute.xlu0 %5276
        %5280 = vset.pattern.permute.xlu0 0
        %5281 = vperm.xlu0 %5280, %v5059
        %v5282 = vpop.permute.xlu0 %5281
        %5285 = vset.pattern.permute.xlu0 0
        %5286 = vperm.xlu0 %5285, %v5060
        %v5287 = vpop.permute.xlu0 %5286
        %5290 = vset.pattern.permute.xlu0 0
        %5291 = vperm.xlu0 %5290, %v5061
        %v5292 = vpop.permute.xlu0 %5291
        %5295 = vset.pattern.permute.xlu0 0
        %5296 = vperm.xlu0 %5295, %v5062
        %v5297 = vpop.permute.xlu0 %5296
        %5300 = vset.pattern.permute.xlu0 0
        %5301 = vperm.xlu0 %5300, %v5063
        %v5302 = vpop.permute.xlu0 %5301
        %5305 = vset.pattern.permute.xlu0 0
        %5306 = vperm.xlu0 %5305, %v5064
        %v5307 = vpop.permute.xlu0 %5306
        %5310 = vset.pattern.permute.xlu0 0
        %5311 = vperm.xlu0 %5310, %v5065
        %v5312 = vpop.permute.xlu0 %5311
        %5315 = vset.pattern.permute.xlu0 0
        %5316 = vperm.xlu0 %5315, %v5066
        %v5317 = vpop.permute.xlu0 %5316
        %5320 = vset.pattern.permute.xlu0 0
        %5321 = vperm.xlu0 %5320, %v5067
        %v5322 = vpop.permute.xlu0 %5321
        %5325 = vset.pattern.permute.xlu0 0
        %5326 = vperm.xlu0 %5325, %v5068
        %v5327 = vpop.permute.xlu0 %5326
        %5330 = vset.pattern.permute.xlu0 0
        %5331 = vperm.xlu0 %5330, %v5069
        %v5332 = vpop.permute.xlu0 %5331
        %5335 = vset.pattern.permute.xlu0 0
        %5336 = vperm.xlu0 %5335, %v5070
        %v5337 = vpop.permute.xlu0 %5336
        %5340 = vset.pattern.permute.xlu0 0
        %5341 = vperm.xlu0 %5340, %v5071
        %v5342 = vpop.permute.xlu0 %5341
        %5345 = vset.pattern.permute.xlu0 0
        %5346 = vperm.xlu0 %5345, %v5072
        %v5347 = vpop.permute.xlu0 %5346
        %5350 = vset.pattern.permute.xlu0 0
        %5351 = vperm.xlu0 %5350, %v5073
        %v5352 = vpop.permute.xlu0 %5351
        %5355 = vset.pattern.permute.xlu0 0
        %5356 = vperm.xlu0 %5355, %v5074
        %v5357 = vpop.permute.xlu0 %5356
        %5360 = vset.pattern.permute.xlu0 0
        %5361 = vperm.xlu0 %5360, %v5075
        %v5362 = vpop.permute.xlu0 %5361
        %5365 = vset.pattern.permute.xlu0 0
        %5366 = vperm.xlu0 %5365, %v5076
        %v5367 = vpop.permute.xlu0 %5366
        %5370 = vset.pattern.permute.xlu0 0
        %5371 = vperm.xlu0 %5370, %v5077
        %v5372 = vpop.permute.xlu0 %5371
        %5375 = vset.pattern.permute.xlu0 0
        %5376 = vperm.xlu0 %5375, %v5078
        %v5377 = vpop.permute.xlu0 %5376
        %5380 = vset.pattern.permute.xlu0 0
        %5381 = vperm.xlu0 %5380, %v5079
        %v5382 = vpop.permute.xlu0 %5381
        %5385 = vset.pattern.permute.xlu0 0
        %5386 = vperm.xlu0 %5385, %v5080
        %v5387 = vpop.permute.xlu0 %5386
        %5390 = vset.pattern.permute.xlu0 0
        %5391 = vperm.xlu0 %5390, %v5081
        %v5392 = vpop.permute.xlu0 %5391
        %5395 = vset.pattern.permute.xlu0 0
        %5396 = vperm.xlu0 %5395, %v5082
        %v5397 = vpop.permute.xlu0 %5396
        %5400 = vset.pattern.permute.xlu0 0
        %5401 = vperm.xlu0 %5400, %v5083
        %v5402 = vpop.permute.xlu0 %5401
        %v5404 = vmul.f32 %v5087, %v2752
        %v5405 = vmul.f32 %v5092, %v2753
        %v5406 = vmul.f32 %v5097, %v2754
        %v5407 = vmul.f32 %v5102, %v2755
        %v5408 = vmul.f32 %v5107, %v2756
        %v5409 = vmul.f32 %v5112, %v2757
        %v5410 = vmul.f32 %v5117, %v2758
        %v5411 = vmul.f32 %v5122, %v2759
        %v5412 = vmul.f32 %v5127, %v2760
        %v5413 = vmul.f32 %v5132, %v2761
        %v5414 = vmul.f32 %v5137, %v2762
        %v5415 = vmul.f32 %v5142, %v2763
        %v5416 = vmul.f32 %v5147, %v2764
        %v5417 = vmul.f32 %v5152, %v2765
        %v5418 = vmul.f32 %v5157, %v2766
        %v5419 = vmul.f32 %v5162, %v2767
        %v5420 = vmul.f32 %v5167, %v2768
        %v5421 = vmul.f32 %v5172, %v2769
        %v5422 = vmul.f32 %v5177, %v2770
        %v5423 = vmul.f32 %v5182, %v2771
        %v5424 = vmul.f32 %v5187, %v2772
        %v5425 = vmul.f32 %v5192, %v2773
        %v5426 = vmul.f32 %v5197, %v2774
        %v5427 = vmul.f32 %v5202, %v2775
        %v5428 = vmul.f32 %v5207, %v2776
        %v5429 = vmul.f32 %v5212, %v2777
        %v5430 = vmul.f32 %v5217, %v2778
        %v5431 = vmul.f32 %v5222, %v2779
        %v5432 = vmul.f32 %v5227, %v2780
        %v5433 = vmul.f32 %v5232, %v2781
        %v5434 = vmul.f32 %v5237, %v2782
        %v5435 = vmul.f32 %v5242, %v2783
        %v5436 = vmul.f32 %v5247, %v2784
        %v5437 = vmul.f32 %v5252, %v2785
        %v5438 = vmul.f32 %v5257, %v2786
        %v5439 = vmul.f32 %v5262, %v2787
        %v5440 = vmul.f32 %v5267, %v2788
        %v5441 = vmul.f32 %v5272, %v2789
        %v5442 = vmul.f32 %v5277, %v2790
        %v5443 = vmul.f32 %v5282, %v2791
        %v5444 = vmul.f32 %v5287, %v2792
        %v5445 = vmul.f32 %v5292, %v2793
        %v5446 = vmul.f32 %v5297, %v2794
        %v5447 = vmul.f32 %v5302, %v2795
        %v5448 = vmul.f32 %v5307, %v2796
        %v5449 = vmul.f32 %v5312, %v2797
        %v5450 = vmul.f32 %v5317, %v2798
        %v5451 = vmul.f32 %v5322, %v2799
        %v5452 = vmul.f32 %v5327, %v2800
        %v5453 = vmul.f32 %v5332, %v2801
        %v5454 = vmul.f32 %v5337, %v2802
        %v5455 = vmul.f32 %v5342, %v2803
        %v5456 = vmul.f32 %v5347, %v2804
        %v5457 = vmul.f32 %v5352, %v2805
        %v5458 = vmul.f32 %v5357, %v2806
        %v5459 = vmul.f32 %v5362, %v2807
        %v5460 = vmul.f32 %v5367, %v2808
        %v5461 = vmul.f32 %v5372, %v2809
        %v5462 = vmul.f32 %v5377, %v2810
        %v5463 = vmul.f32 %v5382, %v2811
        %v5464 = vmul.f32 %v5387, %v2812
        %v5465 = vmul.f32 %v5392, %v2813
        %v5466 = vmul.f32 %v5397, %v2814
        %v5467 = vmul.f32 %v5402, %v2815
        %v5468 = vadd.f32 %v5404, %v5405
        %v5469 = vrot.slane %v5468, 4
        %v5470 = vadd.f32 %v5468, %v5469
        %v5471 = vrot.slane %v5470, 2
        %v5472 = vadd.f32 %v5470, %v5471
        %v5473 = vrot.slane %v5472, 1
        %v5474 = vadd.f32 %v5472, %v5473
        %v5475 = vadd.f32 %v5406, %v5407
        %v5476 = vrot.slane %v5475, 4
        %v5477 = vadd.f32 %v5475, %v5476
        %v5478 = vrot.slane %v5477, 2
        %v5479 = vadd.f32 %v5477, %v5478
        %v5480 = vrot.slane %v5479, 1
        %v5481 = vadd.f32 %v5479, %v5480
        %v5482 = vadd.f32 %v5408, %v5409
        %v5483 = vrot.slane %v5482, 4
        %v5484 = vadd.f32 %v5482, %v5483
        %v5485 = vrot.slane %v5484, 2
        %v5486 = vadd.f32 %v5484, %v5485
        %v5487 = vrot.slane %v5486, 1
        %v5488 = vadd.f32 %v5486, %v5487
        %v5489 = vadd.f32 %v5410, %v5411
        %v5490 = vrot.slane %v5489, 4
        %v5491 = vadd.f32 %v5489, %v5490
        %v5492 = vrot.slane %v5491, 2
        %v5493 = vadd.f32 %v5491, %v5492
        %v5494 = vrot.slane %v5493, 1
        %v5495 = vadd.f32 %v5493, %v5494
        %v5496 = vadd.f32 %v5412, %v5413
        %v5497 = vrot.slane %v5496, 4
        %v5498 = vadd.f32 %v5496, %v5497
        %v5499 = vrot.slane %v5498, 2
        %v5500 = vadd.f32 %v5498, %v5499
        %v5501 = vrot.slane %v5500, 1
        %v5502 = vadd.f32 %v5500, %v5501
        %v5503 = vadd.f32 %v5414, %v5415
        %v5504 = vrot.slane %v5503, 4
        %v5505 = vadd.f32 %v5503, %v5504
        %v5506 = vrot.slane %v5505, 2
        %v5507 = vadd.f32 %v5505, %v5506
        %v5508 = vrot.slane %v5507, 1
        %v5509 = vadd.f32 %v5507, %v5508
        %v5510 = vadd.f32 %v5416, %v5417
        %v5511 = vrot.slane %v5510, 4
        %v5512 = vadd.f32 %v5510, %v5511
        %v5513 = vrot.slane %v5512, 2
        %v5514 = vadd.f32 %v5512, %v5513
        %v5515 = vrot.slane %v5514, 1
        %v5516 = vadd.f32 %v5514, %v5515
        %v5517 = vadd.f32 %v5418, %v5419
        %v5518 = vrot.slane %v5517, 4
        %v5519 = vadd.f32 %v5517, %v5518
        %v5520 = vrot.slane %v5519, 2
        %v5521 = vadd.f32 %v5519, %v5520
        %v5522 = vrot.slane %v5521, 1
        %v5523 = vadd.f32 %v5521, %v5522
        %v5524 = vadd.f32 %v5420, %v5421
        %v5525 = vrot.slane %v5524, 4
        %v5526 = vadd.f32 %v5524, %v5525
        %v5527 = vrot.slane %v5526, 2
        %v5528 = vadd.f32 %v5526, %v5527
        %v5529 = vrot.slane %v5528, 1
        %v5530 = vadd.f32 %v5528, %v5529
        %v5531 = vadd.f32 %v5422, %v5423
        %v5532 = vrot.slane %v5531, 4
        %v5533 = vadd.f32 %v5531, %v5532
        %v5534 = vrot.slane %v5533, 2
        %v5535 = vadd.f32 %v5533, %v5534
        %v5536 = vrot.slane %v5535, 1
        %v5537 = vadd.f32 %v5535, %v5536
        %v5538 = vadd.f32 %v5424, %v5425
        %v5539 = vrot.slane %v5538, 4
        %v5540 = vadd.f32 %v5538, %v5539
        %v5541 = vrot.slane %v5540, 2
        %v5542 = vadd.f32 %v5540, %v5541
        %v5543 = vrot.slane %v5542, 1
        %v5544 = vadd.f32 %v5542, %v5543
        %v5545 = vadd.f32 %v5426, %v5427
        %v5546 = vrot.slane %v5545, 4
        %v5547 = vadd.f32 %v5545, %v5546
        %v5548 = vrot.slane %v5547, 2
        %v5549 = vadd.f32 %v5547, %v5548
        %v5550 = vrot.slane %v5549, 1
        %v5551 = vadd.f32 %v5549, %v5550
        %v5552 = vadd.f32 %v5428, %v5429
        %v5553 = vrot.slane %v5552, 4
        %v5554 = vadd.f32 %v5552, %v5553
        %v5555 = vrot.slane %v5554, 2
        %v5556 = vadd.f32 %v5554, %v5555
        %v5557 = vrot.slane %v5556, 1
        %v5558 = vadd.f32 %v5556, %v5557
        %v5559 = vadd.f32 %v5430, %v5431
        %v5560 = vrot.slane %v5559, 4
        %v5561 = vadd.f32 %v5559, %v5560
        %v5562 = vrot.slane %v5561, 2
        %v5563 = vadd.f32 %v5561, %v5562
        %v5564 = vrot.slane %v5563, 1
        %v5565 = vadd.f32 %v5563, %v5564
        %v5566 = vadd.f32 %v5432, %v5433
        %v5567 = vrot.slane %v5566, 4
        %v5568 = vadd.f32 %v5566, %v5567
        %v5569 = vrot.slane %v5568, 2
        %v5570 = vadd.f32 %v5568, %v5569
        %v5571 = vrot.slane %v5570, 1
        %v5572 = vadd.f32 %v5570, %v5571
        %v5573 = vadd.f32 %v5434, %v5435
        %v5574 = vrot.slane %v5573, 4
        %v5575 = vadd.f32 %v5573, %v5574
        %v5576 = vrot.slane %v5575, 2
        %v5577 = vadd.f32 %v5575, %v5576
        %v5578 = vrot.slane %v5577, 1
        %v5579 = vadd.f32 %v5577, %v5578
        %v5580 = vadd.f32 %v5436, %v5437
        %v5581 = vrot.slane %v5580, 4
        %v5582 = vadd.f32 %v5580, %v5581
        %v5583 = vrot.slane %v5582, 2
        %v5584 = vadd.f32 %v5582, %v5583
        %v5585 = vrot.slane %v5584, 1
        %v5586 = vadd.f32 %v5584, %v5585
        %v5587 = vadd.f32 %v5438, %v5439
        %v5588 = vrot.slane %v5587, 4
        %v5589 = vadd.f32 %v5587, %v5588
        %v5590 = vrot.slane %v5589, 2
        %v5591 = vadd.f32 %v5589, %v5590
        %v5592 = vrot.slane %v5591, 1
        %v5593 = vadd.f32 %v5591, %v5592
        %v5594 = vadd.f32 %v5440, %v5441
        %v5595 = vrot.slane %v5594, 4
        %v5596 = vadd.f32 %v5594, %v5595
        %v5597 = vrot.slane %v5596, 2
        %v5598 = vadd.f32 %v5596, %v5597
        %v5599 = vrot.slane %v5598, 1
        %v5600 = vadd.f32 %v5598, %v5599
        %v5601 = vadd.f32 %v5442, %v5443
        %v5602 = vrot.slane %v5601, 4
        %v5603 = vadd.f32 %v5601, %v5602
        %v5604 = vrot.slane %v5603, 2
        %v5605 = vadd.f32 %v5603, %v5604
        %v5606 = vrot.slane %v5605, 1
        %v5607 = vadd.f32 %v5605, %v5606
        %v5608 = vadd.f32 %v5444, %v5445
        %v5609 = vrot.slane %v5608, 4
        %v5610 = vadd.f32 %v5608, %v5609
        %v5611 = vrot.slane %v5610, 2
        %v5612 = vadd.f32 %v5610, %v5611
        %v5613 = vrot.slane %v5612, 1
        %v5614 = vadd.f32 %v5612, %v5613
        %v5615 = vadd.f32 %v5446, %v5447
        %v5616 = vrot.slane %v5615, 4
        %v5617 = vadd.f32 %v5615, %v5616
        %v5618 = vrot.slane %v5617, 2
        %v5619 = vadd.f32 %v5617, %v5618
        %v5620 = vrot.slane %v5619, 1
        %v5621 = vadd.f32 %v5619, %v5620
        %v5622 = vadd.f32 %v5448, %v5449
        %v5623 = vrot.slane %v5622, 4
        %v5624 = vadd.f32 %v5622, %v5623
        %v5625 = vrot.slane %v5624, 2
        %v5626 = vadd.f32 %v5624, %v5625
        %v5627 = vrot.slane %v5626, 1
        %v5628 = vadd.f32 %v5626, %v5627
        %v5629 = vadd.f32 %v5450, %v5451
        %v5630 = vrot.slane %v5629, 4
        %v5631 = vadd.f32 %v5629, %v5630
        %v5632 = vrot.slane %v5631, 2
        %v5633 = vadd.f32 %v5631, %v5632
        %v5634 = vrot.slane %v5633, 1
        %v5635 = vadd.f32 %v5633, %v5634
        %v5636 = vadd.f32 %v5452, %v5453
        %v5637 = vrot.slane %v5636, 4
        %v5638 = vadd.f32 %v5636, %v5637
        %v5639 = vrot.slane %v5638, 2
        %v5640 = vadd.f32 %v5638, %v5639
        %v5641 = vrot.slane %v5640, 1
        %v5642 = vadd.f32 %v5640, %v5641
        %v5643 = vadd.f32 %v5454, %v5455
        %v5644 = vrot.slane %v5643, 4
        %v5645 = vadd.f32 %v5643, %v5644
        %v5646 = vrot.slane %v5645, 2
        %v5647 = vadd.f32 %v5645, %v5646
        %v5648 = vrot.slane %v5647, 1
        %v5649 = vadd.f32 %v5647, %v5648
        %v5650 = vadd.f32 %v5456, %v5457
        %v5651 = vrot.slane %v5650, 4
        %v5652 = vadd.f32 %v5650, %v5651
        %v5653 = vrot.slane %v5652, 2
        %v5654 = vadd.f32 %v5652, %v5653
        %v5655 = vrot.slane %v5654, 1
        %v5656 = vadd.f32 %v5654, %v5655
        %v5657 = vadd.f32 %v5458, %v5459
        %v5658 = vrot.slane %v5657, 4
        %v5659 = vadd.f32 %v5657, %v5658
        %v5660 = vrot.slane %v5659, 2
        %v5661 = vadd.f32 %v5659, %v5660
        %v5662 = vrot.slane %v5661, 1
        %v5663 = vadd.f32 %v5661, %v5662
        %v5664 = vadd.f32 %v5460, %v5461
        %v5665 = vrot.slane %v5664, 4
        %v5666 = vadd.f32 %v5664, %v5665
        %v5667 = vrot.slane %v5666, 2
        %v5668 = vadd.f32 %v5666, %v5667
        %v5669 = vrot.slane %v5668, 1
        %v5670 = vadd.f32 %v5668, %v5669
        %v5671 = vadd.f32 %v5462, %v5463
        %v5672 = vrot.slane %v5671, 4
        %v5673 = vadd.f32 %v5671, %v5672
        %v5674 = vrot.slane %v5673, 2
        %v5675 = vadd.f32 %v5673, %v5674
        %v5676 = vrot.slane %v5675, 1
        %v5677 = vadd.f32 %v5675, %v5676
        %v5678 = vadd.f32 %v5464, %v5465
        %v5679 = vrot.slane %v5678, 4
        %v5680 = vadd.f32 %v5678, %v5679
        %v5681 = vrot.slane %v5680, 2
        %v5682 = vadd.f32 %v5680, %v5681
        %v5683 = vrot.slane %v5682, 1
        %v5684 = vadd.f32 %v5682, %v5683
        %v5685 = vadd.f32 %v5466, %v5467
        %v5686 = vrot.slane %v5685, 4
        %v5687 = vadd.f32 %v5685, %v5686
        %v5688 = vrot.slane %v5687, 2
        %v5689 = vadd.f32 %v5687, %v5688
        %v5690 = vrot.slane %v5689, 1
        %v5691 = vadd.f32 %v5689, %v5690
        %v5724 = vsel %vm3856, %v5481, %v5474
        %v5725 = vsel %vm3858, %v5488, %v5724
        %v5726 = vsel %vm3860, %v5495, %v5725
        %v5727 = vsel %vm3862, %v5502, %v5726
        %v5728 = vsel %vm3864, %v5509, %v5727
        %v5729 = vsel %vm3866, %v5516, %v5728
        %v5730 = vsel %vm3868, %v5523, %v5729
        %v5731 = vsel %vm3856, %v5537, %v5530
        %v5732 = vsel %vm3858, %v5544, %v5731
        %v5733 = vsel %vm3860, %v5551, %v5732
        %v5734 = vsel %vm3862, %v5558, %v5733
        %v5735 = vsel %vm3864, %v5565, %v5734
        %v5736 = vsel %vm3866, %v5572, %v5735
        %v5737 = vsel %vm3868, %v5579, %v5736
        %v5738 = vsel %vm3856, %v5593, %v5586
        %v5739 = vsel %vm3858, %v5600, %v5738
        %v5740 = vsel %vm3860, %v5607, %v5739
        %v5741 = vsel %vm3862, %v5614, %v5740
        %v5742 = vsel %vm3864, %v5621, %v5741
        %v5743 = vsel %vm3866, %v5628, %v5742
        %v5744 = vsel %vm3868, %v5635, %v5743
        %v5745 = vsel %vm3856, %v5649, %v5642
        %v5746 = vsel %vm3858, %v5656, %v5745
        %v5747 = vsel %vm3860, %v5663, %v5746
        %v5748 = vsel %vm3862, %v5670, %v5747
        %v5749 = vsel %vm3864, %v5677, %v5748
        %v5750 = vsel %vm3866, %v5684, %v5749
        %v5751 = vsel %vm3868, %v5691, %v5750
        %5756 = vst [vmem:[%s245] sm:$0xff] %v5730
        %5757 = vst [vmem:[%s245 + $0x8] sm:$0xff] %v5737
        %5758 = vst [vmem:[%s245 + $0x10] sm:$0xff] %v5744
        %5759 = vst [vmem:[%s245 + $0x18] sm:$0xff] %v5751
        %s5760 = sand.u32 %s125, 1
        %s5761 = scalar_lea.sflag [#allocation3], %s5760
        %s5762 = sand.u32 %s125, 1
        %s5763 = smul.addr %s5762, 512
        %s5764 = scalar_lea.vmem [#allocation2], %s5763
        %s5765 = sand.u32 %s151, 1
        %s5766 = scalar_lea.sflag [#allocation5], %s5765
        %s5767 = sand.u32 %s151, 1
        %s5768 = smul.addr %s5767, 32
        %s5769 = scalar_lea.vmem [#allocation4], %s5768
        // Predicated region
        $region37: #{npa_encoder_forward.1} parent=35 // pred_check
          %p5770 = pneg %p135
        $region38: #{npa_encoder_forward.1} parent=35 // pred_check_branch
          %5772 = sbr.rel (%p5770) target = $region40
        $region39: #{npa_encoder_forward.1} parent=35 // pred_region
          %s5773 = smul.u32 64, %s23
          %s5775 = ssub.s32 8192, 8192
          %5776 = vsyncadd %s5761, %s5775
          %s5777 = smul.addr %s5773, 128
          %s5778 = scalar_lea.hbm %s4, %s5777
          %s5779 = sshll.u32 %s5764, 4
          %s5780 = int_to_ptr.vmem [resolvable:$true] %s5779
          %5785 = dma.vmem_to_hbm [thread:$0]  %s5780, 8192, %s5778, %s5761, 128, 128, 8
        $region40: #{npa_encoder_forward.1} parent=35 // pred_fallthru
          _
        // Predicated region
        $region41: #{npa_encoder_forward.1} parent=35 // pred_check
          %p5786 = pneg %p161
        $region42: #{npa_encoder_forward.1} parent=35 // pred_check_branch
          %5788 = sbr.rel (%p5786) target = $region44
        $region43: #{npa_encoder_forward.1} parent=35 // pred_region
          %s5789 = smul.u32 4, %s23
          %s5791 = ssub.s32 512, 512
          %5792 = vsyncadd %s5766, %s5791
          %s5793 = smul.addr %s5789, 128
          %s5794 = scalar_lea.hbm %s5, %s5793
          %s5795 = sshll.u32 %s5769, 4
          %s5796 = int_to_ptr.vmem [resolvable:$true] %s5795
          %5801 = dma.vmem_to_hbm [thread:$0]  %s5796, 512, %s5794, %s5766, 128, 128, 8
        $region44: #{npa_encoder_forward.1} parent=35 // pred_fallthru
          _
      $region36: #{npa_encoder_forward.1} parent=5 // pred_fallthru
        _
      %p5802 = scmp.le.s32.totalorder 2, %s18
      // Predicated region
      $region45: #{npa_encoder_forward.1} parent=5 // pred_check
        %p5803 = pneg %p5802
      $region46: #{npa_encoder_forward.1} parent=5 // pred_check_branch
        %5805 = sbr.rel (%p5803) target = $region48
      $region47: #{npa_encoder_forward.1} parent=5 // pred_region
        %s5806 = ssub.s32 %s18, 2
        // Predicated region
        $region49: #{npa_encoder_forward.1} parent=47 // pred_check
          %p5807 = pneg %p141
        $region50: #{npa_encoder_forward.1} parent=47 // pred_check_branch
          %5809 = sbr.rel (%p5807) target = $region52
        $region51: #{npa_encoder_forward.1} parent=47 // pred_region
          %s5810 = sand.u32 %s126, 1
          %s5811 = scalar_lea.sflag [#allocation3], %s5810
          %s5812 = sand.u32 %s126, 1
          %s5813 = smul.addr %s5812, 512
          %s5814 = scalar_lea.vmem [#allocation2], %s5813
          %5815 = dma.done %s5811, 8192
        $region52: #{npa_encoder_forward.1} parent=47 // pred_fallthru
          _
        // Predicated region
        $region53: #{npa_encoder_forward.1} parent=47 // pred_check
          %p5816 = pneg %p167
        $region54: #{npa_encoder_forward.1} parent=47 // pred_check_branch
          %5818 = sbr.rel (%p5816) target = $region56
        $region55: #{npa_encoder_forward.1} parent=47 // pred_region
          %s5819 = sand.u32 %s152, 1
          %s5820 = scalar_lea.sflag [#allocation5], %s5819
          %s5821 = sand.u32 %s152, 1
          %s5822 = smul.addr %s5821, 32
          %s5823 = scalar_lea.vmem [#allocation4], %s5822
          %5824 = dma.done %s5820, 512
        $region56: #{npa_encoder_forward.1} parent=47 // pred_fallthru
          _
      $region48: #{npa_encoder_forward.1} parent=5 // pred_fallthru
        _
    $region6: #{npa_encoder_forward.1} parent=1 // loop_footer
      %s22 = sadd.s32 1, %s18
    $region7: #{npa_encoder_forward.1} parent=1 // loop_footer_branch
      %17 = sbr.rel target = $region3
    $region8: #{npa_encoder_forward.1} parent=1 // loop_exit
      _
    %5825 = vsyncpa [#allocation3], 1
    %s5826 = scalar_lea.sflag [#allocation3], 1
    %5827 = vsyncpa %s5826, 1
    %5828 = vsyncpa [#allocation5], 1
    %s5829 = scalar_lea.sflag [#allocation5], 1
    %5830 = vsyncpa %s5829, 1

</llo_original>
